<compile_context>
chip_gen: v7x
topology: tpu7x:2x2x1
jax: 0.10.0
libtpu: 0.0.40
codegen_flags: <defaults>
</compile_context>

<pallas_src>
import functools

import numpy as np
import jax
import jax.numpy as jnp
from jax.experimental import pallas as pl
from jax.experimental.pallas import tpu as pltpu


# ---------------------------------------------------------------------------
# Pallas kernel (one batch element per grid step)
# ---------------------------------------------------------------------------
def _basic_up_block_kernel(x_ref, emb_ref, sw_ref, w1u_ref, w2_ref, bias_ref,
                           mask_ref, o_ref, canvas_ref, *, cin, cmid, H, W, WP):
    f32 = jnp.float32
    H2 = 2 * H
    L4 = (H2 + 3) * WP        # conv1/idn output extent (window-start rows 0..H2+2)
    L3 = H2 * WP              # conv2 / final output extent (rows 0..H2-1)

    # 1) dilate x onto the zeroed canvas (row stride WP, lane-aligned).
    #    column dilation (x[:, j] -> lane 3+2j) is one tiny matmul; each image
    #    row i is then stored with ONE aligned 128-lane store at canvas row 3+2i.
    canvas_ref[...] = jnp.zeros_like(canvas_ref)
    cdil = jnp.dot(x_ref[0].astype(f32), sw_ref[...],
                   preferred_element_type=f32)                     # (H*Cin, WP)
    for i in range(H):
        r0 = (3 + 2 * i) * WP
        canvas_ref[:, r0:r0 + WP] = cdil[i * cin:(i + 1) * cin, :]
    canvas = canvas_ref[...]                                       # (Cin, HC*WP)

    # 2) conv1 (transposed conv) + identity-branch transposed conv: one fused
    #    im2col matmul.  BN scales are already folded into w1u.
    taps4 = []
    for dx in range(4):
        sh = canvas[:, dx:dx + (H2 + 6) * WP]     # one small lane shift per dx
        for dy in range(4):                       # dy offsets are lane-aligned
            taps4.append(sh[:, dy * WP:dy * WP + L4])
    p4 = jnp.concatenate(taps4, axis=0)                            # (16*Cin, L4)
    both = jnp.dot(w1u_ref[...], p4, preferred_element_type=f32)   # (2*Cmid, L4)
    out1 = both[:cmid]
    idn = both[cmid:]

    # 3) bn1 bias + relu + emb add, then zero the ring (= conv2's zero padding).
    h = jnp.maximum(out1 + bias_ref[:, 0:1], 0.0) + emb_ref[0]
    h = h * mask_ref[...]

    # 4) conv2 (3x3, pad 1) as a second im2col matmul (s2 folded into w2).
    taps3 = []
    for dx in range(3):
        sh = h[:, dx:dx + (H2 + 2) * WP]
        for dy in range(3):
            taps3.append(sh[:, dy * WP:dy * WP + L3])
    p3 = jnp.concatenate(taps3, axis=0)                            # (9*Cmid, L3)
    out2 = jnp.dot(w2_ref[...], p3, preferred_element_type=f32)    # (Cmid, L3)

    # 5) add realigned identity branch + combined bias (b2 + bu), relu, store the
    #    lane-dense padded slab (wrapper strips the padding columns).
    y = jnp.maximum(out2 + idn[:, WP + 1:WP + 1 + L3] + bias_ref[:, 1:2], 0.0)
    o_ref[0] = y.astype(o_ref.dtype)


# ---------------------------------------------------------------------------
# host-side parameter preparation + pallas_call wrapper
# ---------------------------------------------------------------------------
def _convt_weight_matrix(w, scale):
    # ConvTranspose2d weight (Cin, Cout, 4, 4) -> (Cout, 16*Cin): spatial flip and
    # BN scale folded in; tap order (dx outer, dy inner) matches the kernel.
    blocks = []
    for dx in range(4):
        for dy in range(4):
            blocks.append(jnp.transpose(w[:, :, 3 - dy, 3 - dx]))  # (Cout, Cin)
    return jnp.concatenate(blocks, axis=1) * scale[:, None]


def _conv3_weight_matrix(w, scale):
    # Conv2d weight (Cout, Cin, 3, 3) -> (Cout, 9*Cin), tap order (dx outer, dy inner).
    blocks = []
    for dx in range(3):
        for dy in range(3):
            blocks.append(w[:, :, dy, dx])                         # (Cout, Cin)
    return jnp.concatenate(blocks, axis=1) * scale[:, None]


def _bn_fold(gamma, beta, mean, var, eps=1e-5):
    s = gamma / jnp.sqrt(var + eps)
    return s, beta - mean * s


def basic_up_block_forward(x, emb, params):
    """Pallas equivalent of BasicUpBlock.forward.

    x: (B, Cin, H, W); emb: (B, E); params: dict of module parameters."""
    B, Cin, H, W = x.shape
    w1 = params["conv1_w"]            # (Cin, Cmid, 4, 4) ConvTranspose2d weight
    wu = params["up_conv_w"]          # (Cin, Cmid, 4, 4) upsample-branch convT
    w2 = params["conv2_w"]            # (Cmid, Cmid, 3, 3)
    Cmid = w1.shape[1]
    H2, W2 = 2 * H, 2 * W

    WP = 128 * int(np.ceil((W2 + 8) / 128))    # lane-aligned canvas row stride
    HC = H2 + 7                                # canvas rows (incl. zero borders)
    L4 = (H2 + 3) * WP
    L3 = H2 * WP

    # fold BatchNorm (eval-mode running stats) into weights / biases.
    s1, b1 = _bn_fold(*params["bn1"])
    s2, b2 = _bn_fold(*params["bn2"])
    su, bu = _bn_fold(*params["bn_up"])
    w1u = jnp.concatenate([_convt_weight_matrix(w1, s1),
                           _convt_weight_matrix(wu, su)],
                          axis=0).astype(jnp.float32)              # (2*Cmid, 16*Cin)
    w2m = _conv3_weight_matrix(w2, s2).astype(jnp.float32)         # (Cmid, 9*Cmid)
    bias = jnp.stack([b1, b2 + bu], axis=1).astype(jnp.float32)    # (Cmid, 2)

    # emb MLP hoisted out of the kernel: one batched XLA matmul for all B.
    emb_act = jnp.maximum(
        emb.astype(jnp.float32) @ params["emb_w"].T.astype(jnp.float32)
        + params["emb_b"].astype(jnp.float32), 0.0).reshape(B, Cmid, 1)

    # tiny column-dilation matrix: input column j -> canvas lane 3 + 2j.
    Sw = np.zeros((W, WP), np.float32)
    Sw[np.arange(W), 3 + 2 * np.arange(W)] = 1.0

    # valid-h mask over the conv1-output slab (rows 1..H2, cols 1..W2).
    rows = np.arange(L4) // WP
    cols = np.arange(L4) % WP
    msk = ((rows >= 1) & (rows <= H2) & (cols >= 1) & (cols <= W2))
    msk = msk.astype(np.float32).reshape(1, L4)

    # x arranged (B, H*Cin, W) so each image row is a contiguous Cin-row block.
    xr = jnp.transpose(x, (0, 2, 1, 3)).reshape(B, H * Cin, W)

    kernel = functools.partial(_basic_up_block_kernel, cin=Cin, cmid=Cmid,
                               H=H, W=W, WP=WP)

    out = pl.pallas_call(
        kernel,
        out_shape=jax.ShapeDtypeStruct((B, Cmid, L3), x.dtype),
        grid=(B,),
        in_specs=[
            pl.BlockSpec((1, H * Cin, W), lambda b: (b, 0, 0)),     # x (row-major)
            pl.BlockSpec((1, Cmid, 1), lambda b: (b, 0, 0)),        # emb MLP output
            pl.BlockSpec((W, WP), lambda b: (0, 0)),                # column dilation
            pl.BlockSpec((2 * Cmid, 16 * Cin), lambda b: (0, 0)),   # fused convT weights
            pl.BlockSpec((Cmid, 9 * Cmid), lambda b: (0, 0)),       # conv2 weights
            pl.BlockSpec((Cmid, 2), lambda b: (0, 0)),              # folded BN biases
            pl.BlockSpec((1, L4), lambda b: (0, 0)),                # valid-h mask
        ],
        out_specs=pl.BlockSpec((1, Cmid, L3), lambda b: (b, 0, 0)),
        scratch_shapes=[pltpu.VMEM((Cin, HC * WP), jnp.float32)],   # dilated canvas
        compiler_params=pltpu.CompilerParams(
            dimension_semantics=("parallel",),
            vmem_limit_bytes=32 * 1024 * 1024,
        ),
    )(xr, emb_act, jnp.asarray(Sw), w1u, w2m, bias, jnp.asarray(msk))

    # strip the lane padding (cheap XLA slice) and restore NCHW.
    return out.reshape(B, Cmid, H2, WP)[:, :, :, :W2]


# ---------------------------------------------------------------------------
# independent numpy (float64) reference, straight from the definitions
# ---------------------------------------------------------------------------
def _np_conv_transpose(x, w):
    # ConvTranspose2d(kernel=4, stride=2, padding=1, bias=False).
    B, Ci, H, W = x.shape
    Co = w.shape[1]
    full = np.zeros((B, Co, 2 * H + 3, 2 * W + 3), x.dtype)
    for ky in range(4):
        for kx in range(4):
            contrib = np.einsum("co,bchw->bohw", w[:, :, ky, kx], x)
            full[:, :, ky:ky + 2 * H:2, kx:kx + 2 * W:2] += contrib
    return full[:, :, 1:1 + 2 * H, 1:1 + 2 * W]


def _np_conv3x3(h, w):
    B, C, H, W = h.shape
    O = w.shape[0]
    hp = np.pad(h, ((0, 0), (0, 0), (1, 1), (1, 1)))
    out = np.zeros((B, O, H, W), h.dtype)
    for dy in range(3):
        for dx in range(3):
            out += np.einsum("oc,bchw->bohw", w[:, :, dy, dx],
                             hp[:, :, dy:dy + H, dx:dx + W])
    return out


def _np_bn(x, gamma, beta, mean, var, eps=1e-5):
    s = gamma / np.sqrt(var + eps)
    return x * s[None, :, None, None] + (beta - mean * s)[None, :, None, None]


def reference_forward(x, emb, params):
    f64 = np.float64
    x = np.asarray(x, f64)
    emb = np.asarray(emb, f64)
    g = lambda k: np.asarray(params[k], f64)
    bn = lambda k: [np.asarray(a, f64) for a in params[k]]

    out = _np_conv_transpose(x, g("conv1_w"))
    out = np.maximum(_np_bn(out, *bn("bn1")), 0.0)
    e = np.maximum(emb @ g("emb_w").T + g("emb_b"), 0.0)
    out = out + e[:, :, None, None]
    out = _np_bn(_np_conv3x3(out, g("conv2_w")), *bn("bn2"))
    idn = _np_bn(_np_conv_transpose(x, g("up_conv_w")), *bn("bn_up"))
    return np.maximum(out + idn, 0.0)


# ---------------------------------------------------------------------------
if __name__ == "__main__":
    key = jax.random.PRNGKey(0)
    ks = jax.random.split(key, 10)

    B, Cin, Cmid, E, H, W = 2, 4, 8, 32, 16, 16

    x = jax.random.normal(ks[0], (B, Cin, H, W), jnp.float32)
    emb = jax.random.normal(ks[1], (B, E), jnp.float32)

    def bn_init(k, c):
        k1, k2, k3, k4 = jax.random.split(k, 4)
        gamma = 1.0 + 0.1 * jax.random.normal(k1, (c,), jnp.float32)
        beta = 0.1 * jax.random.normal(k2, (c,), jnp.float32)
        mean = 0.1 * jax.random.normal(k3, (c,), jnp.float32)
        var = 0.5 + jax.random.uniform(k4, (c,), jnp.float32)
        return (gamma, beta, mean, var)

    params = {
        "conv1_w": jax.random.normal(ks[2], (Cin, Cmid, 4, 4), jnp.float32)
                   / np.sqrt(Cin * 16),
        "up_conv_w": jax.random.normal(ks[3], (Cin, Cmid, 4, 4), jnp.float32)
                     / np.sqrt(Cin * 16),
        "conv2_w": jax.random.normal(ks[4], (Cmid, Cmid, 3, 3), jnp.float32)
                   / np.sqrt(Cmid * 9),
        "emb_w": jax.random.normal(ks[5], (Cmid, E), jnp.float32) / np.sqrt(E),
        "emb_b": 0.1 * jax.random.normal(ks[6], (Cmid,), jnp.float32),
        "bn1": bn_init(ks[7], Cmid),
        "bn2": bn_init(ks[8], Cmid),
        "bn_up": bn_init(ks[9], Cmid),
    }

    out = basic_up_block_forward(x, emb, params)
    out = jax.block_until_ready(out)
    assert out.shape == (B, Cmid, 2 * H, 2 * W)

    ref = reference_forward(x, emb, params)
    np.testing.assert_allclose(np.asarray(out, np.float64), ref,
                               rtol=2e-3, atol=2e-3)

    print("KERNEL_OK")
</pallas_src>

<mosaic_0001>
module attributes {stable_mosaic.version = 11 : i64} {
  func.func @_basic_up_block_kernel(%arg0: i32, %arg1: memref<1x64x16xf32, #tpu.memory_space<vmem>>, %arg2: memref<1x8x1xf32, #tpu.memory_space<vmem>>, %arg3: memref<16x128xf32, #tpu.memory_space<vmem>>, %arg4: memref<16x64xf32, #tpu.memory_space<vmem>>, %arg5: memref<8x72xf32, #tpu.memory_space<vmem>>, %arg6: memref<8x2xf32, #tpu.memory_space<vmem>>, %arg7: memref<1x4480xf32, #tpu.memory_space<vmem>>, %arg8: memref<1x8x4096xf32, #tpu.memory_space<vmem>>, %arg9: memref<4x4992xf32, #tpu.memory_space<vmem>>) attributes {dimension_semantics = [#tpu.dimension_semantics<parallel>], iteration_bounds = array<i64: 2>, scalar_prefetch = 0 : i64, scratch_operands = 1 : i64, tpu.core_type = #tpu.core_type<tc>, window_params = [{transform_indices = @transform_0, window_bounds = array<i64: 1, 64, 16>}, {transform_indices = @transform_1, window_bounds = array<i64: 1, 8, 1>}, {pipeline_mode = #tpu.pipeline_mode<synchronous>, transform_indices = @transform_2, window_bounds = array<i64: 16, 128>}, {pipeline_mode = #tpu.pipeline_mode<synchronous>, transform_indices = @transform_3, window_bounds = array<i64: 16, 64>}, {pipeline_mode = #tpu.pipeline_mode<synchronous>, transform_indices = @transform_4, window_bounds = array<i64: 8, 72>}, {pipeline_mode = #tpu.pipeline_mode<synchronous>, transform_indices = @transform_5, window_bounds = array<i64: 8, 2>}, {pipeline_mode = #tpu.pipeline_mode<synchronous>, transform_indices = @transform_6, window_bounds = array<i64: 1, 4480>}, {transform_indices = @transform_7, window_bounds = array<i64: 1, 8, 4096>}]} {
    %cst = arith.constant 0.000000e+00 : f32
    %0 = vector.broadcast %cst : f32 to vector<4x4992xf32>
    %c0 = arith.constant 0 : index
    %c0_0 = arith.constant 0 : index
    %1 = vector.load %arg9[%c0, %c0_0] : memref<4x4992xf32, #tpu.memory_space<vmem>>, vector<4x4992xf32>
    tpu.vector_store %arg9[%c0, %c0_0], %0 {strides = array<i32>} : memref<4x4992xf32, #tpu.memory_space<vmem>>, vector<4x4992xf32>,
    %c0_1 = arith.constant 0 : index
    %c0_2 = arith.constant 0 : index
    %c0_3 = arith.constant 0 : index
    %2 = vector.load %arg1[%c0_1, %c0_2, %c0_3] : memref<1x64x16xf32, #tpu.memory_space<vmem>>, vector<1x64x16xf32>
    %3 = vector.shape_cast %2 : vector<1x64x16xf32> to vector<64x16xf32>
    %c0_4 = arith.constant 0 : index
    %c0_5 = arith.constant 0 : index
    %4 = vector.load %arg3[%c0_4, %c0_5] : memref<16x128xf32, #tpu.memory_space<vmem>>, vector<16x128xf32>
    %cst_6 = arith.constant dense<0.000000e+00> : vector<64x128xf32>
    %5 = tpu.matmul %3, %4, %cst_6 {dimension_numbers = #tpu.dot_dimension_numbers<[1], [0], [0], [1], [0, 0, 1, 1], [], []>} : vector<64x16xf32>, vector<16x128xf32>, vector<64x128xf32> -> vector<64x128xf32>
    %6 = vector.extract_strided_slice %5 {offsets = [0, 0], sizes = [4, 128], strides = [1, 1]} : vector<64x128xf32> to vector<4x128xf32>
    %c0_7 = arith.constant 0 : index
    %c384 = arith.constant 384 : index
    %7 = vector.load %arg9[%c0_7, %c384] : memref<4x4992xf32, #tpu.memory_space<vmem>>, vector<4x128xf32>
    tpu.vector_store %arg9[%c0_7, %c384], %6 {strides = array<i32>} : memref<4x4992xf32, #tpu.memory_space<vmem>>, vector<4x128xf32>,
    %8 = vector.extract_strided_slice %5 {offsets = [4, 0], sizes = [4, 128], strides = [1, 1]} : vector<64x128xf32> to vector<4x128xf32>
    %c0_8 = arith.constant 0 : index
    %c640 = arith.constant 640 : index
    %9 = vector.load %arg9[%c0_8, %c640] : memref<4x4992xf32, #tpu.memory_space<vmem>>, vector<4x128xf32>
    tpu.vector_store %arg9[%c0_8, %c640], %8 {strides = array<i32>} : memref<4x4992xf32, #tpu.memory_space<vmem>>, vector<4x128xf32>,
    %10 = vector.extract_strided_slice %5 {offsets = [8, 0], sizes = [4, 128], strides = [1, 1]} : vector<64x128xf32> to vector<4x128xf32>
    %c0_9 = arith.constant 0 : index
    %c896 = arith.constant 896 : index
    %11 = vector.load %arg9[%c0_9, %c896] : memref<4x4992xf32, #tpu.memory_space<vmem>>, vector<4x128xf32>
    tpu.vector_store %arg9[%c0_9, %c896], %10 {strides = array<i32>} : memref<4x4992xf32, #tpu.memory_space<vmem>>, vector<4x128xf32>,
    %12 = vector.extract_strided_slice %5 {offsets = [12, 0], sizes = [4, 128], strides = [1, 1]} : vector<64x128xf32> to vector<4x128xf32>
    %c0_10 = arith.constant 0 : index
    %c1152 = arith.constant 1152 : index
    %13 = vector.load %arg9[%c0_10, %c1152] : memref<4x4992xf32, #tpu.memory_space<vmem>>, vector<4x128xf32>
    tpu.vector_store %arg9[%c0_10, %c1152], %12 {strides = array<i32>} : memref<4x4992xf32, #tpu.memory_space<vmem>>, vector<4x128xf32>,
    %14 = vector.extract_strided_slice %5 {offsets = [16, 0], sizes = [4, 128], strides = [1, 1]} : vector<64x128xf32> to vector<4x128xf32>
    %c0_11 = arith.constant 0 : index
    %c1408 = arith.constant 1408 : index
    %15 = vector.load %arg9[%c0_11, %c1408] : memref<4x4992xf32, #tpu.memory_space<vmem>>, vector<4x128xf32>
    tpu.vector_store %arg9[%c0_11, %c1408], %14 {strides = array<i32>} : memref<4x4992xf32, #tpu.memory_space<vmem>>, vector<4x128xf32>,
    %16 = vector.extract_strided_slice %5 {offsets = [20, 0], sizes = [4, 128], strides = [1, 1]} : vector<64x128xf32> to vector<4x128xf32>
    %c0_12 = arith.constant 0 : index
    %c1664 = arith.constant 1664 : index
    %17 = vector.load %arg9[%c0_12, %c1664] : memref<4x4992xf32, #tpu.memory_space<vmem>>, vector<4x128xf32>
    tpu.vector_store %arg9[%c0_12, %c1664], %16 {strides = array<i32>} : memref<4x4992xf32, #tpu.memory_space<vmem>>, vector<4x128xf32>,
    %18 = vector.extract_strided_slice %5 {offsets = [24, 0], sizes = [4, 128], strides = [1, 1]} : vector<64x128xf32> to vector<4x128xf32>
    %c0_13 = arith.constant 0 : index
    %c1920 = arith.constant 1920 : index
    %19 = vector.load %arg9[%c0_13, %c1920] : memref<4x4992xf32, #tpu.memory_space<vmem>>, vector<4x128xf32>
    tpu.vector_store %arg9[%c0_13, %c1920], %18 {strides = array<i32>} : memref<4x4992xf32, #tpu.memory_space<vmem>>, vector<4x128xf32>,
    %20 = vector.extract_strided_slice %5 {offsets = [28, 0], sizes = [4, 128], strides = [1, 1]} : vector<64x128xf32> to vector<4x128xf32>
    %c0_14 = arith.constant 0 : index
    %c2176 = arith.constant 2176 : index
    %21 = vector.load %arg9[%c0_14, %c2176] : memref<4x4992xf32, #tpu.memory_space<vmem>>, vector<4x128xf32>
    tpu.vector_store %arg9[%c0_14, %c2176], %20 {strides = array<i32>} : memref<4x4992xf32, #tpu.memory_space<vmem>>, vector<4x128xf32>,
    %22 = vector.extract_strided_slice %5 {offsets = [32, 0], sizes = [4, 128], strides = [1, 1]} : vector<64x128xf32> to vector<4x128xf32>
    %c0_15 = arith.constant 0 : index
    %c2432 = arith.constant 2432 : index
    %23 = vector.load %arg9[%c0_15, %c2432] : memref<4x4992xf32, #tpu.memory_space<vmem>>, vector<4x128xf32>
    tpu.vector_store %arg9[%c0_15, %c2432], %22 {strides = array<i32>} : memref<4x4992xf32, #tpu.memory_space<vmem>>, vector<4x128xf32>,
    %24 = vector.extract_strided_slice %5 {offsets = [36, 0], sizes = [4, 128], strides = [1, 1]} : vector<64x128xf32> to vector<4x128xf32>
    %c0_16 = arith.constant 0 : index
    %c2688 = arith.constant 2688 : index
    %25 = vector.load %arg9[%c0_16, %c2688] : memref<4x4992xf32, #tpu.memory_space<vmem>>, vector<4x128xf32>
    tpu.vector_store %arg9[%c0_16, %c2688], %24 {strides = array<i32>} : memref<4x4992xf32, #tpu.memory_space<vmem>>, vector<4x128xf32>,
    %26 = vector.extract_strided_slice %5 {offsets = [40, 0], sizes = [4, 128], strides = [1, 1]} : vector<64x128xf32> to vector<4x128xf32>
    %c0_17 = arith.constant 0 : index
    %c2944 = arith.constant 2944 : index
    %27 = vector.load %arg9[%c0_17, %c2944] : memref<4x4992xf32, #tpu.memory_space<vmem>>, vector<4x128xf32>
    tpu.vector_store %arg9[%c0_17, %c2944], %26 {strides = array<i32>} : memref<4x4992xf32, #tpu.memory_space<vmem>>, vector<4x128xf32>,
    %28 = vector.extract_strided_slice %5 {offsets = [44, 0], sizes = [4, 128], strides = [1, 1]} : vector<64x128xf32> to vector<4x128xf32>
    %c0_18 = arith.constant 0 : index
    %c3200 = arith.constant 3200 : index
    %29 = vector.load %arg9[%c0_18, %c3200] : memref<4x4992xf32, #tpu.memory_space<vmem>>, vector<4x128xf32>
    tpu.vector_store %arg9[%c0_18, %c3200], %28 {strides = array<i32>} : memref<4x4992xf32, #tpu.memory_space<vmem>>, vector<4x128xf32>,
    %30 = vector.extract_strided_slice %5 {offsets = [48, 0], sizes = [4, 128], strides = [1, 1]} : vector<64x128xf32> to vector<4x128xf32>
    %c0_19 = arith.constant 0 : index
    %c3456 = arith.constant 3456 : index
    %31 = vector.load %arg9[%c0_19, %c3456] : memref<4x4992xf32, #tpu.memory_space<vmem>>, vector<4x128xf32>
    tpu.vector_store %arg9[%c0_19, %c3456], %30 {strides = array<i32>} : memref<4x4992xf32, #tpu.memory_space<vmem>>, vector<4x128xf32>,
    %32 = vector.extract_strided_slice %5 {offsets = [52, 0], sizes = [4, 128], strides = [1, 1]} : vector<64x128xf32> to vector<4x128xf32>
    %c0_20 = arith.constant 0 : index
    %c3712 = arith.constant 3712 : index
    %33 = vector.load %arg9[%c0_20, %c3712] : memref<4x4992xf32, #tpu.memory_space<vmem>>, vector<4x128xf32>
    tpu.vector_store %arg9[%c0_20, %c3712], %32 {strides = array<i32>} : memref<4x4992xf32, #tpu.memory_space<vmem>>, vector<4x128xf32>,
    %34 = vector.extract_strided_slice %5 {offsets = [56, 0], sizes = [4, 128], strides = [1, 1]} : vector<64x128xf32> to vector<4x128xf32>
    %c0_21 = arith.constant 0 : index
    %c3968 = arith.constant 3968 : index
    %35 = vector.load %arg9[%c0_21, %c3968] : memref<4x4992xf32, #tpu.memory_space<vmem>>, vector<4x128xf32>
    tpu.vector_store %arg9[%c0_21, %c3968], %34 {strides = array<i32>} : memref<4x4992xf32, #tpu.memory_space<vmem>>, vector<4x128xf32>,
    %36 = vector.extract_strided_slice %5 {offsets = [60, 0], sizes = [4, 128], strides = [1, 1]} : vector<64x128xf32> to vector<4x128xf32>
    %c0_22 = arith.constant 0 : index
    %c4224 = arith.constant 4224 : index
    %37 = vector.load %arg9[%c0_22, %c4224] : memref<4x4992xf32, #tpu.memory_space<vmem>>, vector<4x128xf32>
    tpu.vector_store %arg9[%c0_22, %c4224], %36 {strides = array<i32>} : memref<4x4992xf32, #tpu.memory_space<vmem>>, vector<4x128xf32>,
    %c0_23 = arith.constant 0 : index
    %c0_24 = arith.constant 0 : index
    %38 = vector.load %arg9[%c0_23, %c0_24] : memref<4x4992xf32, #tpu.memory_space<vmem>>, vector<4x4992xf32>
    %39 = vector.extract_strided_slice %38 {offsets = [0, 0], sizes = [4, 4864], strides = [1, 1]} : vector<4x4992xf32> to vector<4x4864xf32>
    %40 = vector.extract_strided_slice %39 {offsets = [0, 0], sizes = [4, 4480], strides = [1, 1]} : vector<4x4864xf32> to vector<4x4480xf32>
    %41 = vector.extract_strided_slice %39 {offsets = [0, 128], sizes = [4, 4480], strides = [1, 1]} : vector<4x4864xf32> to vector<4x4480xf32>
    %42 = vector.extract_strided_slice %39 {offsets = [0, 256], sizes = [4, 4480], strides = [1, 1]} : vector<4x4864xf32> to vector<4x4480xf32>
    %43 = vector.extract_strided_slice %39 {offsets = [0, 384], sizes = [4, 4480], strides = [1, 1]} : vector<4x4864xf32> to vector<4x4480xf32>
    %44 = vector.extract_strided_slice %38 {offsets = [0, 1], sizes = [4, 4864], strides = [1, 1]} : vector<4x4992xf32> to vector<4x4864xf32>
    %45 = vector.extract_strided_slice %44 {offsets = [0, 0], sizes = [4, 4480], strides = [1, 1]} : vector<4x4864xf32> to vector<4x4480xf32>
    %46 = vector.extract_strided_slice %44 {offsets = [0, 128], sizes = [4, 4480], strides = [1, 1]} : vector<4x4864xf32> to vector<4x4480xf32>
    %47 = vector.extract_strided_slice %44 {offsets = [0, 256], sizes = [4, 4480], strides = [1, 1]} : vector<4x4864xf32> to vector<4x4480xf32>
    %48 = vector.extract_strided_slice %44 {offsets = [0, 384], sizes = [4, 4480], strides = [1, 1]} : vector<4x4864xf32> to vector<4x4480xf32>
    %49 = vector.extract_strided_slice %38 {offsets = [0, 2], sizes = [4, 4864], strides = [1, 1]} : vector<4x4992xf32> to vector<4x4864xf32>
    %50 = vector.extract_strided_slice %49 {offsets = [0, 0], sizes = [4, 4480], strides = [1, 1]} : vector<4x4864xf32> to vector<4x4480xf32>
    %51 = vector.extract_strided_slice %49 {offsets = [0, 128], sizes = [4, 4480], strides = [1, 1]} : vector<4x4864xf32> to vector<4x4480xf32>
    %52 = vector.extract_strided_slice %49 {offsets = [0, 256], sizes = [4, 4480], strides = [1, 1]} : vector<4x4864xf32> to vector<4x4480xf32>
    %53 = vector.extract_strided_slice %49 {offsets = [0, 384], sizes = [4, 4480], strides = [1, 1]} : vector<4x4864xf32> to vector<4x4480xf32>
    %54 = vector.extract_strided_slice %38 {offsets = [0, 3], sizes = [4, 4864], strides = [1, 1]} : vector<4x4992xf32> to vector<4x4864xf32>
    %55 = vector.extract_strided_slice %54 {offsets = [0, 0], sizes = [4, 4480], strides = [1, 1]} : vector<4x4864xf32> to vector<4x4480xf32>
    %56 = vector.extract_strided_slice %54 {offsets = [0, 128], sizes = [4, 4480], strides = [1, 1]} : vector<4x4864xf32> to vector<4x4480xf32>
    %57 = vector.extract_strided_slice %54 {offsets = [0, 256], sizes = [4, 4480], strides = [1, 1]} : vector<4x4864xf32> to vector<4x4480xf32>
    %58 = vector.extract_strided_slice %54 {offsets = [0, 384], sizes = [4, 4480], strides = [1, 1]} : vector<4x4864xf32> to vector<4x4480xf32>
    %59 = tpu.concatenate %40, %41, %42, %43, %45, %46, %47, %48, %50, %51, %52, %53, %55, %56, %57, %58 in 0 : vector<4x4480xf32>, vector<4x4480xf32>, vector<4x4480xf32>, vector<4x4480xf32>, vector<4x4480xf32>, vector<4x4480xf32>, vector<4x4480xf32>, vector<4x4480xf32>, vector<4x4480xf32>, vector<4x4480xf32>, vector<4x4480xf32>, vector<4x4480xf32>, vector<4x4480xf32>, vector<4x4480xf32>, vector<4x4480xf32>, vector<4x4480xf32> -> vector<64x4480xf32>
    %c0_25 = arith.constant 0 : index
    %c0_26 = arith.constant 0 : index
    %60 = vector.load %arg4[%c0_25, %c0_26] : memref<16x64xf32, #tpu.memory_space<vmem>>, vector<16x64xf32>
    %cst_27 = arith.constant dense<0.000000e+00> : vector<16x4480xf32>
    %61 = tpu.matmul %60, %59, %cst_27 {dimension_numbers = #tpu.dot_dimension_numbers<[1], [0], [0], [1], [0, 0, 1, 1], [], []>} : vector<16x64xf32>, vector<64x4480xf32>, vector<16x4480xf32> -> vector<16x4480xf32>
    %62 = vector.extract_strided_slice %61 {offsets = [0, 0], sizes = [8, 4480], strides = [1, 1]} : vector<16x4480xf32> to vector<8x4480xf32>
    %63 = vector.extract_strided_slice %61 {offsets = [8, 0], sizes = [8, 4480], strides = [1, 1]} : vector<16x4480xf32> to vector<8x4480xf32>
    %c0_28 = arith.constant 0 : index
    %c0_29 = arith.constant 0 : index
    %64 = vector.load %arg6[%c0_28, %c0_29] : memref<8x2xf32, #tpu.memory_space<vmem>>, vector<8x1xf32>
    %65 = vector.broadcast %64 : vector<8x1xf32> to vector<8x4480xf32>
    %66 = arith.addf %62, %65 : vector<8x4480xf32>
    %cst_30 = arith.constant 0.000000e+00 : f32
    %67 = vector.broadcast %cst_30 : f32 to vector<8x4480xf32>
    %68 = arith.maximumf %66, %67 : vector<8x4480xf32>
    %c0_31 = arith.constant 0 : index
    %c0_32 = arith.constant 0 : index
    %c0_33 = arith.constant 0 : index
    %69 = vector.load %arg2[%c0_31, %c0_32, %c0_33] : memref<1x8x1xf32, #tpu.memory_space<vmem>>, vector<1x8x1xf32>
    %70 = vector.shape_cast %69 : vector<1x8x1xf32> to vector<8x1xf32>
    %71 = vector.broadcast %70 : vector<8x1xf32> to vector<8x4480xf32>
    %72 = arith.addf %68, %71 : vector<8x4480xf32>
    %c0_34 = arith.constant 0 : index
    %c0_35 = arith.constant 0 : index
    %73 = vector.load %arg7[%c0_34, %c0_35] : memref<1x4480xf32, #tpu.memory_space<vmem>>, vector<1x4480xf32>
    %74 = vector.broadcast %73 : vector<1x4480xf32> to vector<8x4480xf32>
    %75 = arith.mulf %72, %74 : vector<8x4480xf32>
    %76 = vector.extract_strided_slice %75 {offsets = [0, 0], sizes = [8, 4352], strides = [1, 1]} : vector<8x4480xf32> to vector<8x4352xf32>
    %77 = vector.extract_strided_slice %76 {offsets = [0, 0], sizes = [8, 4096], strides = [1, 1]} : vector<8x4352xf32> to vector<8x4096xf32>
    %78 = vector.extract_strided_slice %76 {offsets = [0, 128], sizes = [8, 4096], strides = [1, 1]} : vector<8x4352xf32> to vector<8x4096xf32>
    %79 = vector.extract_strided_slice %76 {offsets = [0, 256], sizes = [8, 4096], strides = [1, 1]} : vector<8x4352xf32> to vector<8x4096xf32>
    %80 = vector.extract_strided_slice %75 {offsets = [0, 1], sizes = [8, 4352], strides = [1, 1]} : vector<8x4480xf32> to vector<8x4352xf32>
    %81 = vector.extract_strided_slice %80 {offsets = [0, 0], sizes = [8, 4096], strides = [1, 1]} : vector<8x4352xf32> to vector<8x4096xf32>
    %82 = vector.extract_strided_slice %80 {offsets = [0, 128], sizes = [8, 4096], strides = [1, 1]} : vector<8x4352xf32> to vector<8x4096xf32>
    %83 = vector.extract_strided_slice %80 {offsets = [0, 256], sizes = [8, 4096], strides = [1, 1]} : vector<8x4352xf32> to vector<8x4096xf32>
    %84 = vector.extract_strided_slice %75 {offsets = [0, 2], sizes = [8, 4352], strides = [1, 1]} : vector<8x4480xf32> to vector<8x4352xf32>
    %85 = vector.extract_strided_slice %84 {offsets = [0, 0], sizes = [8, 4096], strides = [1, 1]} : vector<8x4352xf32> to vector<8x4096xf32>
    %86 = vector.extract_strided_slice %84 {offsets = [0, 128], sizes = [8, 4096], strides = [1, 1]} : vector<8x4352xf32> to vector<8x4096xf32>
    %87 = vector.extract_strided_slice %84 {offsets = [0, 256], sizes = [8, 4096], strides = [1, 1]} : vector<8x4352xf32> to vector<8x4096xf32>
    %88 = tpu.concatenate %77, %78, %79, %81, %82, %83, %85, %86, %87 in 0 : vector<8x4096xf32>, vector<8x4096xf32>, vector<8x4096xf32>, vector<8x4096xf32>, vector<8x4096xf32>, vector<8x4096xf32>, vector<8x4096xf32>, vector<8x4096xf32>, vector<8x4096xf32> -> vector<72x4096xf32>
    %c0_36 = arith.constant 0 : index
    %c0_37 = arith.constant 0 : index
    %89 = vector.load %arg5[%c0_36, %c0_37] : memref<8x72xf32, #tpu.memory_space<vmem>>, vector<8x72xf32>
    %cst_38 = arith.constant dense<0.000000e+00> : vector<8x4096xf32>
    %90 = tpu.matmul %89, %88, %cst_38 {dimension_numbers = #tpu.dot_dimension_numbers<[1], [0], [0], [1], [0, 0, 1, 1], [], []>} : vector<8x72xf32>, vector<72x4096xf32>, vector<8x4096xf32> -> vector<8x4096xf32>
    %91 = vector.extract_strided_slice %63 {offsets = [0, 129], sizes = [8, 4096], strides = [1, 1]} : vector<8x4480xf32> to vector<8x4096xf32>
    %92 = arith.addf %90, %91 : vector<8x4096xf32>
    %c0_39 = arith.constant 0 : index
    %c1 = arith.constant 1 : index
    %93 = vector.load %arg6[%c0_39, %c1] : memref<8x2xf32, #tpu.memory_space<vmem>>, vector<8x1xf32>
    %94 = vector.broadcast %93 : vector<8x1xf32> to vector<8x4096xf32>
    %95 = arith.addf %92, %94 : vector<8x4096xf32>
    %cst_40 = arith.constant 0.000000e+00 : f32
    %96 = vector.broadcast %cst_40 : f32 to vector<8x4096xf32>
    %97 = arith.maximumf %95, %96 : vector<8x4096xf32>
    %c0_41 = arith.constant 0 : index
    %c0_42 = arith.constant 0 : index
    %c0_43 = arith.constant 0 : index
    %98 = vector.load %arg8[%c0_41, %c0_42, %c0_43] : memref<1x8x4096xf32, #tpu.memory_space<vmem>>, vector<1x8x4096xf32>
    %99 = vector.shape_cast %98 : vector<1x8x4096xf32> to vector<8x4096xf32>
    %100 = vector.shape_cast %97 : vector<8x4096xf32> to vector<1x8x4096xf32>
    tpu.vector_store %arg8[%c0_41, %c0_42, %c0_43], %100 {strides = array<i32>} : memref<1x8x4096xf32, #tpu.memory_space<vmem>>, vector<1x8x4096xf32>,
    return
  }
  func.func @transform_0(%arg0: i32) -> (i32, i32, i32) {
    %c0_i32 = arith.constant 0 : i32
    %c0_i32_0 = arith.constant 0 : i32
    %c0_i32_1 = arith.constant 0 : i32
    return %arg0, %c0_i32, %c0_i32_0 : i32, i32, i32
  }
  func.func @transform_1(%arg0: i32) -> (i32, i32, i32) {
    %c0_i32 = arith.constant 0 : i32
    %c0_i32_0 = arith.constant 0 : i32
    %c0_i32_1 = arith.constant 0 : i32
    return %arg0, %c0_i32, %c0_i32_0 : i32, i32, i32
  }
  func.func @transform_2(%arg0: i32) -> (i32, i32) {
    %c0_i32 = arith.constant 0 : i32
    %c0_i32_0 = arith.constant 0 : i32
    %c0_i32_1 = arith.constant 0 : i32
    return %c0_i32, %c0_i32_0 : i32, i32
  }
  func.func @transform_3(%arg0: i32) -> (i32, i32) {
    %c0_i32 = arith.constant 0 : i32
    %c0_i32_0 = arith.constant 0 : i32
    %c0_i32_1 = arith.constant 0 : i32
    return %c0_i32, %c0_i32_0 : i32, i32
  }
  func.func @transform_4(%arg0: i32) -> (i32, i32) {
    %c0_i32 = arith.constant 0 : i32
    %c0_i32_0 = arith.constant 0 : i32
    %c0_i32_1 = arith.constant 0 : i32
    return %c0_i32, %c0_i32_0 : i32, i32
  }
  func.func @transform_5(%arg0: i32) -> (i32, i32) {
    %c0_i32 = arith.constant 0 : i32
    %c0_i32_0 = arith.constant 0 : i32
    %c0_i32_1 = arith.constant 0 : i32
    return %c0_i32, %c0_i32_0 : i32, i32
  }
  func.func @transform_6(%arg0: i32) -> (i32, i32) {
    %c0_i32 = arith.constant 0 : i32
    %c0_i32_0 = arith.constant 0 : i32
    %c0_i32_1 = arith.constant 0 : i32
    return %c0_i32, %c0_i32_0 : i32, i32
  }
  func.func @transform_7(%arg0: i32) -> (i32, i32, i32) {
    %c0_i32 = arith.constant 0 : i32
    %c0_i32_0 = arith.constant 0 : i32
    %c0_i32_1 = arith.constant 0 : i32
    return %arg0, %c0_i32, %c0_i32_0 : i32, i32, i32
  }
}

</mosaic_0001>

<llo_original>
// kernel: tpu_custom_call.1
$region0: #{tpu_custom_call.1}
  #allocation0 [shape = 'u32[]', space=smem, size = 0x4, offset = 0x4, fixed_abs, tag = 'smem constant byte address 0x4 - core index']
  #allocation1 [shape = 'u32[144,128]{1,0:T(1,128)}', space=vmem, size = 0x12000, scoped, tag = 'internal scratch']
  #allocation2 [shape = 'f32[4,4992]{1,0:T(4,128)}', space=vmem, size = 0x13800, scoped, tag = 'scratch operand']
  %s0 = inlined_call_operand.vmem [shape: f32[2,64,16], index: 0, kind: input, shape index: {}]
  %s1 = inlined_call_operand.vmem [shape: f32[2,8,1], index: 1, kind: input, shape index: {}]
  %s2 = inlined_call_operand.vmem [shape: f32[16,128], index: 2, kind: input, shape index: {}]
  %s3 = inlined_call_operand.vmem [shape: f32[16,64], index: 3, kind: input, shape index: {}]
  %s4 = inlined_call_operand.vmem [shape: f32[8,72], index: 4, kind: input, shape index: {}]
  %s5 = inlined_call_operand.vmem [shape: f32[8,2], index: 5, kind: input, shape index: {}]
  %s6 = inlined_call_operand.vmem [shape: f32[1,4480], index: 6, kind: input, shape index: {}]
  %s7 = inlined_call_operand.hbm [shape: f32[2,8,4096], index: 7, kind: output, shape index: {}]
  %s8 = sld [smem:[#allocation0]]
  $region61: #{tpu_custom_call.1} parent=0
    _
  %s10 = ssub.s32 1, %s8
  %s11 = scalar_select 0, %s10, %s8
  $region1: #{tpu_custom_call.1} parent=0
    #allocation3 [shape = 'u8[262144]{0}', space=vmem, size = 0x40000, scoped, tag = 'output window, operand 0']
    #allocation4 [shape = 's32[2]{0}', space=sflag, size = 0x8, scoped, tag = 'scoped memory for tpu_custom_call.1']
    %12 = vsyncpa [#allocation4], 0
    %s13 = scalar_lea.sflag [#allocation4], 1
    %14 = vsyncpa %s13, 0
    loop: start=0, step=1, limit=4
    $region2: #{tpu_custom_call.1} parent=1 // loop_pre_header
      _
    $region3: #{tpu_custom_call.1} parent=1 // loop_header
      %s16 = sphi 0, %s20
      %p17 = scmp.ge.s32.totalorder %s16, 4
      %s26 = sphi 0, %s28
      %s29 = sphi 0, %s26
      %s30 = sphi 0, %s29
      %s46 = sphi 0, %s30
      %s52 = sphi 0, %s54
      %s55 = sphi 0, %s52
      %s56 = sphi 0, %s55
      %s72 = sphi 0, %s56
      %s76 = sphi 0, %s76
      %s78 = sphi 0, %s76
      %s79 = sphi 0, %s78
      %s93 = sphi 0, %s79
      %s97 = sphi 0, %s97
      %s99 = sphi 0, %s97
      %s100 = sphi 0, %s99
      %s114 = sphi 0, %s100
      %s118 = sphi 0, %s118
      %s120 = sphi 0, %s118
      %s121 = sphi 0, %s120
      %s135 = sphi 0, %s121
      %s139 = sphi 0, %s139
      %s141 = sphi 0, %s139
      %s142 = sphi 0, %s141
      %s156 = sphi 0, %s142
      %s160 = sphi 0, %s160
      %s162 = sphi 0, %s160
      %s163 = sphi 0, %s162
      %s177 = sphi 0, %s163
      %s183 = sphi 0, %s185
      %s186 = sphi 0, %s183
      %s187 = sphi 0, %s186
      %s203 = sphi 0, %s187
    $region4: #{tpu_custom_call.1} parent=1 // loop_header_branch
      %19 = sbr.rel (%p17) target = $region8
    $region5: #{tpu_custom_call.1} parent=1 // loop_body
      %s21 = ssub.s32 %s16, 1
      %s22 = ssub.s32 %s16, 2
      %s23 = sadd.s32 %s16, 1
      %s24 = ssub.s32 %s16, %s23
      %p25 = scmp.eq.s32.totalorder %s24, 0
      %s27 = sadd.s32 %s26, 1
      %s28 = scalar_select %p25, %s26, %s27
      %p31 = pneg %p25
      %p32 = scmp.eq.s32.totalorder %s16, 1
      %p33 = por %p31, %p32
      %p34 = scmp.ne.s32.totalorder %s26, %s29
      %p35 = scmp.eq.s32.totalorder %s16, 0
      %p36 = por %p34, %p35
      %p37 = scmp.ne.s32.totalorder %s26, %s29
      %p38 = scmp.eq.s32.totalorder %s21, 1
      %p39 = por %p37, %p38
      %p40 = scmp.ne.s32.totalorder %s29, %s30
      %p41 = scmp.eq.s32.totalorder %s21, 0
      %p42 = por %p40, %p41
      %p43 = scmp.ne.s32.totalorder %s29, %s30
      %p44 = scmp.eq.s32.totalorder %s22, 1
      %p45 = por %p43, %p44
      %p47 = scmp.ne.s32.totalorder %s30, %s46
      %p48 = scmp.eq.s32.totalorder %s22, 0
      %p49 = por %p47, %p48
      %s50 = ssub.s32 %s16, %s23
      %p51 = scmp.eq.s32.totalorder %s50, 0
      %s53 = sadd.s32 %s52, 1
      %s54 = scalar_select %p51, %s52, %s53
      %p57 = pneg %p51
      %p58 = scmp.eq.s32.totalorder %s16, 1
      %p59 = por %p57, %p58
      %p60 = scmp.ne.s32.totalorder %s52, %s55
      %p61 = scmp.eq.s32.totalorder %s16, 0
      %p62 = por %p60, %p61
      %p63 = scmp.ne.s32.totalorder %s52, %s55
      %p64 = scmp.eq.s32.totalorder %s21, 1
      %p65 = por %p63, %p64
      %p66 = scmp.ne.s32.totalorder %s55, %s56
      %p67 = scmp.eq.s32.totalorder %s21, 0
      %p68 = por %p66, %p67
      %p69 = scmp.ne.s32.totalorder %s55, %s56
      %p70 = scmp.eq.s32.totalorder %s22, 1
      %p71 = por %p69, %p70
      %p73 = scmp.ne.s32.totalorder %s56, %s72
      %p74 = scmp.eq.s32.totalorder %s22, 0
      %p75 = por %p73, %p74
      %s77 = sadd.s32 %s76, 1
      %p80 = scmp.eq.s32.totalorder %s16, 1
      %p81 = scmp.ne.s32.totalorder %s76, %s78
      %p82 = scmp.eq.s32.totalorder %s16, 0
      %p83 = por %p81, %p82
      %p84 = scmp.ne.s32.totalorder %s76, %s78
      %p85 = scmp.eq.s32.totalorder %s21, 1
      %p86 = por %p84, %p85
      %p87 = scmp.ne.s32.totalorder %s78, %s79
      %p88 = scmp.eq.s32.totalorder %s21, 0
      %p89 = por %p87, %p88
      %p90 = scmp.ne.s32.totalorder %s78, %s79
      %p91 = scmp.eq.s32.totalorder %s22, 1
      %p92 = por %p90, %p91
      %p94 = scmp.ne.s32.totalorder %s79, %s93
      %p95 = scmp.eq.s32.totalorder %s22, 0
      %p96 = por %p94, %p95
      %s98 = sadd.s32 %s97, 1
      %p101 = scmp.eq.s32.totalorder %s16, 1
      %p102 = scmp.ne.s32.totalorder %s97, %s99
      %p103 = scmp.eq.s32.totalorder %s16, 0
      %p104 = por %p102, %p103
      %p105 = scmp.ne.s32.totalorder %s97, %s99
      %p106 = scmp.eq.s32.totalorder %s21, 1
      %p107 = por %p105, %p106
      %p108 = scmp.ne.s32.totalorder %s99, %s100
      %p109 = scmp.eq.s32.totalorder %s21, 0
      %p110 = por %p108, %p109
      %p111 = scmp.ne.s32.totalorder %s99, %s100
      %p112 = scmp.eq.s32.totalorder %s22, 1
      %p113 = por %p111, %p112
      %p115 = scmp.ne.s32.totalorder %s100, %s114
      %p116 = scmp.eq.s32.totalorder %s22, 0
      %p117 = por %p115, %p116
      %s119 = sadd.s32 %s118, 1
      %p122 = scmp.eq.s32.totalorder %s16, 1
      %p123 = scmp.ne.s32.totalorder %s118, %s120
      %p124 = scmp.eq.s32.totalorder %s16, 0
      %p125 = por %p123, %p124
      %p126 = scmp.ne.s32.totalorder %s118, %s120
      %p127 = scmp.eq.s32.totalorder %s21, 1
      %p128 = por %p126, %p127
      %p129 = scmp.ne.s32.totalorder %s120, %s121
      %p130 = scmp.eq.s32.totalorder %s21, 0
      %p131 = por %p129, %p130
      %p132 = scmp.ne.s32.totalorder %s120, %s121
      %p133 = scmp.eq.s32.totalorder %s22, 1
      %p134 = por %p132, %p133
      %p136 = scmp.ne.s32.totalorder %s121, %s135
      %p137 = scmp.eq.s32.totalorder %s22, 0
      %p138 = por %p136, %p137
      %s140 = sadd.s32 %s139, 1
      %p143 = scmp.eq.s32.totalorder %s16, 1
      %p144 = scmp.ne.s32.totalorder %s139, %s141
      %p145 = scmp.eq.s32.totalorder %s16, 0
      %p146 = por %p144, %p145
      %p147 = scmp.ne.s32.totalorder %s139, %s141
      %p148 = scmp.eq.s32.totalorder %s21, 1
      %p149 = por %p147, %p148
      %p150 = scmp.ne.s32.totalorder %s141, %s142
      %p151 = scmp.eq.s32.totalorder %s21, 0
      %p152 = por %p150, %p151
      %p153 = scmp.ne.s32.totalorder %s141, %s142
      %p154 = scmp.eq.s32.totalorder %s22, 1
      %p155 = por %p153, %p154
      %p157 = scmp.ne.s32.totalorder %s142, %s156
      %p158 = scmp.eq.s32.totalorder %s22, 0
      %p159 = por %p157, %p158
      %s161 = sadd.s32 %s160, 1
      %p164 = scmp.eq.s32.totalorder %s16, 1
      %p165 = scmp.ne.s32.totalorder %s160, %s162
      %p166 = scmp.eq.s32.totalorder %s16, 0
      %p167 = por %p165, %p166
      %p168 = scmp.ne.s32.totalorder %s160, %s162
      %p169 = scmp.eq.s32.totalorder %s21, 1
      %p170 = por %p168, %p169
      %p171 = scmp.ne.s32.totalorder %s162, %s163
      %p172 = scmp.eq.s32.totalorder %s21, 0
      %p173 = por %p171, %p172
      %p174 = scmp.ne.s32.totalorder %s162, %s163
      %p175 = scmp.eq.s32.totalorder %s22, 1
      %p176 = por %p174, %p175
      %p178 = scmp.ne.s32.totalorder %s163, %s177
      %p179 = scmp.eq.s32.totalorder %s22, 0
      %p180 = por %p178, %p179
      %s181 = ssub.s32 %s16, %s23
      %p182 = scmp.eq.s32.totalorder %s181, 0
      %s184 = sadd.s32 %s183, 1
      %s185 = scalar_select %p182, %s183, %s184
      %p188 = pneg %p182
      %p189 = scmp.eq.s32.totalorder %s16, 1
      %p190 = por %p188, %p189
      %p191 = scmp.ne.s32.totalorder %s183, %s186
      %p192 = scmp.eq.s32.totalorder %s16, 0
      %p193 = por %p191, %p192
      %p194 = scmp.ne.s32.totalorder %s183, %s186
      %p195 = scmp.eq.s32.totalorder %s21, 1
      %p196 = por %p194, %p195
      %p197 = scmp.ne.s32.totalorder %s186, %s187
      %p198 = scmp.eq.s32.totalorder %s21, 0
      %p199 = por %p197, %p198
      %p200 = scmp.ne.s32.totalorder %s186, %s187
      %p201 = scmp.eq.s32.totalorder %s22, 1
      %p202 = por %p200, %p201
      %p204 = scmp.ne.s32.totalorder %s187, %s203
      %p205 = scmp.eq.s32.totalorder %s22, 0
      %p206 = por %p204, %p205
      %p207 = scmp.le.s32.totalorder 1, %s16
      %p208 = scmp.lt.s32.totalorder %s16, 3
      %p209 = pnand %p207, %p208
      %p210 = pneg %p209
      // Predicated region
      $region9: #{tpu_custom_call.1} parent=5 // pred_check
        _
      $region10: #{tpu_custom_call.1} parent=5 // pred_check_branch
        %212 = sbr.rel (%p209) target = $region12
      $region11: #{tpu_custom_call.1} parent=5 // pred_region
        %s213 = ssub.s32 %s16, 1
        // Predicated region
        $region13: #{tpu_custom_call.1} parent=11 // pred_check
          %p214 = pneg %p89
        $region14: #{tpu_custom_call.1} parent=11 // pred_check_branch
          %216 = sbr.rel (%p214) target = $region16
        $region15: #{tpu_custom_call.1} parent=11 // pred_region
          _
        $region16: #{tpu_custom_call.1} parent=11 // pred_fallthru
          _
        // Predicated region
        $region17: #{tpu_custom_call.1} parent=11 // pred_check
          %p217 = pneg %p110
        $region18: #{tpu_custom_call.1} parent=11 // pred_check_branch
          %219 = sbr.rel (%p217) target = $region20
        $region19: #{tpu_custom_call.1} parent=11 // pred_region
          _
        $region20: #{tpu_custom_call.1} parent=11 // pred_fallthru
          _
        // Predicated region
        $region21: #{tpu_custom_call.1} parent=11 // pred_check
          %p220 = pneg %p131
        $region22: #{tpu_custom_call.1} parent=11 // pred_check_branch
          %222 = sbr.rel (%p220) target = $region24
        $region23: #{tpu_custom_call.1} parent=11 // pred_region
          _
        $region24: #{tpu_custom_call.1} parent=11 // pred_fallthru
          _
        // Predicated region
        $region25: #{tpu_custom_call.1} parent=11 // pred_check
          %p223 = pneg %p152
        $region26: #{tpu_custom_call.1} parent=11 // pred_check_branch
          %225 = sbr.rel (%p223) target = $region28
        $region27: #{tpu_custom_call.1} parent=11 // pred_region
          _
        $region28: #{tpu_custom_call.1} parent=11 // pred_fallthru
          _
        // Predicated region
        $region29: #{tpu_custom_call.1} parent=11 // pred_check
          %p226 = pneg %p173
        $region30: #{tpu_custom_call.1} parent=11 // pred_check_branch
          %228 = sbr.rel (%p226) target = $region32
        $region31: #{tpu_custom_call.1} parent=11 // pred_region
          _
        $region32: #{tpu_custom_call.1} parent=11 // pred_fallthru
          _
      $region12: #{tpu_custom_call.1} parent=5 // pred_fallthru
        _
      %p229 = scmp.lt.s32.totalorder %s16, 2
      // Predicated region
      $region33: #{tpu_custom_call.1} parent=5 // pred_check
        %p230 = pneg %p229
      $region34: #{tpu_custom_call.1} parent=5 // pred_check_branch
        %232 = sbr.rel (%p230) target = $region36
      $region35: #{tpu_custom_call.1} parent=5 // pred_region
        // Predicated region
        $region37: #{tpu_custom_call.1} parent=35 // pred_check
          %p233 = pneg %p36
        $region38: #{tpu_custom_call.1} parent=35 // pred_check_branch
          %235 = sbr.rel (%p233) target = $region40
        $region39: #{tpu_custom_call.1} parent=35 // pred_region
          %p236 = scmp.lt.s32.totalorder %s16, 1
          %s237 = scalar_select %p236, %s16, 1
          %s238 = smul.addr %s237, 8
          %s239 = smul.addr %s238, 8
          %s240 = scalar_lea.vmem %s0, %s239
        $region40: #{tpu_custom_call.1} parent=35 // pred_fallthru
          _
        // Predicated region
        $region41: #{tpu_custom_call.1} parent=35 // pred_check
          %p241 = pneg %p62
        $region42: #{tpu_custom_call.1} parent=35 // pred_check_branch
          %243 = sbr.rel (%p241) target = $region44
        $region43: #{tpu_custom_call.1} parent=35 // pred_region
          %p244 = scmp.lt.s32.totalorder %s16, 1
          %s245 = scalar_select %p244, %s16, 1
          %s246 = smul.addr %s245, 8
          %s247 = scalar_lea.vmem %s1, %s246
        $region44: #{tpu_custom_call.1} parent=35 // pred_fallthru
          _
      $region36: #{tpu_custom_call.1} parent=5 // pred_fallthru
        _
      %p248 = scmp.le.s32.totalorder 1, %s16
      %p249 = scmp.lt.s32.totalorder %s16, 3
      %p250 = pnand %p248, %p249
      %p251 = pneg %p250
      // Predicated region
      $region45: #{tpu_custom_call.1} parent=5 // pred_check
        _
      $region46: #{tpu_custom_call.1} parent=5 // pred_check_branch
        %253 = sbr.rel (%p250) target = $region48
      $region47: #{tpu_custom_call.1} parent=5 // pred_region
        %s254 = ssub.s32 %s16, 1
        %p255 = scmp.lt.s32.totalorder %s21, 1
        %s256 = scalar_select %p255, %s21, 1
        %s257 = smul.addr %s256, 8
        %s258 = smul.addr %s257, 8
        %s259 = scalar_lea.vmem %s0, %s258
        %p260 = pneg %p42
        %p261 = pneg %p39
        %p262 = scmp.lt.s32.totalorder %s21, 1
        %s263 = scalar_select %p262, %s21, 1
        %s264 = smul.addr %s263, 8
        %s265 = scalar_lea.vmem %s1, %s264
        %p266 = pneg %p68
        %p267 = pneg %p65
        %p268 = pneg %p89
        %p269 = pneg %p86
        %p270 = pneg %p110
        %p271 = pneg %p107
        %p272 = pneg %p131
        %p273 = pneg %p128
        %p274 = pneg %p152
        %p275 = pneg %p149
        %p276 = pneg %p173
        %p277 = pneg %p170
        %p278 = pneg %p199
        %p279 = pneg %p196
        %s280 = sand.u32 %s186, 1
        %s281 = scalar_lea.sflag [#allocation4], %s280
        %s282 = sand.u32 %s186, 1
        %s283 = smul.addr %s282, 256
        %s284 = scalar_lea.vmem [#allocation3], %s283
        %p285 = scmp.lt.s32.totalorder %s21, 1
        %s286 = scalar_select %p285, %s21, 1
        %s287 = smul.addr %s286, 8
        %s288 = smul.addr %s287, 8
        %s289 = scalar_lea.vmem %s0, %s288
        %p290 = scmp.lt.s32.totalorder %s21, 1
        %s291 = scalar_select %p290, %s21, 1
        %s292 = smul.addr %s291, 8
        %s293 = scalar_lea.vmem %s1, %s292
        %294 = vst [vmem:[#allocation2] sm:$0xff] 0.0
        %295 = vst [vmem:[#allocation2 + $0x8] sm:$0xff] 0.0
        %296 = vst [vmem:[#allocation2 + $0x10] sm:$0xff] 0.0
        %297 = vst [vmem:[#allocation2 + $0x18] sm:$0xff] 0.0
        %298 = vst [vmem:[#allocation2 + $0x20] sm:$0xff] 0.0
        %299 = vst [vmem:[#allocation2 + $0x28] sm:$0xff] 0.0
        %300 = vst [vmem:[#allocation2 + $0x30] sm:$0xff] 0.0
        %301 = vst [vmem:[#allocation2 + $0x38] sm:$0xff] 0.0
        %302 = vst [vmem:[#allocation2 + $0x40] sm:$0xff] 0.0
        %303 = vst [vmem:[#allocation2 + $0x48] sm:$0xff] 0.0
        %304 = vst [vmem:[#allocation2 + $0x50] sm:$0xff] 0.0
        %305 = vst [vmem:[#allocation2 + $0x58] sm:$0xff] 0.0
        %306 = vst [vmem:[#allocation2 + $0x60] sm:$0xff] 0.0
        %307 = vst [vmem:[#allocation2 + $0x68] sm:$0xff] 0.0
        %308 = vst [vmem:[#allocation2 + $0x70] sm:$0xff] 0.0
        %309 = vst [vmem:[#allocation2 + $0x78] sm:$0xff] 0.0
        %310 = vst [vmem:[#allocation2 + $0x80] sm:$0xff] 0.0
        %311 = vst [vmem:[#allocation2 + $0x88] sm:$0xff] 0.0
        %312 = vst [vmem:[#allocation2 + $0x90] sm:$0xff] 0.0
        %313 = vst [vmem:[#allocation2 + $0x98] sm:$0xf] 0.0
        %v314 = vld [vmem:[%s289] sm:$0xff]
        %v315 = vld [vmem:[%s289 + $0x8] sm:$0xff]
        %v316 = vld [vmem:[%s289 + $0x10] sm:$0xff]
        %v317 = vld [vmem:[%s289 + $0x18] sm:$0xff]
        %v318 = vld [vmem:[%s289 + $0x20] sm:$0xff]
        %v319 = vld [vmem:[%s289 + $0x28] sm:$0xff]
        %v320 = vld [vmem:[%s289 + $0x30] sm:$0xff]
        %v321 = vld [vmem:[%s289 + $0x38] sm:$0xff]
        %v322 = vld [vmem:[%s2] sm:$0xff]
        %v323 = vld [vmem:[%s2 + $0x8] sm:$0xff]
        %vm324 = vcmask 130048
        %v326 = vsel %vm324, %v314, 0
        %v329 = vsel %vm324, %v315, 0
        %v332 = vsel %vm324, %v316, 0
        %v335 = vsel %vm324, %v317, 0
        %v338 = vsel %vm324, %v318, 0
        %v341 = vsel %vm324, %v319, 0
        %v344 = vsel %vm324, %v320, 0
        %v347 = vsel %vm324, %v321, 0
        %349 = vmatprep.subr.mxu0 0.0
        %350 = vmatpush1.msra.mxu0 %v322
        %351 = vmatprep.subr.mxu0 0.0
        %352 = vmatpush1.msra.mxu0 %v323
        %353 = vmatprep.subr.mxu0 0.0
        %354 = vmatpush1.msra.mxu0 0.0
        %355 = vmatprep.subr.mxu0 0.0
        %356 = vmatpush1.msra.mxu0 0.0
        %357 = vmatprep.subr.mxu0 0.0
        %358 = vmatpush1.msra.mxu0 0.0
        %359 = vmatprep.subr.mxu0 0.0
        %360 = vmatpush1.msra.mxu0 0.0
        %361 = vmatprep.subr.mxu0 0.0
        %362 = vmatpush1.msra.mxu0 0.0
        %363 = vmatprep.subr.mxu0 0.0
        %364 = vmatpush1.msra.mxu0 0.0
        %365 = vmatprep.subr.mxu0 0.0
        %366 = vmatpush1.msra.mxu0 0.0
        %367 = vmatprep.subr.mxu0 0.0
        %368 = vmatpush1.msra.mxu0 0.0
        %369 = vmatprep.subr.mxu0 0.0
        %370 = vmatpush1.msra.mxu0 0.0
        %371 = vmatprep.subr.mxu0 0.0
        %372 = vmatpush1.msra.mxu0 0.0
        %373 = vmatprep.subr.mxu0 0.0
        %374 = vmatpush1.msra.mxu0 0.0
        %375 = vmatprep.subr.mxu0 0.0
        %376 = vmatpush1.msra.mxu0 0.0
        %377 = vmatprep.subr.mxu0 0.0
        %378 = vmatpush1.msra.mxu0 0.0
        %379 = vmatprep.subr.mxu0 0.0
        %380 = vmatpush1.msra.mxu0 0.0
        %381 = vmatprep.subr.mxu0 0.0
        %382 = vmatpush1.msra.mxu0 0.0
        %383 = vmatprep.subr.mxu0 0.0
        %384 = vmatpush1.msra.mxu0 0.0
        %385 = vmatprep.subr.mxu0 0.0
        %386 = vmatpush1.msra.mxu0 0.0
        %387 = vmatprep.subr.mxu0 0.0
        %388 = vmatpush1.msra.mxu0 0.0
        %389 = vmatprep.subr.mxu0 0.0
        %390 = vmatpush1.msra.mxu0 0.0
        %391 = vmatprep.subr.mxu0 0.0
        %392 = vmatpush1.msra.mxu0 0.0
        %393 = vmatprep.subr.mxu0 0.0
        %394 = vmatpush1.msra.mxu0 0.0
        %395 = vmatprep.subr.mxu0 0.0
        %396 = vmatpush1.msra.mxu0 0.0
        %397 = vmatprep.subr.mxu0 0.0
        %398 = vmatpush1.msra.mxu0 0.0
        %399 = vmatprep.subr.mxu0 0.0
        %400 = vmatpush1.msra.mxu0 0.0
        %401 = vmatprep.subr.mxu0 0.0
        %402 = vmatpush1.msra.mxu0 0.0
        %403 = vmatprep.subr.mxu0 0.0
        %404 = vmatpush1.msra.mxu0 0.0
        %405 = vmatprep.subr.mxu0 0.0
        %406 = vmatpush1.msra.mxu0 0.0
        %407 = vmatprep.subr.mxu0 0.0
        %408 = vmatpush1.msra.mxu0 0.0
        %409 = vmatprep.subr.mxu0 0.0
        %410 = vmatpush1.msra.mxu0 0.0
        %411 = vmatprep.subr.mxu0 0.0
        %412 = vmatpush1.msra.mxu0 0.0
        %413 = vmatprep.mubr.f32.mxu0 0.0
        %414 = vmatmul.mubr.f32.gmra.mrb[0].mxu0 %v326
        %v415 = vpop.f32.mrb[0].mxu0
        %v416 = vadd.f32 0.0, %v415
        %v417 = vpop.f32.mrb[0].mxu0
        %418 = vmatprep.mubr.f32.mxu0 0.0
        %419 = vmatmul.mubr.f32.gmra.mrb[0].mxu0 %v329
        %v420 = vpop.f32.mrb[0].mxu0
        %v421 = vadd.f32 0.0, %v420
        %v422 = vpop.f32.mrb[0].mxu0
        %423 = vmatprep.mubr.f32.mxu0 0.0
        %424 = vmatmul.mubr.f32.gmra.mrb[0].mxu0 %v332
        %v425 = vpop.f32.mrb[0].mxu0
        %v426 = vadd.f32 0.0, %v425
        %v427 = vpop.f32.mrb[0].mxu0
        %428 = vmatprep.mubr.f32.mxu0 0.0
        %429 = vmatmul.mubr.f32.gmra.mrb[0].mxu0 %v335
        %v430 = vpop.f32.mrb[0].mxu0
        %v431 = vadd.f32 0.0, %v430
        %v432 = vpop.f32.mrb[0].mxu0
        %433 = vmatprep.mubr.f32.mxu0 0.0
        %434 = vmatmul.mubr.f32.gmra.mrb[0].mxu0 %v338
        %v435 = vpop.f32.mrb[0].mxu0
        %v436 = vadd.f32 0.0, %v435
        %v437 = vpop.f32.mrb[0].mxu0
        %438 = vmatprep.mubr.f32.mxu0 0.0
        %439 = vmatmul.mubr.f32.gmra.mrb[0].mxu0 %v341
        %v440 = vpop.f32.mrb[0].mxu0
        %v441 = vadd.f32 0.0, %v440
        %v442 = vpop.f32.mrb[0].mxu0
        %443 = vmatprep.mubr.f32.mxu0 0.0
        %444 = vmatmul.mubr.f32.gmra.mrb[0].mxu0 %v344
        %v445 = vpop.f32.mrb[0].mxu0
        %v446 = vadd.f32 0.0, %v445
        %v447 = vpop.f32.mrb[0].mxu0
        %448 = vmatprep.mubr.f32.mxu0 0.0
        %449 = vmatmul.mubr.f32.gmra.mrb[0].mxu0 %v347
        %v450 = vpop.f32.mrb[0].mxu0
        %v451 = vadd.f32 0.0, %v450
        %v452 = vpop.f32.mrb[0].mxu0
        %453 = vdwg.mxu0
        %454 = vst [vmem:[#allocation2 + $0xc] sm:$0xf] %v416
        %v456 = vcombine.high %v416, %v416
        %458 = vst [vmem:[#allocation2 + $0x14] sm:$0xf] %v456
        %459 = vst [vmem:[#allocation2 + $0x1c] sm:$0xf] %v421
        %v461 = vcombine.high %v421, %v421
        %463 = vst [vmem:[#allocation2 + $0x24] sm:$0xf] %v461
        %464 = vst [vmem:[#allocation2 + $0x2c] sm:$0xf] %v426
        %v466 = vcombine.high %v426, %v426
        %468 = vst [vmem:[#allocation2 + $0x34] sm:$0xf] %v466
        %469 = vst [vmem:[#allocation2 + $0x3c] sm:$0xf] %v431
        %v471 = vcombine.high %v431, %v431
        %473 = vst [vmem:[#allocation2 + $0x44] sm:$0xf] %v471
        %474 = vst [vmem:[#allocation2 + $0x4c] sm:$0xf] %v436
        %v476 = vcombine.high %v436, %v436
        %478 = vst [vmem:[#allocation2 + $0x54] sm:$0xf] %v476
        %479 = vst [vmem:[#allocation2 + $0x5c] sm:$0xf] %v441
        %v481 = vcombine.high %v441, %v441
        %483 = vst [vmem:[#allocation2 + $0x64] sm:$0xf] %v481
        %484 = vst [vmem:[#allocation2 + $0x6c] sm:$0xf] %v446
        %v486 = vcombine.high %v446, %v446
        %488 = vst [vmem:[#allocation2 + $0x74] sm:$0xf] %v486
        %489 = vst [vmem:[#allocation2 + $0x7c] sm:$0xf] %v451
        %v491 = vcombine.high %v451, %v451
        %493 = vst [vmem:[#allocation2 + $0x84] sm:$0xf] %v491
        %v494 = vld [vmem:[#allocation2] sm:$0xff]
        %v495 = vld [vmem:[#allocation2 + $0x8] sm:$0xff]
        %v496 = vld [vmem:[#allocation2 + $0x10] sm:$0xff]
        %v497 = vld [vmem:[#allocation2 + $0x18] sm:$0xff]
        %v498 = vld [vmem:[#allocation2 + $0x20] sm:$0xff]
        %v499 = vld [vmem:[#allocation2 + $0x28] sm:$0xff]
        %v500 = vld [vmem:[#allocation2 + $0x30] sm:$0xff]
        %v501 = vld [vmem:[#allocation2 + $0x38] sm:$0xff]
        %v502 = vld [vmem:[#allocation2 + $0x40] sm:$0xff]
        %v503 = vld [vmem:[#allocation2 + $0x48] sm:$0xff]
        %v504 = vld [vmem:[#allocation2 + $0x50] sm:$0xff]
        %v505 = vld [vmem:[#allocation2 + $0x58] sm:$0xff]
        %v506 = vld [vmem:[#allocation2 + $0x60] sm:$0xff]
        %v507 = vld [vmem:[#allocation2 + $0x68] sm:$0xff]
        %v508 = vld [vmem:[#allocation2 + $0x70] sm:$0xff]
        %v509 = vld [vmem:[#allocation2 + $0x78] sm:$0xff]
        %v510 = vld [vmem:[#allocation2 + $0x80] sm:$0xff]
        %v511 = vld [vmem:[#allocation2 + $0x88] sm:$0xff]
        %v512 = vld [vmem:[#allocation2 + $0x90] sm:$0xff]
        %v513 = vld [vmem:[#allocation2 + $0x98] sm:$0xf]
        %v532 = vcombine.high %v494, %v494
        %v533 = vcombine.high %v495, %v495
        %v534 = vcombine.high %v496, %v496
        %v535 = vcombine.high %v497, %v497
        %v536 = vcombine.high %v498, %v498
        %v537 = vcombine.high %v499, %v499
        %v538 = vcombine.high %v500, %v500
        %v539 = vcombine.high %v501, %v501
        %v540 = vcombine.high %v502, %v502
        %v541 = vcombine.high %v503, %v503
        %v542 = vcombine.high %v504, %v504
        %v543 = vcombine.high %v505, %v505
        %v544 = vcombine.high %v506, %v506
        %v545 = vcombine.high %v507, %v507
        %v546 = vcombine.high %v508, %v508
        %v547 = vcombine.high %v509, %v509
        %v548 = vcombine.high %v510, %v510
        %v566 = vcombine.low %v495, %v495
        %v567 = vcombine.low %v496, %v496
        %v568 = vcombine.low %v497, %v497
        %v569 = vcombine.low %v498, %v498
        %v570 = vcombine.low %v499, %v499
        %v571 = vcombine.low %v500, %v500
        %v572 = vcombine.low %v501, %v501
        %v573 = vcombine.low %v502, %v502
        %v574 = vcombine.low %v503, %v503
        %v575 = vcombine.low %v504, %v504
        %v576 = vcombine.low %v505, %v505
        %v577 = vcombine.low %v506, %v506
        %v578 = vcombine.low %v507, %v507
        %v579 = vcombine.low %v508, %v508
        %v580 = vcombine.low %v509, %v509
        %v581 = vcombine.low %v510, %v510
        %v582 = vcombine.low %v511, %v511
        %v601 = vcombine.high %v511, %v511
        %v603 = vcombine.low %v512, %v512
        %605 = vrot.lane.b32.xlu0 %v494, 127
        %v606 = vpop.permute.xlu0 %605
        %607 = vrot.lane.b32.xlu0 %v532, 127
        %v608 = vpop.permute.xlu0 %607
        %609 = vrot.lane.b32.xlu0 %v495, 127
        %v610 = vpop.permute.xlu0 %609
        %611 = vrot.lane.b32.xlu0 %v533, 127
        %v612 = vpop.permute.xlu0 %611
        %613 = vrot.lane.b32.xlu0 %v496, 127
        %v614 = vpop.permute.xlu0 %613
        %615 = vrot.lane.b32.xlu0 %v534, 127
        %v616 = vpop.permute.xlu0 %615
        %617 = vrot.lane.b32.xlu0 %v497, 127
        %v618 = vpop.permute.xlu0 %617
        %619 = vrot.lane.b32.xlu0 %v535, 127
        %v620 = vpop.permute.xlu0 %619
        %621 = vrot.lane.b32.xlu0 %v498, 127
        %v622 = vpop.permute.xlu0 %621
        %623 = vrot.lane.b32.xlu0 %v536, 127
        %v624 = vpop.permute.xlu0 %623
        %625 = vrot.lane.b32.xlu0 %v499, 127
        %v626 = vpop.permute.xlu0 %625
        %627 = vrot.lane.b32.xlu0 %v537, 127
        %v628 = vpop.permute.xlu0 %627
        %629 = vrot.lane.b32.xlu0 %v500, 127
        %v630 = vpop.permute.xlu0 %629
        %631 = vrot.lane.b32.xlu0 %v538, 127
        %v632 = vpop.permute.xlu0 %631
        %633 = vrot.lane.b32.xlu0 %v501, 127
        %v634 = vpop.permute.xlu0 %633
        %635 = vrot.lane.b32.xlu0 %v539, 127
        %v636 = vpop.permute.xlu0 %635
        %637 = vrot.lane.b32.xlu0 %v502, 127
        %v638 = vpop.permute.xlu0 %637
        %639 = vrot.lane.b32.xlu0 %v540, 127
        %v640 = vpop.permute.xlu0 %639
        %641 = vrot.lane.b32.xlu0 %v503, 127
        %v642 = vpop.permute.xlu0 %641
        %643 = vrot.lane.b32.xlu0 %v541, 127
        %v644 = vpop.permute.xlu0 %643
        %645 = vrot.lane.b32.xlu0 %v504, 127
        %v646 = vpop.permute.xlu0 %645
        %647 = vrot.lane.b32.xlu0 %v542, 127
        %v648 = vpop.permute.xlu0 %647
        %649 = vrot.lane.b32.xlu0 %v505, 127
        %v650 = vpop.permute.xlu0 %649
        %651 = vrot.lane.b32.xlu0 %v543, 127
        %v652 = vpop.permute.xlu0 %651
        %653 = vrot.lane.b32.xlu0 %v506, 127
        %v654 = vpop.permute.xlu0 %653
        %655 = vrot.lane.b32.xlu0 %v544, 127
        %v656 = vpop.permute.xlu0 %655
        %657 = vrot.lane.b32.xlu0 %v507, 127
        %v658 = vpop.permute.xlu0 %657
        %659 = vrot.lane.b32.xlu0 %v545, 127
        %v660 = vpop.permute.xlu0 %659
        %661 = vrot.lane.b32.xlu0 %v508, 127
        %v662 = vpop.permute.xlu0 %661
        %663 = vrot.lane.b32.xlu0 %v546, 127
        %v664 = vpop.permute.xlu0 %663
        %665 = vrot.lane.b32.xlu0 %v509, 127
        %v666 = vpop.permute.xlu0 %665
        %667 = vrot.lane.b32.xlu0 %v547, 127
        %v668 = vpop.permute.xlu0 %667
        %669 = vrot.lane.b32.xlu0 %v510, 127
        %v670 = vpop.permute.xlu0 %669
        %671 = vrot.lane.b32.xlu0 %v548, 127
        %v672 = vpop.permute.xlu0 %671
        %673 = vrot.lane.b32.xlu0 %v511, 127
        %v674 = vpop.permute.xlu0 %673
        %675 = vrot.lane.b32.xlu0 %v601, 127
        %v676 = vpop.permute.xlu0 %675
        %vm677 = vcmask 1039360
        %v678 = vsel %vm677, %v606, %v608
        %v679 = vsel %vm677, %v608, %v610
        %v680 = vsel %vm677, %v610, %v612
        %v681 = vsel %vm677, %v612, %v614
        %v682 = vsel %vm677, %v614, %v616
        %v683 = vsel %vm677, %v616, %v618
        %v684 = vsel %vm677, %v618, %v620
        %v685 = vsel %vm677, %v620, %v622
        %v686 = vsel %vm677, %v622, %v624
        %v687 = vsel %vm677, %v624, %v626
        %v688 = vsel %vm677, %v626, %v628
        %v689 = vsel %vm677, %v628, %v630
        %v690 = vsel %vm677, %v630, %v632
        %v691 = vsel %vm677, %v632, %v634
        %v692 = vsel %vm677, %v634, %v636
        %v693 = vsel %vm677, %v636, %v638
        %v694 = vsel %vm677, %v638, %v640
        %v695 = vsel %vm677, %v640, %v642
        %v696 = vsel %vm677, %v642, %v644
        %v697 = vsel %vm677, %v644, %v646
        %v698 = vsel %vm677, %v646, %v648
        %v699 = vsel %vm677, %v648, %v650
        %v700 = vsel %vm677, %v650, %v652
        %v701 = vsel %vm677, %v652, %v654
        %v702 = vsel %vm677, %v654, %v656
        %v703 = vsel %vm677, %v656, %v658
        %v704 = vsel %vm677, %v658, %v660
        %v705 = vsel %vm677, %v660, %v662
        %v706 = vsel %vm677, %v662, %v664
        %v707 = vsel %vm677, %v664, %v666
        %v708 = vsel %vm677, %v666, %v668
        %v709 = vsel %vm677, %v668, %v670
        %v710 = vsel %vm677, %v670, %v672
        %v711 = vsel %vm677, %v672, %v674
        %v712 = vsel %vm677, %v674, %v676
        %748 = vrot.lane.b32.xlu0 %v566, 127
        %v749 = vpop.permute.xlu0 %748
        %750 = vrot.lane.b32.xlu0 %v567, 127
        %v751 = vpop.permute.xlu0 %750
        %752 = vrot.lane.b32.xlu0 %v568, 127
        %v753 = vpop.permute.xlu0 %752
        %754 = vrot.lane.b32.xlu0 %v569, 127
        %v755 = vpop.permute.xlu0 %754
        %756 = vrot.lane.b32.xlu0 %v570, 127
        %v757 = vpop.permute.xlu0 %756
        %758 = vrot.lane.b32.xlu0 %v571, 127
        %v759 = vpop.permute.xlu0 %758
        %760 = vrot.lane.b32.xlu0 %v572, 127
        %v761 = vpop.permute.xlu0 %760
        %762 = vrot.lane.b32.xlu0 %v573, 127
        %v763 = vpop.permute.xlu0 %762
        %764 = vrot.lane.b32.xlu0 %v574, 127
        %v765 = vpop.permute.xlu0 %764
        %766 = vrot.lane.b32.xlu0 %v575, 127
        %v767 = vpop.permute.xlu0 %766
        %768 = vrot.lane.b32.xlu0 %v576, 127
        %v769 = vpop.permute.xlu0 %768
        %770 = vrot.lane.b32.xlu0 %v577, 127
        %v771 = vpop.permute.xlu0 %770
        %772 = vrot.lane.b32.xlu0 %v578, 127
        %v773 = vpop.permute.xlu0 %772
        %774 = vrot.lane.b32.xlu0 %v579, 127
        %v775 = vpop.permute.xlu0 %774
        %776 = vrot.lane.b32.xlu0 %v580, 127
        %v777 = vpop.permute.xlu0 %776
        %778 = vrot.lane.b32.xlu0 %v581, 127
        %v779 = vpop.permute.xlu0 %778
        %780 = vrot.lane.b32.xlu0 %v582, 127
        %v781 = vpop.permute.xlu0 %780
        %782 = vrot.lane.b32.xlu0 %v603, 127
        %v783 = vpop.permute.xlu0 %782
        %v784 = vsel %vm677, %v606, %v749
        %v785 = vsel %vm677, %v749, %v610
        %v786 = vsel %vm677, %v610, %v751
        %v787 = vsel %vm677, %v751, %v614
        %v788 = vsel %vm677, %v614, %v753
        %v789 = vsel %vm677, %v753, %v618
        %v790 = vsel %vm677, %v618, %v755
        %v791 = vsel %vm677, %v755, %v622
        %v792 = vsel %vm677, %v622, %v757
        %v793 = vsel %vm677, %v757, %v626
        %v794 = vsel %vm677, %v626, %v759
        %v795 = vsel %vm677, %v759, %v630
        %v796 = vsel %vm677, %v630, %v761
        %v797 = vsel %vm677, %v761, %v634
        %v798 = vsel %vm677, %v634, %v763
        %v799 = vsel %vm677, %v763, %v638
        %v800 = vsel %vm677, %v638, %v765
        %v801 = vsel %vm677, %v765, %v642
        %v802 = vsel %vm677, %v642, %v767
        %v803 = vsel %vm677, %v767, %v646
        %v804 = vsel %vm677, %v646, %v769
        %v805 = vsel %vm677, %v769, %v650
        %v806 = vsel %vm677, %v650, %v771
        %v807 = vsel %vm677, %v771, %v654
        %v808 = vsel %vm677, %v654, %v773
        %v809 = vsel %vm677, %v773, %v658
        %v810 = vsel %vm677, %v658, %v775
        %v811 = vsel %vm677, %v775, %v662
        %v812 = vsel %vm677, %v662, %v777
        %v813 = vsel %vm677, %v777, %v666
        %v814 = vsel %vm677, %v666, %v779
        %v815 = vsel %vm677, %v779, %v670
        %v816 = vsel %vm677, %v670, %v781
        %v817 = vsel %vm677, %v781, %v674
        %v818 = vsel %vm677, %v674, %v783
        %v854 = vcombine.high %v512, %v512
        %855 = vrot.lane.b32.xlu0 %v512, 127
        %v856 = vpop.permute.xlu0 %855
        %857 = vrot.lane.b32.xlu0 %v854, 127
        %v858 = vpop.permute.xlu0 %857
        %v859 = vsel %vm677, %v676, %v856
        %v860 = vsel %vm677, %v856, %v858
        %v864 = vcombine.low %v513, %v513
        %865 = vrot.lane.b32.xlu0 %v864, 127
        %v866 = vpop.permute.xlu0 %865
        %v867 = vsel %vm677, %v783, %v856
        %v868 = vsel %vm677, %v856, %v866
        %871 = vrot.lane.b32.xlu0 %v494, 126
        %v872 = vpop.permute.xlu0 %871
        %873 = vrot.lane.b32.xlu0 %v532, 126
        %v874 = vpop.permute.xlu0 %873
        %875 = vrot.lane.b32.xlu0 %v495, 126
        %v876 = vpop.permute.xlu0 %875
        %877 = vrot.lane.b32.xlu0 %v533, 126
        %v878 = vpop.permute.xlu0 %877
        %879 = vrot.lane.b32.xlu0 %v496, 126
        %v880 = vpop.permute.xlu0 %879
        %881 = vrot.lane.b32.xlu0 %v534, 126
        %v882 = vpop.permute.xlu0 %881
        %883 = vrot.lane.b32.xlu0 %v497, 126
        %v884 = vpop.permute.xlu0 %883
        %885 = vrot.lane.b32.xlu0 %v535, 126
        %v886 = vpop.permute.xlu0 %885
        %887 = vrot.lane.b32.xlu0 %v498, 126
        %v888 = vpop.permute.xlu0 %887
        %889 = vrot.lane.b32.xlu0 %v536, 126
        %v890 = vpop.permute.xlu0 %889
        %891 = vrot.lane.b32.xlu0 %v499, 126
        %v892 = vpop.permute.xlu0 %891
        %893 = vrot.lane.b32.xlu0 %v537, 126
        %v894 = vpop.permute.xlu0 %893
        %895 = vrot.lane.b32.xlu0 %v500, 126
        %v896 = vpop.permute.xlu0 %895
        %897 = vrot.lane.b32.xlu0 %v538, 126
        %v898 = vpop.permute.xlu0 %897
        %899 = vrot.lane.b32.xlu0 %v501, 126
        %v900 = vpop.permute.xlu0 %899
        %901 = vrot.lane.b32.xlu0 %v539, 126
        %v902 = vpop.permute.xlu0 %901
        %903 = vrot.lane.b32.xlu0 %v502, 126
        %v904 = vpop.permute.xlu0 %903
        %905 = vrot.lane.b32.xlu0 %v540, 126
        %v906 = vpop.permute.xlu0 %905
        %907 = vrot.lane.b32.xlu0 %v503, 126
        %v908 = vpop.permute.xlu0 %907
        %909 = vrot.lane.b32.xlu0 %v541, 126
        %v910 = vpop.permute.xlu0 %909
        %911 = vrot.lane.b32.xlu0 %v504, 126
        %v912 = vpop.permute.xlu0 %911
        %913 = vrot.lane.b32.xlu0 %v542, 126
        %v914 = vpop.permute.xlu0 %913
        %915 = vrot.lane.b32.xlu0 %v505, 126
        %v916 = vpop.permute.xlu0 %915
        %917 = vrot.lane.b32.xlu0 %v543, 126
        %v918 = vpop.permute.xlu0 %917
        %919 = vrot.lane.b32.xlu0 %v506, 126
        %v920 = vpop.permute.xlu0 %919
        %921 = vrot.lane.b32.xlu0 %v544, 126
        %v922 = vpop.permute.xlu0 %921
        %923 = vrot.lane.b32.xlu0 %v507, 126
        %v924 = vpop.permute.xlu0 %923
        %925 = vrot.lane.b32.xlu0 %v545, 126
        %v926 = vpop.permute.xlu0 %925
        %927 = vrot.lane.b32.xlu0 %v508, 126
        %v928 = vpop.permute.xlu0 %927
        %929 = vrot.lane.b32.xlu0 %v546, 126
        %v930 = vpop.permute.xlu0 %929
        %931 = vrot.lane.b32.xlu0 %v509, 126
        %v932 = vpop.permute.xlu0 %931
        %933 = vrot.lane.b32.xlu0 %v547, 126
        %v934 = vpop.permute.xlu0 %933
        %935 = vrot.lane.b32.xlu0 %v510, 126
        %v936 = vpop.permute.xlu0 %935
        %937 = vrot.lane.b32.xlu0 %v548, 126
        %v938 = vpop.permute.xlu0 %937
        %939 = vrot.lane.b32.xlu0 %v511, 126
        %v940 = vpop.permute.xlu0 %939
        %941 = vrot.lane.b32.xlu0 %v601, 126
        %v942 = vpop.permute.xlu0 %941
        %vm943 = vcmask 1031168
        %v944 = vsel %vm943, %v872, %v874
        %v945 = vsel %vm943, %v874, %v876
        %v946 = vsel %vm943, %v876, %v878
        %v947 = vsel %vm943, %v878, %v880
        %v948 = vsel %vm943, %v880, %v882
        %v949 = vsel %vm943, %v882, %v884
        %v950 = vsel %vm943, %v884, %v886
        %v951 = vsel %vm943, %v886, %v888
        %v952 = vsel %vm943, %v888, %v890
        %v953 = vsel %vm943, %v890, %v892
        %v954 = vsel %vm943, %v892, %v894
        %v955 = vsel %vm943, %v894, %v896
        %v956 = vsel %vm943, %v896, %v898
        %v957 = vsel %vm943, %v898, %v900
        %v958 = vsel %vm943, %v900, %v902
        %v959 = vsel %vm943, %v902, %v904
        %v960 = vsel %vm943, %v904, %v906
        %v961 = vsel %vm943, %v906, %v908
        %v962 = vsel %vm943, %v908, %v910
        %v963 = vsel %vm943, %v910, %v912
        %v964 = vsel %vm943, %v912, %v914
        %v965 = vsel %vm943, %v914, %v916
        %v966 = vsel %vm943, %v916, %v918
        %v967 = vsel %vm943, %v918, %v920
        %v968 = vsel %vm943, %v920, %v922
        %v969 = vsel %vm943, %v922, %v924
        %v970 = vsel %vm943, %v924, %v926
        %v971 = vsel %vm943, %v926, %v928
        %v972 = vsel %vm943, %v928, %v930
        %v973 = vsel %vm943, %v930, %v932
        %v974 = vsel %vm943, %v932, %v934
        %v975 = vsel %vm943, %v934, %v936
        %v976 = vsel %vm943, %v936, %v938
        %v977 = vsel %vm943, %v938, %v940
        %v978 = vsel %vm943, %v940, %v942
        %1014 = vrot.lane.b32.xlu0 %v566, 126
        %v1015 = vpop.permute.xlu0 %1014
        %1016 = vrot.lane.b32.xlu0 %v567, 126
        %v1017 = vpop.permute.xlu0 %1016
        %1018 = vrot.lane.b32.xlu0 %v568, 126
        %v1019 = vpop.permute.xlu0 %1018
        %1020 = vrot.lane.b32.xlu0 %v569, 126
        %v1021 = vpop.permute.xlu0 %1020
        %1022 = vrot.lane.b32.xlu0 %v570, 126
        %v1023 = vpop.permute.xlu0 %1022
        %1024 = vrot.lane.b32.xlu0 %v571, 126
        %v1025 = vpop.permute.xlu0 %1024
        %1026 = vrot.lane.b32.xlu0 %v572, 126
        %v1027 = vpop.permute.xlu0 %1026
        %1028 = vrot.lane.b32.xlu0 %v573, 126
        %v1029 = vpop.permute.xlu0 %1028
        %1030 = vrot.lane.b32.xlu0 %v574, 126
        %v1031 = vpop.permute.xlu0 %1030
        %1032 = vrot.lane.b32.xlu0 %v575, 126
        %v1033 = vpop.permute.xlu0 %1032
        %1034 = vrot.lane.b32.xlu0 %v576, 126
        %v1035 = vpop.permute.xlu0 %1034
        %1036 = vrot.lane.b32.xlu0 %v577, 126
        %v1037 = vpop.permute.xlu0 %1036
        %1038 = vrot.lane.b32.xlu0 %v578, 126
        %v1039 = vpop.permute.xlu0 %1038
        %1040 = vrot.lane.b32.xlu0 %v579, 126
        %v1041 = vpop.permute.xlu0 %1040
        %1042 = vrot.lane.b32.xlu0 %v580, 126
        %v1043 = vpop.permute.xlu0 %1042
        %1044 = vrot.lane.b32.xlu0 %v581, 126
        %v1045 = vpop.permute.xlu0 %1044
        %1046 = vrot.lane.b32.xlu0 %v582, 126
        %v1047 = vpop.permute.xlu0 %1046
        %1048 = vrot.lane.b32.xlu0 %v603, 126
        %v1049 = vpop.permute.xlu0 %1048
        %v1050 = vsel %vm943, %v872, %v1015
        %v1051 = vsel %vm943, %v1015, %v876
        %v1052 = vsel %vm943, %v876, %v1017
        %v1053 = vsel %vm943, %v1017, %v880
        %v1054 = vsel %vm943, %v880, %v1019
        %v1055 = vsel %vm943, %v1019, %v884
        %v1056 = vsel %vm943, %v884, %v1021
        %v1057 = vsel %vm943, %v1021, %v888
        %v1058 = vsel %vm943, %v888, %v1023
        %v1059 = vsel %vm943, %v1023, %v892
        %v1060 = vsel %vm943, %v892, %v1025
        %v1061 = vsel %vm943, %v1025, %v896
        %v1062 = vsel %vm943, %v896, %v1027
        %v1063 = vsel %vm943, %v1027, %v900
        %v1064 = vsel %vm943, %v900, %v1029
        %v1065 = vsel %vm943, %v1029, %v904
        %v1066 = vsel %vm943, %v904, %v1031
        %v1067 = vsel %vm943, %v1031, %v908
        %v1068 = vsel %vm943, %v908, %v1033
        %v1069 = vsel %vm943, %v1033, %v912
        %v1070 = vsel %vm943, %v912, %v1035
        %v1071 = vsel %vm943, %v1035, %v916
        %v1072 = vsel %vm943, %v916, %v1037
        %v1073 = vsel %vm943, %v1037, %v920
        %v1074 = vsel %vm943, %v920, %v1039
        %v1075 = vsel %vm943, %v1039, %v924
        %v1076 = vsel %vm943, %v924, %v1041
        %v1077 = vsel %vm943, %v1041, %v928
        %v1078 = vsel %vm943, %v928, %v1043
        %v1079 = vsel %vm943, %v1043, %v932
        %v1080 = vsel %vm943, %v932, %v1045
        %v1081 = vsel %vm943, %v1045, %v936
        %v1082 = vsel %vm943, %v936, %v1047
        %v1083 = vsel %vm943, %v1047, %v940
        %v1084 = vsel %vm943, %v940, %v1049
        %1120 = vrot.lane.b32.xlu0 %v512, 126
        %v1121 = vpop.permute.xlu0 %1120
        %1122 = vrot.lane.b32.xlu0 %v854, 126
        %v1123 = vpop.permute.xlu0 %1122
        %v1124 = vsel %vm943, %v942, %v1121
        %v1125 = vsel %vm943, %v1121, %v1123
        %1128 = vrot.lane.b32.xlu0 %v864, 126
        %v1129 = vpop.permute.xlu0 %1128
        %v1130 = vsel %vm943, %v1049, %v1121
        %v1131 = vsel %vm943, %v1121, %v1129
        %1134 = vrot.lane.b32.xlu0 %v494, 125
        %v1135 = vpop.permute.xlu0 %1134
        %1136 = vrot.lane.b32.xlu0 %v532, 125
        %v1137 = vpop.permute.xlu0 %1136
        %1138 = vrot.lane.b32.xlu0 %v495, 125
        %v1139 = vpop.permute.xlu0 %1138
        %1140 = vrot.lane.b32.xlu0 %v533, 125
        %v1141 = vpop.permute.xlu0 %1140
        %1142 = vrot.lane.b32.xlu0 %v496, 125
        %v1143 = vpop.permute.xlu0 %1142
        %1144 = vrot.lane.b32.xlu0 %v534, 125
        %v1145 = vpop.permute.xlu0 %1144
        %1146 = vrot.lane.b32.xlu0 %v497, 125
        %v1147 = vpop.permute.xlu0 %1146
        %1148 = vrot.lane.b32.xlu0 %v535, 125
        %v1149 = vpop.permute.xlu0 %1148
        %1150 = vrot.lane.b32.xlu0 %v498, 125
        %v1151 = vpop.permute.xlu0 %1150
        %1152 = vrot.lane.b32.xlu0 %v536, 125
        %v1153 = vpop.permute.xlu0 %1152
        %1154 = vrot.lane.b32.xlu0 %v499, 125
        %v1155 = vpop.permute.xlu0 %1154
        %1156 = vrot.lane.b32.xlu0 %v537, 125
        %v1157 = vpop.permute.xlu0 %1156
        %1158 = vrot.lane.b32.xlu0 %v500, 125
        %v1159 = vpop.permute.xlu0 %1158
        %1160 = vrot.lane.b32.xlu0 %v538, 125
        %v1161 = vpop.permute.xlu0 %1160
        %1162 = vrot.lane.b32.xlu0 %v501, 125
        %v1163 = vpop.permute.xlu0 %1162
        %1164 = vrot.lane.b32.xlu0 %v539, 125
        %v1165 = vpop.permute.xlu0 %1164
        %1166 = vrot.lane.b32.xlu0 %v502, 125
        %v1167 = vpop.permute.xlu0 %1166
        %1168 = vrot.lane.b32.xlu0 %v540, 125
        %v1169 = vpop.permute.xlu0 %1168
        %1170 = vrot.lane.b32.xlu0 %v503, 125
        %v1171 = vpop.permute.xlu0 %1170
        %1172 = vrot.lane.b32.xlu0 %v541, 125
        %v1173 = vpop.permute.xlu0 %1172
        %1174 = vrot.lane.b32.xlu0 %v504, 125
        %v1175 = vpop.permute.xlu0 %1174
        %1176 = vrot.lane.b32.xlu0 %v542, 125
        %v1177 = vpop.permute.xlu0 %1176
        %1178 = vrot.lane.b32.xlu0 %v505, 125
        %v1179 = vpop.permute.xlu0 %1178
        %1180 = vrot.lane.b32.xlu0 %v543, 125
        %v1181 = vpop.permute.xlu0 %1180
        %1182 = vrot.lane.b32.xlu0 %v506, 125
        %v1183 = vpop.permute.xlu0 %1182
        %1184 = vrot.lane.b32.xlu0 %v544, 125
        %v1185 = vpop.permute.xlu0 %1184
        %1186 = vrot.lane.b32.xlu0 %v507, 125
        %v1187 = vpop.permute.xlu0 %1186
        %1188 = vrot.lane.b32.xlu0 %v545, 125
        %v1189 = vpop.permute.xlu0 %1188
        %1190 = vrot.lane.b32.xlu0 %v508, 125
        %v1191 = vpop.permute.xlu0 %1190
        %1192 = vrot.lane.b32.xlu0 %v546, 125
        %v1193 = vpop.permute.xlu0 %1192
        %1194 = vrot.lane.b32.xlu0 %v509, 125
        %v1195 = vpop.permute.xlu0 %1194
        %1196 = vrot.lane.b32.xlu0 %v547, 125
        %v1197 = vpop.permute.xlu0 %1196
        %1198 = vrot.lane.b32.xlu0 %v510, 125
        %v1199 = vpop.permute.xlu0 %1198
        %1200 = vrot.lane.b32.xlu0 %v548, 125
        %v1201 = vpop.permute.xlu0 %1200
        %1202 = vrot.lane.b32.xlu0 %v511, 125
        %v1203 = vpop.permute.xlu0 %1202
        %1204 = vrot.lane.b32.xlu0 %v601, 125
        %v1205 = vpop.permute.xlu0 %1204
        %vm1206 = vcmask 1022976
        %v1207 = vsel %vm1206, %v1135, %v1137
        %v1208 = vsel %vm1206, %v1137, %v1139
        %v1209 = vsel %vm1206, %v1139, %v1141
        %v1210 = vsel %vm1206, %v1141, %v1143
        %v1211 = vsel %vm1206, %v1143, %v1145
        %v1212 = vsel %vm1206, %v1145, %v1147
        %v1213 = vsel %vm1206, %v1147, %v1149
        %v1214 = vsel %vm1206, %v1149, %v1151
        %v1215 = vsel %vm1206, %v1151, %v1153
        %v1216 = vsel %vm1206, %v1153, %v1155
        %v1217 = vsel %vm1206, %v1155, %v1157
        %v1218 = vsel %vm1206, %v1157, %v1159
        %v1219 = vsel %vm1206, %v1159, %v1161
        %v1220 = vsel %vm1206, %v1161, %v1163
        %v1221 = vsel %vm1206, %v1163, %v1165
        %v1222 = vsel %vm1206, %v1165, %v1167
        %v1223 = vsel %vm1206, %v1167, %v1169
        %v1224 = vsel %vm1206, %v1169, %v1171
        %v1225 = vsel %vm1206, %v1171, %v1173
        %v1226 = vsel %vm1206, %v1173, %v1175
        %v1227 = vsel %vm1206, %v1175, %v1177
        %v1228 = vsel %vm1206, %v1177, %v1179
        %v1229 = vsel %vm1206, %v1179, %v1181
        %v1230 = vsel %vm1206, %v1181, %v1183
        %v1231 = vsel %vm1206, %v1183, %v1185
        %v1232 = vsel %vm1206, %v1185, %v1187
        %v1233 = vsel %vm1206, %v1187, %v1189
        %v1234 = vsel %vm1206, %v1189, %v1191
        %v1235 = vsel %vm1206, %v1191, %v1193
        %v1236 = vsel %vm1206, %v1193, %v1195
        %v1237 = vsel %vm1206, %v1195, %v1197
        %v1238 = vsel %vm1206, %v1197, %v1199
        %v1239 = vsel %vm1206, %v1199, %v1201
        %v1240 = vsel %vm1206, %v1201, %v1203
        %v1241 = vsel %vm1206, %v1203, %v1205
        %1277 = vrot.lane.b32.xlu0 %v566, 125
        %v1278 = vpop.permute.xlu0 %1277
        %1279 = vrot.lane.b32.xlu0 %v567, 125
        %v1280 = vpop.permute.xlu0 %1279
        %1281 = vrot.lane.b32.xlu0 %v568, 125
        %v1282 = vpop.permute.xlu0 %1281
        %1283 = vrot.lane.b32.xlu0 %v569, 125
        %v1284 = vpop.permute.xlu0 %1283
        %1285 = vrot.lane.b32.xlu0 %v570, 125
        %v1286 = vpop.permute.xlu0 %1285
        %1287 = vrot.lane.b32.xlu0 %v571, 125
        %v1288 = vpop.permute.xlu0 %1287
        %1289 = vrot.lane.b32.xlu0 %v572, 125
        %v1290 = vpop.permute.xlu0 %1289
        %1291 = vrot.lane.b32.xlu0 %v573, 125
        %v1292 = vpop.permute.xlu0 %1291
        %1293 = vrot.lane.b32.xlu0 %v574, 125
        %v1294 = vpop.permute.xlu0 %1293
        %1295 = vrot.lane.b32.xlu0 %v575, 125
        %v1296 = vpop.permute.xlu0 %1295
        %1297 = vrot.lane.b32.xlu0 %v576, 125
        %v1298 = vpop.permute.xlu0 %1297
        %1299 = vrot.lane.b32.xlu0 %v577, 125
        %v1300 = vpop.permute.xlu0 %1299
        %1301 = vrot.lane.b32.xlu0 %v578, 125
        %v1302 = vpop.permute.xlu0 %1301
        %1303 = vrot.lane.b32.xlu0 %v579, 125
        %v1304 = vpop.permute.xlu0 %1303
        %1305 = vrot.lane.b32.xlu0 %v580, 125
        %v1306 = vpop.permute.xlu0 %1305
        %1307 = vrot.lane.b32.xlu0 %v581, 125
        %v1308 = vpop.permute.xlu0 %1307
        %1309 = vrot.lane.b32.xlu0 %v582, 125
        %v1310 = vpop.permute.xlu0 %1309
        %1311 = vrot.lane.b32.xlu0 %v603, 125
        %v1312 = vpop.permute.xlu0 %1311
        %v1313 = vsel %vm1206, %v1135, %v1278
        %v1314 = vsel %vm1206, %v1278, %v1139
        %v1315 = vsel %vm1206, %v1139, %v1280
        %v1316 = vsel %vm1206, %v1280, %v1143
        %v1317 = vsel %vm1206, %v1143, %v1282
        %v1318 = vsel %vm1206, %v1282, %v1147
        %v1319 = vsel %vm1206, %v1147, %v1284
        %v1320 = vsel %vm1206, %v1284, %v1151
        %v1321 = vsel %vm1206, %v1151, %v1286
        %v1322 = vsel %vm1206, %v1286, %v1155
        %v1323 = vsel %vm1206, %v1155, %v1288
        %v1324 = vsel %vm1206, %v1288, %v1159
        %v1325 = vsel %vm1206, %v1159, %v1290
        %v1326 = vsel %vm1206, %v1290, %v1163
        %v1327 = vsel %vm1206, %v1163, %v1292
        %v1328 = vsel %vm1206, %v1292, %v1167
        %v1329 = vsel %vm1206, %v1167, %v1294
        %v1330 = vsel %vm1206, %v1294, %v1171
        %v1331 = vsel %vm1206, %v1171, %v1296
        %v1332 = vsel %vm1206, %v1296, %v1175
        %v1333 = vsel %vm1206, %v1175, %v1298
        %v1334 = vsel %vm1206, %v1298, %v1179
        %v1335 = vsel %vm1206, %v1179, %v1300
        %v1336 = vsel %vm1206, %v1300, %v1183
        %v1337 = vsel %vm1206, %v1183, %v1302
        %v1338 = vsel %vm1206, %v1302, %v1187
        %v1339 = vsel %vm1206, %v1187, %v1304
        %v1340 = vsel %vm1206, %v1304, %v1191
        %v1341 = vsel %vm1206, %v1191, %v1306
        %v1342 = vsel %vm1206, %v1306, %v1195
        %v1343 = vsel %vm1206, %v1195, %v1308
        %v1344 = vsel %vm1206, %v1308, %v1199
        %v1345 = vsel %vm1206, %v1199, %v1310
        %v1346 = vsel %vm1206, %v1310, %v1203
        %v1347 = vsel %vm1206, %v1203, %v1312
        %1383 = vrot.lane.b32.xlu0 %v512, 125
        %v1384 = vpop.permute.xlu0 %1383
        %1385 = vrot.lane.b32.xlu0 %v854, 125
        %v1386 = vpop.permute.xlu0 %1385
        %v1387 = vsel %vm1206, %v1205, %v1384
        %v1388 = vsel %vm1206, %v1384, %v1386
        %1391 = vrot.lane.b32.xlu0 %v864, 125
        %v1392 = vpop.permute.xlu0 %1391
        %v1393 = vsel %vm1206, %v1312, %v1384
        %v1394 = vsel %vm1206, %v1384, %v1392
        %vm1397 = vcmask 1043456
        %v1398 = vsel %vm1397, %v532, %v566
        %v1399 = vsel %vm1397, %v533, %v567
        %v1400 = vsel %vm1397, %v534, %v568
        %v1401 = vsel %vm1397, %v535, %v569
        %v1402 = vsel %vm1397, %v536, %v570
        %v1403 = vsel %vm1397, %v537, %v571
        %v1404 = vsel %vm1397, %v538, %v572
        %v1405 = vsel %vm1397, %v539, %v573
        %v1406 = vsel %vm1397, %v540, %v574
        %v1407 = vsel %vm1397, %v541, %v575
        %v1408 = vsel %vm1397, %v542, %v576
        %v1409 = vsel %vm1397, %v543, %v577
        %v1410 = vsel %vm1397, %v544, %v578
        %v1411 = vsel %vm1397, %v545, %v579
        %v1412 = vsel %vm1397, %v546, %v580
        %v1413 = vsel %vm1397, %v547, %v581
        %v1414 = vsel %vm1397, %v548, %v582
        %v1415 = vsel %vm1397, %v601, %v603
        %v1416 = vsel %vm1397, %v678, %v784
        %v1417 = vsel %vm1397, %v679, %v785
        %v1418 = vsel %vm1397, %v680, %v786
        %v1419 = vsel %vm1397, %v681, %v787
        %v1420 = vsel %vm1397, %v682, %v788
        %v1421 = vsel %vm1397, %v683, %v789
        %v1422 = vsel %vm1397, %v684, %v790
        %v1423 = vsel %vm1397, %v685, %v791
        %v1424 = vsel %vm1397, %v686, %v792
        %v1425 = vsel %vm1397, %v687, %v793
        %v1426 = vsel %vm1397, %v688, %v794
        %v1427 = vsel %vm1397, %v689, %v795
        %v1428 = vsel %vm1397, %v690, %v796
        %v1429 = vsel %vm1397, %v691, %v797
        %v1430 = vsel %vm1397, %v692, %v798
        %v1431 = vsel %vm1397, %v693, %v799
        %v1432 = vsel %vm1397, %v694, %v800
        %v1433 = vsel %vm1397, %v695, %v801
        %v1434 = vsel %vm1397, %v696, %v802
        %v1435 = vsel %vm1397, %v697, %v803
        %v1436 = vsel %vm1397, %v698, %v804
        %v1437 = vsel %vm1397, %v699, %v805
        %v1438 = vsel %vm1397, %v700, %v806
        %v1439 = vsel %vm1397, %v701, %v807
        %v1440 = vsel %vm1397, %v702, %v808
        %v1441 = vsel %vm1397, %v703, %v809
        %v1442 = vsel %vm1397, %v704, %v810
        %v1443 = vsel %vm1397, %v705, %v811
        %v1444 = vsel %vm1397, %v706, %v812
        %v1445 = vsel %vm1397, %v707, %v813
        %v1446 = vsel %vm1397, %v708, %v814
        %v1447 = vsel %vm1397, %v709, %v815
        %v1448 = vsel %vm1397, %v710, %v816
        %v1449 = vsel %vm1397, %v711, %v817
        %v1450 = vsel %vm1397, %v712, %v818
        %v1451 = vsel %vm1397, %v859, %v867
        %v1452 = vsel %vm1397, %v860, %v868
        %v1453 = vsel %vm1397, %v944, %v1050
        %v1454 = vsel %vm1397, %v945, %v1051
        %v1455 = vsel %vm1397, %v946, %v1052
        %v1456 = vsel %vm1397, %v947, %v1053
        %v1457 = vsel %vm1397, %v948, %v1054
        %v1458 = vsel %vm1397, %v949, %v1055
        %v1459 = vsel %vm1397, %v950, %v1056
        %v1460 = vsel %vm1397, %v951, %v1057
        %v1461 = vsel %vm1397, %v952, %v1058
        %v1462 = vsel %vm1397, %v953, %v1059
        %v1463 = vsel %vm1397, %v954, %v1060
        %v1464 = vsel %vm1397, %v955, %v1061
        %v1465 = vsel %vm1397, %v956, %v1062
        %v1466 = vsel %vm1397, %v957, %v1063
        %v1467 = vsel %vm1397, %v958, %v1064
        %v1468 = vsel %vm1397, %v959, %v1065
        %v1469 = vsel %vm1397, %v960, %v1066
        %v1470 = vsel %vm1397, %v961, %v1067
        %v1471 = vsel %vm1397, %v962, %v1068
        %v1472 = vsel %vm1397, %v963, %v1069
        %v1473 = vsel %vm1397, %v964, %v1070
        %v1474 = vsel %vm1397, %v965, %v1071
        %v1475 = vsel %vm1397, %v966, %v1072
        %v1476 = vsel %vm1397, %v967, %v1073
        %v1477 = vsel %vm1397, %v968, %v1074
        %v1478 = vsel %vm1397, %v969, %v1075
        %v1479 = vsel %vm1397, %v970, %v1076
        %v1480 = vsel %vm1397, %v971, %v1077
        %v1481 = vsel %vm1397, %v972, %v1078
        %v1482 = vsel %vm1397, %v973, %v1079
        %v1483 = vsel %vm1397, %v974, %v1080
        %v1484 = vsel %vm1397, %v975, %v1081
        %v1485 = vsel %vm1397, %v976, %v1082
        %v1486 = vsel %vm1397, %v977, %v1083
        %v1487 = vsel %vm1397, %v978, %v1084
        %v1488 = vsel %vm1397, %v1124, %v1130
        %v1489 = vsel %vm1397, %v1125, %v1131
        %v1490 = vsel %vm1397, %v1207, %v1313
        %v1491 = vsel %vm1397, %v1208, %v1314
        %v1492 = vsel %vm1397, %v1209, %v1315
        %v1493 = vsel %vm1397, %v1210, %v1316
        %v1494 = vsel %vm1397, %v1211, %v1317
        %v1495 = vsel %vm1397, %v1212, %v1318
        %v1496 = vsel %vm1397, %v1213, %v1319
        %v1497 = vsel %vm1397, %v1214, %v1320
        %v1498 = vsel %vm1397, %v1215, %v1321
        %v1499 = vsel %vm1397, %v1216, %v1322
        %v1500 = vsel %vm1397, %v1217, %v1323
        %v1501 = vsel %vm1397, %v1218, %v1324
        %v1502 = vsel %vm1397, %v1219, %v1325
        %v1503 = vsel %vm1397, %v1220, %v1326
        %v1504 = vsel %vm1397, %v1221, %v1327
        %v1505 = vsel %vm1397, %v1222, %v1328
        %v1506 = vsel %vm1397, %v1223, %v1329
        %v1507 = vsel %vm1397, %v1224, %v1330
        %v1508 = vsel %vm1397, %v1225, %v1331
        %v1509 = vsel %vm1397, %v1226, %v1332
        %v1510 = vsel %vm1397, %v1227, %v1333
        %v1511 = vsel %vm1397, %v1228, %v1334
        %v1512 = vsel %vm1397, %v1229, %v1335
        %v1513 = vsel %vm1397, %v1230, %v1336
        %v1514 = vsel %vm1397, %v1231, %v1337
        %v1515 = vsel %vm1397, %v1232, %v1338
        %v1516 = vsel %vm1397, %v1233, %v1339
        %v1517 = vsel %vm1397, %v1234, %v1340
        %v1518 = vsel %vm1397, %v1235, %v1341
        %v1519 = vsel %vm1397, %v1236, %v1342
        %v1520 = vsel %vm1397, %v1237, %v1343
        %v1521 = vsel %vm1397, %v1238, %v1344
        %v1522 = vsel %vm1397, %v1239, %v1345
        %v1523 = vsel %vm1397, %v1240, %v1346
        %v1524 = vsel %vm1397, %v1241, %v1347
        %v1525 = vsel %vm1397, %v1387, %v1393
        %v1526 = vsel %vm1397, %v1388, %v1394
        %v1527 = vld [vmem:[%s3] sm:$0xff]
        %v1528 = vld [vmem:[%s3 + $0x8] sm:$0xff]
        %vm1529 = vcmask 523264
        %v1531 = vsel %vm1529, %v1527, 0
        %v1534 = vsel %vm1529, %v1528, 0
        %1536 = vmatprep.subr.mxu0 %v1398
        %1537 = vmatpush1.msra.mxu0 %v494
        %1538 = vmatprep.subr.mxu0 %v1399
        %1539 = vmatpush1.msra.mxu0 %v495
        %1540 = vmatprep.subr.mxu0 %v1417
        %1541 = vmatpush1.msra.mxu0 %v1416
        %1542 = vmatprep.subr.mxu0 %v1419
        %1543 = vmatpush1.msra.mxu0 %v1418
        %1544 = vmatprep.subr.mxu0 %v1454
        %1545 = vmatpush1.msra.mxu0 %v1453
        %1546 = vmatprep.subr.mxu0 %v1456
        %1547 = vmatpush1.msra.mxu0 %v1455
        %1548 = vmatprep.subr.mxu0 %v1491
        %1549 = vmatpush1.msra.mxu0 %v1490
        %1550 = vmatprep.subr.mxu0 %v1493
        %1551 = vmatpush1.msra.mxu0 %v1492
        %1552 = vmatprep.subr.mxu0 0.0
        %1553 = vmatpush1.msra.mxu0 0.0
        %1554 = vmatprep.subr.mxu0 0.0
        %1555 = vmatpush1.msra.mxu0 0.0
        %1556 = vmatprep.subr.mxu0 0.0
        %1557 = vmatpush1.msra.mxu0 0.0
        %1558 = vmatprep.subr.mxu0 0.0
        %1559 = vmatpush1.msra.mxu0 0.0
        %1560 = vmatprep.subr.mxu0 0.0
        %1561 = vmatpush1.msra.mxu0 0.0
        %1562 = vmatprep.subr.mxu0 0.0
        %1563 = vmatpush1.msra.mxu0 0.0
        %1564 = vmatprep.subr.mxu0 0.0
        %1565 = vmatpush1.msra.mxu0 0.0
        %1566 = vmatprep.subr.mxu0 0.0
        %1567 = vmatpush1.msra.mxu0 0.0
        %1568 = vmatprep.subr.mxu0 0.0
        %1569 = vmatpush1.msra.mxu0 0.0
        %1570 = vmatprep.subr.mxu0 0.0
        %1571 = vmatpush1.msra.mxu0 0.0
        %1572 = vmatprep.subr.mxu0 0.0
        %1573 = vmatpush1.msra.mxu0 0.0
        %1574 = vmatprep.subr.mxu0 0.0
        %1575 = vmatpush1.msra.mxu0 0.0
        %1576 = vmatprep.subr.mxu0 0.0
        %1577 = vmatpush1.msra.mxu0 0.0
        %1578 = vmatprep.subr.mxu0 0.0
        %1579 = vmatpush1.msra.mxu0 0.0
        %1580 = vmatprep.subr.mxu0 0.0
        %1581 = vmatpush1.msra.mxu0 0.0
        %1582 = vmatprep.subr.mxu0 0.0
        %1583 = vmatpush1.msra.mxu0 0.0
        %1584 = vmatprep.subr.mxu0 0.0
        %1585 = vmatpush1.msra.mxu0 0.0
        %1586 = vmatprep.subr.mxu0 0.0
        %1587 = vmatpush1.msra.mxu0 0.0
        %1588 = vmatprep.subr.mxu0 0.0
        %1589 = vmatpush1.msra.mxu0 0.0
        %1590 = vmatprep.subr.mxu0 0.0
        %1591 = vmatpush1.msra.mxu0 0.0
        %1592 = vmatprep.subr.mxu0 0.0
        %1593 = vmatpush1.msra.mxu0 0.0
        %1594 = vmatprep.subr.mxu0 0.0
        %1595 = vmatpush1.msra.mxu0 0.0
        %1596 = vmatprep.subr.mxu0 0.0
        %1597 = vmatpush1.msra.mxu0 0.0
        %1598 = vmatprep.subr.mxu0 0.0
        %1599 = vmatpush1.msra.mxu0 0.0
        %1600 = vmatprep.mubr.f32.mxu0 0.0
        %1601 = vmatmul.mubr.f32.gmra.mrb[0].mxu0 %v1531
        %v1602 = vpop.f32.mrb[0].mxu0
        %v1603 = vadd.f32 0.0, %v1602
        %v1604 = vpop.f32.mrb[0].mxu0
        %v1605 = vadd.f32 0.0, %v1604
        %1606 = vmatprep.mubr.f32.mxu0 0.0
        %1607 = vmatmul.mubr.f32.gmra.mrb[0].mxu0 %v1534
        %v1608 = vpop.f32.mrb[0].mxu0
        %v1609 = vpop.f32.mrb[0].mxu0
        %v1610 = vadd.f32 0.0, %v1609
        %1611 = vdwg.mxu0
        %1612 = vmatprep.subr.mxu0 %v1399
        %1613 = vmatpush1.msra.mxu0 %v495
        %1614 = vmatprep.subr.mxu0 %v1400
        %1615 = vmatpush1.msra.mxu0 %v496
        %1616 = vmatprep.subr.mxu0 %v1419
        %1617 = vmatpush1.msra.mxu0 %v1418
        %1618 = vmatprep.subr.mxu0 %v1421
        %1619 = vmatpush1.msra.mxu0 %v1420
        %1620 = vmatprep.subr.mxu0 %v1456
        %1621 = vmatpush1.msra.mxu0 %v1455
        %1622 = vmatprep.subr.mxu0 %v1458
        %1623 = vmatpush1.msra.mxu0 %v1457
        %1624 = vmatprep.subr.mxu0 %v1493
        %1625 = vmatpush1.msra.mxu0 %v1492
        %1626 = vmatprep.subr.mxu0 %v1495
        %1627 = vmatpush1.msra.mxu0 %v1494
        %1628 = vmatprep.subr.mxu0 0.0
        %1629 = vmatpush1.msra.mxu0 0.0
        %1630 = vmatprep.subr.mxu0 0.0
        %1631 = vmatpush1.msra.mxu0 0.0
        %1632 = vmatprep.subr.mxu0 0.0
        %1633 = vmatpush1.msra.mxu0 0.0
        %1634 = vmatprep.subr.mxu0 0.0
        %1635 = vmatpush1.msra.mxu0 0.0
        %1636 = vmatprep.subr.mxu0 0.0
        %1637 = vmatpush1.msra.mxu0 0.0
        %1638 = vmatprep.subr.mxu0 0.0
        %1639 = vmatpush1.msra.mxu0 0.0
        %1640 = vmatprep.subr.mxu0 0.0
        %1641 = vmatpush1.msra.mxu0 0.0
        %1642 = vmatprep.subr.mxu0 0.0
        %1643 = vmatpush1.msra.mxu0 0.0
        %1644 = vmatprep.subr.mxu0 0.0
        %1645 = vmatpush1.msra.mxu0 0.0
        %1646 = vmatprep.subr.mxu0 0.0
        %1647 = vmatpush1.msra.mxu0 0.0
        %1648 = vmatprep.subr.mxu0 0.0
        %1649 = vmatpush1.msra.mxu0 0.0
        %1650 = vmatprep.subr.mxu0 0.0
        %1651 = vmatpush1.msra.mxu0 0.0
        %1652 = vmatprep.subr.mxu0 0.0
        %1653 = vmatpush1.msra.mxu0 0.0
        %1654 = vmatprep.subr.mxu0 0.0
        %1655 = vmatpush1.msra.mxu0 0.0
        %1656 = vmatprep.subr.mxu0 0.0
        %1657 = vmatpush1.msra.mxu0 0.0
        %1658 = vmatprep.subr.mxu0 0.0
        %1659 = vmatpush1.msra.mxu0 0.0
        %1660 = vmatprep.subr.mxu0 0.0
        %1661 = vmatpush1.msra.mxu0 0.0
        %1662 = vmatprep.subr.mxu0 0.0
        %1663 = vmatpush1.msra.mxu0 0.0
        %1664 = vmatprep.subr.mxu0 0.0
        %1665 = vmatpush1.msra.mxu0 0.0
        %1666 = vmatprep.subr.mxu0 0.0
        %1667 = vmatpush1.msra.mxu0 0.0
        %1668 = vmatprep.subr.mxu0 0.0
        %1669 = vmatpush1.msra.mxu0 0.0
        %1670 = vmatprep.subr.mxu0 0.0
        %1671 = vmatpush1.msra.mxu0 0.0
        %1672 = vmatprep.subr.mxu0 0.0
        %1673 = vmatpush1.msra.mxu0 0.0
        %1674 = vmatprep.subr.mxu0 0.0
        %1675 = vmatpush1.msra.mxu0 0.0
        %1676 = vmatprep.mubr.f32.mxu0 0.0
        %1677 = vmatmul.mubr.f32.gmra.mrb[0].mxu0 %v1531
        %v1678 = vpop.f32.mrb[0].mxu0
        %v1679 = vadd.f32 0.0, %v1678
        %v1680 = vpop.f32.mrb[0].mxu0
        %v1681 = vadd.f32 0.0, %v1680
        %1682 = vmatprep.mubr.f32.mxu0 0.0
        %1683 = vmatmul.mubr.f32.gmra.mrb[0].mxu0 %v1534
        %v1684 = vpop.f32.mrb[0].mxu0
        %v1685 = vadd.f32 0.0, %v1684
        %v1686 = vpop.f32.mrb[0].mxu0
        %v1687 = vadd.f32 0.0, %v1686
        %1688 = vdwg.mxu0
        %1689 = vmatprep.subr.mxu0 %v1400
        %1690 = vmatpush1.msra.mxu0 %v496
        %1691 = vmatprep.subr.mxu0 %v1401
        %1692 = vmatpush1.msra.mxu0 %v497
        %1693 = vmatprep.subr.mxu0 %v1421
        %1694 = vmatpush1.msra.mxu0 %v1420
        %1695 = vmatprep.subr.mxu0 %v1423
        %1696 = vmatpush1.msra.mxu0 %v1422
        %1697 = vmatprep.subr.mxu0 %v1458
        %1698 = vmatpush1.msra.mxu0 %v1457
        %1699 = vmatprep.subr.mxu0 %v1460
        %1700 = vmatpush1.msra.mxu0 %v1459
        %1701 = vmatprep.subr.mxu0 %v1495
        %1702 = vmatpush1.msra.mxu0 %v1494
        %1703 = vmatprep.subr.mxu0 %v1497
        %1704 = vmatpush1.msra.mxu0 %v1496
        %1705 = vmatprep.subr.mxu0 0.0
        %1706 = vmatpush1.msra.mxu0 0.0
        %1707 = vmatprep.subr.mxu0 0.0
        %1708 = vmatpush1.msra.mxu0 0.0
        %1709 = vmatprep.subr.mxu0 0.0
        %1710 = vmatpush1.msra.mxu0 0.0
        %1711 = vmatprep.subr.mxu0 0.0
        %1712 = vmatpush1.msra.mxu0 0.0
        %1713 = vmatprep.subr.mxu0 0.0
        %1714 = vmatpush1.msra.mxu0 0.0
        %1715 = vmatprep.subr.mxu0 0.0
        %1716 = vmatpush1.msra.mxu0 0.0
        %1717 = vmatprep.subr.mxu0 0.0
        %1718 = vmatpush1.msra.mxu0 0.0
        %1719 = vmatprep.subr.mxu0 0.0
        %1720 = vmatpush1.msra.mxu0 0.0
        %1721 = vmatprep.subr.mxu0 0.0
        %1722 = vmatpush1.msra.mxu0 0.0
        %1723 = vmatprep.subr.mxu0 0.0
        %1724 = vmatpush1.msra.mxu0 0.0
        %1725 = vmatprep.subr.mxu0 0.0
        %1726 = vmatpush1.msra.mxu0 0.0
        %1727 = vmatprep.subr.mxu0 0.0
        %1728 = vmatpush1.msra.mxu0 0.0
        %1729 = vmatprep.subr.mxu0 0.0
        %1730 = vmatpush1.msra.mxu0 0.0
        %1731 = vmatprep.subr.mxu0 0.0
        %1732 = vmatpush1.msra.mxu0 0.0
        %1733 = vmatprep.subr.mxu0 0.0
        %1734 = vmatpush1.msra.mxu0 0.0
        %1735 = vmatprep.subr.mxu0 0.0
        %1736 = vmatpush1.msra.mxu0 0.0
        %1737 = vmatprep.subr.mxu0 0.0
        %1738 = vmatpush1.msra.mxu0 0.0
        %1739 = vmatprep.subr.mxu0 0.0
        %1740 = vmatpush1.msra.mxu0 0.0
        %1741 = vmatprep.subr.mxu0 0.0
        %1742 = vmatpush1.msra.mxu0 0.0
        %1743 = vmatprep.subr.mxu0 0.0
        %1744 = vmatpush1.msra.mxu0 0.0
        %1745 = vmatprep.subr.mxu0 0.0
        %1746 = vmatpush1.msra.mxu0 0.0
        %1747 = vmatprep.subr.mxu0 0.0
        %1748 = vmatpush1.msra.mxu0 0.0
        %1749 = vmatprep.subr.mxu0 0.0
        %1750 = vmatpush1.msra.mxu0 0.0
        %1751 = vmatprep.subr.mxu0 0.0
        %1752 = vmatpush1.msra.mxu0 0.0
        %1753 = vmatprep.mubr.f32.mxu0 0.0
        %1754 = vmatmul.mubr.f32.gmra.mrb[0].mxu0 %v1531
        %v1755 = vpop.f32.mrb[0].mxu0
        %v1756 = vadd.f32 0.0, %v1755
        %v1757 = vpop.f32.mrb[0].mxu0
        %v1758 = vadd.f32 0.0, %v1757
        %1759 = vmatprep.mubr.f32.mxu0 0.0
        %1760 = vmatmul.mubr.f32.gmra.mrb[0].mxu0 %v1534
        %v1761 = vpop.f32.mrb[0].mxu0
        %v1762 = vadd.f32 0.0, %v1761
        %v1763 = vpop.f32.mrb[0].mxu0
        %v1764 = vadd.f32 0.0, %v1763
        %1765 = vdwg.mxu0
        %1766 = vmatprep.subr.mxu0 %v1401
        %1767 = vmatpush1.msra.mxu0 %v497
        %1768 = vmatprep.subr.mxu0 %v1402
        %1769 = vmatpush1.msra.mxu0 %v498
        %1770 = vmatprep.subr.mxu0 %v1423
        %1771 = vmatpush1.msra.mxu0 %v1422
        %1772 = vmatprep.subr.mxu0 %v1425
        %1773 = vmatpush1.msra.mxu0 %v1424
        %1774 = vmatprep.subr.mxu0 %v1460
        %1775 = vmatpush1.msra.mxu0 %v1459
        %1776 = vmatprep.subr.mxu0 %v1462
        %1777 = vmatpush1.msra.mxu0 %v1461
        %1778 = vmatprep.subr.mxu0 %v1497
        %1779 = vmatpush1.msra.mxu0 %v1496
        %1780 = vmatprep.subr.mxu0 %v1499
        %1781 = vmatpush1.msra.mxu0 %v1498
        %1782 = vmatprep.subr.mxu0 0.0
        %1783 = vmatpush1.msra.mxu0 0.0
        %1784 = vmatprep.subr.mxu0 0.0
        %1785 = vmatpush1.msra.mxu0 0.0
        %1786 = vmatprep.subr.mxu0 0.0
        %1787 = vmatpush1.msra.mxu0 0.0
        %1788 = vmatprep.subr.mxu0 0.0
        %1789 = vmatpush1.msra.mxu0 0.0
        %1790 = vmatprep.subr.mxu0 0.0
        %1791 = vmatpush1.msra.mxu0 0.0
        %1792 = vmatprep.subr.mxu0 0.0
        %1793 = vmatpush1.msra.mxu0 0.0
        %1794 = vmatprep.subr.mxu0 0.0
        %1795 = vmatpush1.msra.mxu0 0.0
        %1796 = vmatprep.subr.mxu0 0.0
        %1797 = vmatpush1.msra.mxu0 0.0
        %1798 = vmatprep.subr.mxu0 0.0
        %1799 = vmatpush1.msra.mxu0 0.0
        %1800 = vmatprep.subr.mxu0 0.0
        %1801 = vmatpush1.msra.mxu0 0.0
        %1802 = vmatprep.subr.mxu0 0.0
        %1803 = vmatpush1.msra.mxu0 0.0
        %1804 = vmatprep.subr.mxu0 0.0
        %1805 = vmatpush1.msra.mxu0 0.0
        %1806 = vmatprep.subr.mxu0 0.0
        %1807 = vmatpush1.msra.mxu0 0.0
        %1808 = vmatprep.subr.mxu0 0.0
        %1809 = vmatpush1.msra.mxu0 0.0
        %1810 = vmatprep.subr.mxu0 0.0
        %1811 = vmatpush1.msra.mxu0 0.0
        %1812 = vmatprep.subr.mxu0 0.0
        %1813 = vmatpush1.msra.mxu0 0.0
        %1814 = vmatprep.subr.mxu0 0.0
        %1815 = vmatpush1.msra.mxu0 0.0
        %1816 = vmatprep.subr.mxu0 0.0
        %1817 = vmatpush1.msra.mxu0 0.0
        %1818 = vmatprep.subr.mxu0 0.0
        %1819 = vmatpush1.msra.mxu0 0.0
        %1820 = vmatprep.subr.mxu0 0.0
        %1821 = vmatpush1.msra.mxu0 0.0
        %1822 = vmatprep.subr.mxu0 0.0
        %1823 = vmatpush1.msra.mxu0 0.0
        %1824 = vmatprep.subr.mxu0 0.0
        %1825 = vmatpush1.msra.mxu0 0.0
        %1826 = vmatprep.subr.mxu0 0.0
        %1827 = vmatpush1.msra.mxu0 0.0
        %1828 = vmatprep.subr.mxu0 0.0
        %1829 = vmatpush1.msra.mxu0 0.0
        %1830 = vmatprep.mubr.f32.mxu0 0.0
        %1831 = vmatmul.mubr.f32.gmra.mrb[0].mxu0 %v1531
        %v1832 = vpop.f32.mrb[0].mxu0
        %v1833 = vadd.f32 0.0, %v1832
        %v1834 = vpop.f32.mrb[0].mxu0
        %v1835 = vadd.f32 0.0, %v1834
        %1836 = vmatprep.mubr.f32.mxu0 0.0
        %1837 = vmatmul.mubr.f32.gmra.mrb[0].mxu0 %v1534
        %v1838 = vpop.f32.mrb[0].mxu0
        %v1839 = vadd.f32 0.0, %v1838
        %v1840 = vpop.f32.mrb[0].mxu0
        %v1841 = vadd.f32 0.0, %v1840
        %1842 = vdwg.mxu0
        %1843 = vmatprep.subr.mxu0 %v1402
        %1844 = vmatpush1.msra.mxu0 %v498
        %1845 = vmatprep.subr.mxu0 %v1403
        %1846 = vmatpush1.msra.mxu0 %v499
        %1847 = vmatprep.subr.mxu0 %v1425
        %1848 = vmatpush1.msra.mxu0 %v1424
        %1849 = vmatprep.subr.mxu0 %v1427
        %1850 = vmatpush1.msra.mxu0 %v1426
        %1851 = vmatprep.subr.mxu0 %v1462
        %1852 = vmatpush1.msra.mxu0 %v1461
        %1853 = vmatprep.subr.mxu0 %v1464
        %1854 = vmatpush1.msra.mxu0 %v1463
        %1855 = vmatprep.subr.mxu0 %v1499
        %1856 = vmatpush1.msra.mxu0 %v1498
        %1857 = vmatprep.subr.mxu0 %v1501
        %1858 = vmatpush1.msra.mxu0 %v1500
        %1859 = vmatprep.subr.mxu0 0.0
        %1860 = vmatpush1.msra.mxu0 0.0
        %1861 = vmatprep.subr.mxu0 0.0
        %1862 = vmatpush1.msra.mxu0 0.0
        %1863 = vmatprep.subr.mxu0 0.0
        %1864 = vmatpush1.msra.mxu0 0.0
        %1865 = vmatprep.subr.mxu0 0.0
        %1866 = vmatpush1.msra.mxu0 0.0
        %1867 = vmatprep.subr.mxu0 0.0
        %1868 = vmatpush1.msra.mxu0 0.0
        %1869 = vmatprep.subr.mxu0 0.0
        %1870 = vmatpush1.msra.mxu0 0.0
        %1871 = vmatprep.subr.mxu0 0.0
        %1872 = vmatpush1.msra.mxu0 0.0
        %1873 = vmatprep.subr.mxu0 0.0
        %1874 = vmatpush1.msra.mxu0 0.0
        %1875 = vmatprep.subr.mxu0 0.0
        %1876 = vmatpush1.msra.mxu0 0.0
        %1877 = vmatprep.subr.mxu0 0.0
        %1878 = vmatpush1.msra.mxu0 0.0
        %1879 = vmatprep.subr.mxu0 0.0
        %1880 = vmatpush1.msra.mxu0 0.0
        %1881 = vmatprep.subr.mxu0 0.0
        %1882 = vmatpush1.msra.mxu0 0.0
        %1883 = vmatprep.subr.mxu0 0.0
        %1884 = vmatpush1.msra.mxu0 0.0
        %1885 = vmatprep.subr.mxu0 0.0
        %1886 = vmatpush1.msra.mxu0 0.0
        %1887 = vmatprep.subr.mxu0 0.0
        %1888 = vmatpush1.msra.mxu0 0.0
        %1889 = vmatprep.subr.mxu0 0.0
        %1890 = vmatpush1.msra.mxu0 0.0
        %1891 = vmatprep.subr.mxu0 0.0
        %1892 = vmatpush1.msra.mxu0 0.0
        %1893 = vmatprep.subr.mxu0 0.0
        %1894 = vmatpush1.msra.mxu0 0.0
        %1895 = vmatprep.subr.mxu0 0.0
        %1896 = vmatpush1.msra.mxu0 0.0
        %1897 = vmatprep.subr.mxu0 0.0
        %1898 = vmatpush1.msra.mxu0 0.0
        %1899 = vmatprep.subr.mxu0 0.0
        %1900 = vmatpush1.msra.mxu0 0.0
        %1901 = vmatprep.subr.mxu0 0.0
        %1902 = vmatpush1.msra.mxu0 0.0
        %1903 = vmatprep.subr.mxu0 0.0
        %1904 = vmatpush1.msra.mxu0 0.0
        %1905 = vmatprep.subr.mxu0 0.0
        %1906 = vmatpush1.msra.mxu0 0.0
        %1907 = vmatprep.mubr.f32.mxu0 0.0
        %1908 = vmatmul.mubr.f32.gmra.mrb[0].mxu0 %v1531
        %v1909 = vpop.f32.mrb[0].mxu0
        %v1910 = vadd.f32 0.0, %v1909
        %v1911 = vpop.f32.mrb[0].mxu0
        %v1912 = vadd.f32 0.0, %v1911
        %1913 = vmatprep.mubr.f32.mxu0 0.0
        %1914 = vmatmul.mubr.f32.gmra.mrb[0].mxu0 %v1534
        %v1915 = vpop.f32.mrb[0].mxu0
        %v1916 = vadd.f32 0.0, %v1915
        %v1917 = vpop.f32.mrb[0].mxu0
        %v1918 = vadd.f32 0.0, %v1917
        %1919 = vdwg.mxu0
        %1920 = vmatprep.subr.mxu0 %v1403
        %1921 = vmatpush1.msra.mxu0 %v499
        %1922 = vmatprep.subr.mxu0 %v1404
        %1923 = vmatpush1.msra.mxu0 %v500
        %1924 = vmatprep.subr.mxu0 %v1427
        %1925 = vmatpush1.msra.mxu0 %v1426
        %1926 = vmatprep.subr.mxu0 %v1429
        %1927 = vmatpush1.msra.mxu0 %v1428
        %1928 = vmatprep.subr.mxu0 %v1464
        %1929 = vmatpush1.msra.mxu0 %v1463
        %1930 = vmatprep.subr.mxu0 %v1466
        %1931 = vmatpush1.msra.mxu0 %v1465
        %1932 = vmatprep.subr.mxu0 %v1501
        %1933 = vmatpush1.msra.mxu0 %v1500
        %1934 = vmatprep.subr.mxu0 %v1503
        %1935 = vmatpush1.msra.mxu0 %v1502
        %1936 = vmatprep.subr.mxu0 0.0
        %1937 = vmatpush1.msra.mxu0 0.0
        %1938 = vmatprep.subr.mxu0 0.0
        %1939 = vmatpush1.msra.mxu0 0.0
        %1940 = vmatprep.subr.mxu0 0.0
        %1941 = vmatpush1.msra.mxu0 0.0
        %1942 = vmatprep.subr.mxu0 0.0
        %1943 = vmatpush1.msra.mxu0 0.0
        %1944 = vmatprep.subr.mxu0 0.0
        %1945 = vmatpush1.msra.mxu0 0.0
        %1946 = vmatprep.subr.mxu0 0.0
        %1947 = vmatpush1.msra.mxu0 0.0
        %1948 = vmatprep.subr.mxu0 0.0
        %1949 = vmatpush1.msra.mxu0 0.0
        %1950 = vmatprep.subr.mxu0 0.0
        %1951 = vmatpush1.msra.mxu0 0.0
        %1952 = vmatprep.subr.mxu0 0.0
        %1953 = vmatpush1.msra.mxu0 0.0
        %1954 = vmatprep.subr.mxu0 0.0
        %1955 = vmatpush1.msra.mxu0 0.0
        %1956 = vmatprep.subr.mxu0 0.0
        %1957 = vmatpush1.msra.mxu0 0.0
        %1958 = vmatprep.subr.mxu0 0.0
        %1959 = vmatpush1.msra.mxu0 0.0
        %1960 = vmatprep.subr.mxu0 0.0
        %1961 = vmatpush1.msra.mxu0 0.0
        %1962 = vmatprep.subr.mxu0 0.0
        %1963 = vmatpush1.msra.mxu0 0.0
        %1964 = vmatprep.subr.mxu0 0.0
        %1965 = vmatpush1.msra.mxu0 0.0
        %1966 = vmatprep.subr.mxu0 0.0
        %1967 = vmatpush1.msra.mxu0 0.0
        %1968 = vmatprep.subr.mxu0 0.0
        %1969 = vmatpush1.msra.mxu0 0.0
        %1970 = vmatprep.subr.mxu0 0.0
        %1971 = vmatpush1.msra.mxu0 0.0
        %1972 = vmatprep.subr.mxu0 0.0
        %1973 = vmatpush1.msra.mxu0 0.0
        %1974 = vmatprep.subr.mxu0 0.0
        %1975 = vmatpush1.msra.mxu0 0.0
        %1976 = vmatprep.subr.mxu0 0.0
        %1977 = vmatpush1.msra.mxu0 0.0
        %1978 = vmatprep.subr.mxu0 0.0
        %1979 = vmatpush1.msra.mxu0 0.0
        %1980 = vmatprep.subr.mxu0 0.0
        %1981 = vmatpush1.msra.mxu0 0.0
        %1982 = vmatprep.subr.mxu0 0.0
        %1983 = vmatpush1.msra.mxu0 0.0
        %1984 = vmatprep.mubr.f32.mxu0 0.0
        %1985 = vmatmul.mubr.f32.gmra.mrb[0].mxu0 %v1531
        %v1986 = vpop.f32.mrb[0].mxu0
        %v1987 = vadd.f32 0.0, %v1986
        %v1988 = vpop.f32.mrb[0].mxu0
        %v1989 = vadd.f32 0.0, %v1988
        %1990 = vmatprep.mubr.f32.mxu0 0.0
        %1991 = vmatmul.mubr.f32.gmra.mrb[0].mxu0 %v1534
        %v1992 = vpop.f32.mrb[0].mxu0
        %v1993 = vadd.f32 0.0, %v1992
        %v1994 = vpop.f32.mrb[0].mxu0
        %v1995 = vadd.f32 0.0, %v1994
        %1996 = vdwg.mxu0
        %1997 = vmatprep.subr.mxu0 %v1404
        %1998 = vmatpush1.msra.mxu0 %v500
        %1999 = vmatprep.subr.mxu0 %v1405
        %2000 = vmatpush1.msra.mxu0 %v501
        %2001 = vmatprep.subr.mxu0 %v1429
        %2002 = vmatpush1.msra.mxu0 %v1428
        %2003 = vmatprep.subr.mxu0 %v1431
        %2004 = vmatpush1.msra.mxu0 %v1430
        %2005 = vmatprep.subr.mxu0 %v1466
        %2006 = vmatpush1.msra.mxu0 %v1465
        %2007 = vmatprep.subr.mxu0 %v1468
        %2008 = vmatpush1.msra.mxu0 %v1467
        %2009 = vmatprep.subr.mxu0 %v1503
        %2010 = vmatpush1.msra.mxu0 %v1502
        %2011 = vmatprep.subr.mxu0 %v1505
        %2012 = vmatpush1.msra.mxu0 %v1504
        %2013 = vmatprep.subr.mxu0 0.0
        %2014 = vmatpush1.msra.mxu0 0.0
        %2015 = vmatprep.subr.mxu0 0.0
        %2016 = vmatpush1.msra.mxu0 0.0
        %2017 = vmatprep.subr.mxu0 0.0
        %2018 = vmatpush1.msra.mxu0 0.0
        %2019 = vmatprep.subr.mxu0 0.0
        %2020 = vmatpush1.msra.mxu0 0.0
        %2021 = vmatprep.subr.mxu0 0.0
        %2022 = vmatpush1.msra.mxu0 0.0
        %2023 = vmatprep.subr.mxu0 0.0
        %2024 = vmatpush1.msra.mxu0 0.0
        %2025 = vmatprep.subr.mxu0 0.0
        %2026 = vmatpush1.msra.mxu0 0.0
        %2027 = vmatprep.subr.mxu0 0.0
        %2028 = vmatpush1.msra.mxu0 0.0
        %2029 = vmatprep.subr.mxu0 0.0
        %2030 = vmatpush1.msra.mxu0 0.0
        %2031 = vmatprep.subr.mxu0 0.0
        %2032 = vmatpush1.msra.mxu0 0.0
        %2033 = vmatprep.subr.mxu0 0.0
        %2034 = vmatpush1.msra.mxu0 0.0
        %2035 = vmatprep.subr.mxu0 0.0
        %2036 = vmatpush1.msra.mxu0 0.0
        %2037 = vmatprep.subr.mxu0 0.0
        %2038 = vmatpush1.msra.mxu0 0.0
        %2039 = vmatprep.subr.mxu0 0.0
        %2040 = vmatpush1.msra.mxu0 0.0
        %2041 = vmatprep.subr.mxu0 0.0
        %2042 = vmatpush1.msra.mxu0 0.0
        %2043 = vmatprep.subr.mxu0 0.0
        %2044 = vmatpush1.msra.mxu0 0.0
        %2045 = vmatprep.subr.mxu0 0.0
        %2046 = vmatpush1.msra.mxu0 0.0
        %2047 = vmatprep.subr.mxu0 0.0
        %2048 = vmatpush1.msra.mxu0 0.0
        %2049 = vmatprep.subr.mxu0 0.0
        %2050 = vmatpush1.msra.mxu0 0.0
        %2051 = vmatprep.subr.mxu0 0.0
        %2052 = vmatpush1.msra.mxu0 0.0
        %2053 = vmatprep.subr.mxu0 0.0
        %2054 = vmatpush1.msra.mxu0 0.0
        %2055 = vmatprep.subr.mxu0 0.0
        %2056 = vmatpush1.msra.mxu0 0.0
        %2057 = vmatprep.subr.mxu0 0.0
        %2058 = vmatpush1.msra.mxu0 0.0
        %2059 = vmatprep.subr.mxu0 0.0
        %2060 = vmatpush1.msra.mxu0 0.0
        %2061 = vmatprep.mubr.f32.mxu0 0.0
        %2062 = vmatmul.mubr.f32.gmra.mrb[0].mxu0 %v1531
        %v2063 = vpop.f32.mrb[0].mxu0
        %v2064 = vadd.f32 0.0, %v2063
        %v2065 = vpop.f32.mrb[0].mxu0
        %v2066 = vadd.f32 0.0, %v2065
        %2067 = vmatprep.mubr.f32.mxu0 0.0
        %2068 = vmatmul.mubr.f32.gmra.mrb[0].mxu0 %v1534
        %v2069 = vpop.f32.mrb[0].mxu0
        %v2070 = vadd.f32 0.0, %v2069
        %v2071 = vpop.f32.mrb[0].mxu0
        %v2072 = vadd.f32 0.0, %v2071
        %2073 = vdwg.mxu0
        %2074 = vmatprep.subr.mxu0 %v1405
        %2075 = vmatpush1.msra.mxu0 %v501
        %2076 = vmatprep.subr.mxu0 %v1406
        %2077 = vmatpush1.msra.mxu0 %v502
        %2078 = vmatprep.subr.mxu0 %v1431
        %2079 = vmatpush1.msra.mxu0 %v1430
        %2080 = vmatprep.subr.mxu0 %v1433
        %2081 = vmatpush1.msra.mxu0 %v1432
        %2082 = vmatprep.subr.mxu0 %v1468
        %2083 = vmatpush1.msra.mxu0 %v1467
        %2084 = vmatprep.subr.mxu0 %v1470
        %2085 = vmatpush1.msra.mxu0 %v1469
        %2086 = vmatprep.subr.mxu0 %v1505
        %2087 = vmatpush1.msra.mxu0 %v1504
        %2088 = vmatprep.subr.mxu0 %v1507
        %2089 = vmatpush1.msra.mxu0 %v1506
        %2090 = vmatprep.subr.mxu0 0.0
        %2091 = vmatpush1.msra.mxu0 0.0
        %2092 = vmatprep.subr.mxu0 0.0
        %2093 = vmatpush1.msra.mxu0 0.0
        %2094 = vmatprep.subr.mxu0 0.0
        %2095 = vmatpush1.msra.mxu0 0.0
        %2096 = vmatprep.subr.mxu0 0.0
        %2097 = vmatpush1.msra.mxu0 0.0
        %2098 = vmatprep.subr.mxu0 0.0
        %2099 = vmatpush1.msra.mxu0 0.0
        %2100 = vmatprep.subr.mxu0 0.0
        %2101 = vmatpush1.msra.mxu0 0.0
        %2102 = vmatprep.subr.mxu0 0.0
        %2103 = vmatpush1.msra.mxu0 0.0
        %2104 = vmatprep.subr.mxu0 0.0
        %2105 = vmatpush1.msra.mxu0 0.0
        %2106 = vmatprep.subr.mxu0 0.0
        %2107 = vmatpush1.msra.mxu0 0.0
        %2108 = vmatprep.subr.mxu0 0.0
        %2109 = vmatpush1.msra.mxu0 0.0
        %2110 = vmatprep.subr.mxu0 0.0
        %2111 = vmatpush1.msra.mxu0 0.0
        %2112 = vmatprep.subr.mxu0 0.0
        %2113 = vmatpush1.msra.mxu0 0.0
        %2114 = vmatprep.subr.mxu0 0.0
        %2115 = vmatpush1.msra.mxu0 0.0
        %2116 = vmatprep.subr.mxu0 0.0
        %2117 = vmatpush1.msra.mxu0 0.0
        %2118 = vmatprep.subr.mxu0 0.0
        %2119 = vmatpush1.msra.mxu0 0.0
        %2120 = vmatprep.subr.mxu0 0.0
        %2121 = vmatpush1.msra.mxu0 0.0
        %2122 = vmatprep.subr.mxu0 0.0
        %2123 = vmatpush1.msra.mxu0 0.0
        %2124 = vmatprep.subr.mxu0 0.0
        %2125 = vmatpush1.msra.mxu0 0.0
        %2126 = vmatprep.subr.mxu0 0.0
        %2127 = vmatpush1.msra.mxu0 0.0
        %2128 = vmatprep.subr.mxu0 0.0
        %2129 = vmatpush1.msra.mxu0 0.0
        %2130 = vmatprep.subr.mxu0 0.0
        %2131 = vmatpush1.msra.mxu0 0.0
        %2132 = vmatprep.subr.mxu0 0.0
        %2133 = vmatpush1.msra.mxu0 0.0
        %2134 = vmatprep.subr.mxu0 0.0
        %2135 = vmatpush1.msra.mxu0 0.0
        %2136 = vmatprep.subr.mxu0 0.0
        %2137 = vmatpush1.msra.mxu0 0.0
        %2138 = vmatprep.mubr.f32.mxu0 0.0
        %2139 = vmatmul.mubr.f32.gmra.mrb[0].mxu0 %v1531
        %v2140 = vpop.f32.mrb[0].mxu0
        %v2141 = vadd.f32 0.0, %v2140
        %v2142 = vpop.f32.mrb[0].mxu0
        %v2143 = vadd.f32 0.0, %v2142
        %2144 = vmatprep.mubr.f32.mxu0 0.0
        %2145 = vmatmul.mubr.f32.gmra.mrb[0].mxu0 %v1534
        %v2146 = vpop.f32.mrb[0].mxu0
        %v2147 = vadd.f32 0.0, %v2146
        %v2148 = vpop.f32.mrb[0].mxu0
        %v2149 = vadd.f32 0.0, %v2148
        %2150 = vdwg.mxu0
        %2151 = vmatprep.subr.mxu0 %v1406
        %2152 = vmatpush1.msra.mxu0 %v502
        %2153 = vmatprep.subr.mxu0 %v1407
        %2154 = vmatpush1.msra.mxu0 %v503
        %2155 = vmatprep.subr.mxu0 %v1433
        %2156 = vmatpush1.msra.mxu0 %v1432
        %2157 = vmatprep.subr.mxu0 %v1435
        %2158 = vmatpush1.msra.mxu0 %v1434
        %2159 = vmatprep.subr.mxu0 %v1470
        %2160 = vmatpush1.msra.mxu0 %v1469
        %2161 = vmatprep.subr.mxu0 %v1472
        %2162 = vmatpush1.msra.mxu0 %v1471
        %2163 = vmatprep.subr.mxu0 %v1507
        %2164 = vmatpush1.msra.mxu0 %v1506
        %2165 = vmatprep.subr.mxu0 %v1509
        %2166 = vmatpush1.msra.mxu0 %v1508
        %2167 = vmatprep.subr.mxu0 0.0
        %2168 = vmatpush1.msra.mxu0 0.0
        %2169 = vmatprep.subr.mxu0 0.0
        %2170 = vmatpush1.msra.mxu0 0.0
        %2171 = vmatprep.subr.mxu0 0.0
        %2172 = vmatpush1.msra.mxu0 0.0
        %2173 = vmatprep.subr.mxu0 0.0
        %2174 = vmatpush1.msra.mxu0 0.0
        %2175 = vmatprep.subr.mxu0 0.0
        %2176 = vmatpush1.msra.mxu0 0.0
        %2177 = vmatprep.subr.mxu0 0.0
        %2178 = vmatpush1.msra.mxu0 0.0
        %2179 = vmatprep.subr.mxu0 0.0
        %2180 = vmatpush1.msra.mxu0 0.0
        %2181 = vmatprep.subr.mxu0 0.0
        %2182 = vmatpush1.msra.mxu0 0.0
        %2183 = vmatprep.subr.mxu0 0.0
        %2184 = vmatpush1.msra.mxu0 0.0
        %2185 = vmatprep.subr.mxu0 0.0
        %2186 = vmatpush1.msra.mxu0 0.0
        %2187 = vmatprep.subr.mxu0 0.0
        %2188 = vmatpush1.msra.mxu0 0.0
        %2189 = vmatprep.subr.mxu0 0.0
        %2190 = vmatpush1.msra.mxu0 0.0
        %2191 = vmatprep.subr.mxu0 0.0
        %2192 = vmatpush1.msra.mxu0 0.0
        %2193 = vmatprep.subr.mxu0 0.0
        %2194 = vmatpush1.msra.mxu0 0.0
        %2195 = vmatprep.subr.mxu0 0.0
        %2196 = vmatpush1.msra.mxu0 0.0
        %2197 = vmatprep.subr.mxu0 0.0
        %2198 = vmatpush1.msra.mxu0 0.0
        %2199 = vmatprep.subr.mxu0 0.0
        %2200 = vmatpush1.msra.mxu0 0.0
        %2201 = vmatprep.subr.mxu0 0.0
        %2202 = vmatpush1.msra.mxu0 0.0
        %2203 = vmatprep.subr.mxu0 0.0
        %2204 = vmatpush1.msra.mxu0 0.0
        %2205 = vmatprep.subr.mxu0 0.0
        %2206 = vmatpush1.msra.mxu0 0.0
        %2207 = vmatprep.subr.mxu0 0.0
        %2208 = vmatpush1.msra.mxu0 0.0
        %2209 = vmatprep.subr.mxu0 0.0
        %2210 = vmatpush1.msra.mxu0 0.0
        %2211 = vmatprep.subr.mxu0 0.0
        %2212 = vmatpush1.msra.mxu0 0.0
        %2213 = vmatprep.subr.mxu0 0.0
        %2214 = vmatpush1.msra.mxu0 0.0
        %2215 = vmatprep.mubr.f32.mxu0 0.0
        %2216 = vmatmul.mubr.f32.gmra.mrb[0].mxu0 %v1531
        %v2217 = vpop.f32.mrb[0].mxu0
        %v2218 = vadd.f32 0.0, %v2217
        %v2219 = vpop.f32.mrb[0].mxu0
        %v2220 = vadd.f32 0.0, %v2219
        %2221 = vmatprep.mubr.f32.mxu0 0.0
        %2222 = vmatmul.mubr.f32.gmra.mrb[0].mxu0 %v1534
        %v2223 = vpop.f32.mrb[0].mxu0
        %v2224 = vadd.f32 0.0, %v2223
        %v2225 = vpop.f32.mrb[0].mxu0
        %v2226 = vadd.f32 0.0, %v2225
        %2227 = vdwg.mxu0
        %2228 = vmatprep.subr.mxu0 %v1407
        %2229 = vmatpush1.msra.mxu0 %v503
        %2230 = vmatprep.subr.mxu0 %v1408
        %2231 = vmatpush1.msra.mxu0 %v504
        %2232 = vmatprep.subr.mxu0 %v1435
        %2233 = vmatpush1.msra.mxu0 %v1434
        %2234 = vmatprep.subr.mxu0 %v1437
        %2235 = vmatpush1.msra.mxu0 %v1436
        %2236 = vmatprep.subr.mxu0 %v1472
        %2237 = vmatpush1.msra.mxu0 %v1471
        %2238 = vmatprep.subr.mxu0 %v1474
        %2239 = vmatpush1.msra.mxu0 %v1473
        %2240 = vmatprep.subr.mxu0 %v1509
        %2241 = vmatpush1.msra.mxu0 %v1508
        %2242 = vmatprep.subr.mxu0 %v1511
        %2243 = vmatpush1.msra.mxu0 %v1510
        %2244 = vmatprep.subr.mxu0 0.0
        %2245 = vmatpush1.msra.mxu0 0.0
        %2246 = vmatprep.subr.mxu0 0.0
        %2247 = vmatpush1.msra.mxu0 0.0
        %2248 = vmatprep.subr.mxu0 0.0
        %2249 = vmatpush1.msra.mxu0 0.0
        %2250 = vmatprep.subr.mxu0 0.0
        %2251 = vmatpush1.msra.mxu0 0.0
        %2252 = vmatprep.subr.mxu0 0.0
        %2253 = vmatpush1.msra.mxu0 0.0
        %2254 = vmatprep.subr.mxu0 0.0
        %2255 = vmatpush1.msra.mxu0 0.0
        %2256 = vmatprep.subr.mxu0 0.0
        %2257 = vmatpush1.msra.mxu0 0.0
        %2258 = vmatprep.subr.mxu0 0.0
        %2259 = vmatpush1.msra.mxu0 0.0
        %2260 = vmatprep.subr.mxu0 0.0
        %2261 = vmatpush1.msra.mxu0 0.0
        %2262 = vmatprep.subr.mxu0 0.0
        %2263 = vmatpush1.msra.mxu0 0.0
        %2264 = vmatprep.subr.mxu0 0.0
        %2265 = vmatpush1.msra.mxu0 0.0
        %2266 = vmatprep.subr.mxu0 0.0
        %2267 = vmatpush1.msra.mxu0 0.0
        %2268 = vmatprep.subr.mxu0 0.0
        %2269 = vmatpush1.msra.mxu0 0.0
        %2270 = vmatprep.subr.mxu0 0.0
        %2271 = vmatpush1.msra.mxu0 0.0
        %2272 = vmatprep.subr.mxu0 0.0
        %2273 = vmatpush1.msra.mxu0 0.0
        %2274 = vmatprep.subr.mxu0 0.0
        %2275 = vmatpush1.msra.mxu0 0.0
        %2276 = vmatprep.subr.mxu0 0.0
        %2277 = vmatpush1.msra.mxu0 0.0
        %2278 = vmatprep.subr.mxu0 0.0
        %2279 = vmatpush1.msra.mxu0 0.0
        %2280 = vmatprep.subr.mxu0 0.0
        %2281 = vmatpush1.msra.mxu0 0.0
        %2282 = vmatprep.subr.mxu0 0.0
        %2283 = vmatpush1.msra.mxu0 0.0
        %2284 = vmatprep.subr.mxu0 0.0
        %2285 = vmatpush1.msra.mxu0 0.0
        %2286 = vmatprep.subr.mxu0 0.0
        %2287 = vmatpush1.msra.mxu0 0.0
        %2288 = vmatprep.subr.mxu0 0.0
        %2289 = vmatpush1.msra.mxu0 0.0
        %2290 = vmatprep.subr.mxu0 0.0
        %2291 = vmatpush1.msra.mxu0 0.0
        %2292 = vmatprep.mubr.f32.mxu0 0.0
        %2293 = vmatmul.mubr.f32.gmra.mrb[0].mxu0 %v1531
        %v2294 = vpop.f32.mrb[0].mxu0
        %v2295 = vadd.f32 0.0, %v2294
        %v2296 = vpop.f32.mrb[0].mxu0
        %v2297 = vadd.f32 0.0, %v2296
        %2298 = vmatprep.mubr.f32.mxu0 0.0
        %2299 = vmatmul.mubr.f32.gmra.mrb[0].mxu0 %v1534
        %v2300 = vpop.f32.mrb[0].mxu0
        %v2301 = vadd.f32 0.0, %v2300
        %v2302 = vpop.f32.mrb[0].mxu0
        %v2303 = vadd.f32 0.0, %v2302
        %2304 = vdwg.mxu0
        %2305 = vmatprep.subr.mxu0 %v1408
        %2306 = vmatpush1.msra.mxu0 %v504
        %2307 = vmatprep.subr.mxu0 %v1409
        %2308 = vmatpush1.msra.mxu0 %v505
        %2309 = vmatprep.subr.mxu0 %v1437
        %2310 = vmatpush1.msra.mxu0 %v1436
        %2311 = vmatprep.subr.mxu0 %v1439
        %2312 = vmatpush1.msra.mxu0 %v1438
        %2313 = vmatprep.subr.mxu0 %v1474
        %2314 = vmatpush1.msra.mxu0 %v1473
        %2315 = vmatprep.subr.mxu0 %v1476
        %2316 = vmatpush1.msra.mxu0 %v1475
        %2317 = vmatprep.subr.mxu0 %v1511
        %2318 = vmatpush1.msra.mxu0 %v1510
        %2319 = vmatprep.subr.mxu0 %v1513
        %2320 = vmatpush1.msra.mxu0 %v1512
        %2321 = vmatprep.subr.mxu0 0.0
        %2322 = vmatpush1.msra.mxu0 0.0
        %2323 = vmatprep.subr.mxu0 0.0
        %2324 = vmatpush1.msra.mxu0 0.0
        %2325 = vmatprep.subr.mxu0 0.0
        %2326 = vmatpush1.msra.mxu0 0.0
        %2327 = vmatprep.subr.mxu0 0.0
        %2328 = vmatpush1.msra.mxu0 0.0
        %2329 = vmatprep.subr.mxu0 0.0
        %2330 = vmatpush1.msra.mxu0 0.0
        %2331 = vmatprep.subr.mxu0 0.0
        %2332 = vmatpush1.msra.mxu0 0.0
        %2333 = vmatprep.subr.mxu0 0.0
        %2334 = vmatpush1.msra.mxu0 0.0
        %2335 = vmatprep.subr.mxu0 0.0
        %2336 = vmatpush1.msra.mxu0 0.0
        %2337 = vmatprep.subr.mxu0 0.0
        %2338 = vmatpush1.msra.mxu0 0.0
        %2339 = vmatprep.subr.mxu0 0.0
        %2340 = vmatpush1.msra.mxu0 0.0
        %2341 = vmatprep.subr.mxu0 0.0
        %2342 = vmatpush1.msra.mxu0 0.0
        %2343 = vmatprep.subr.mxu0 0.0
        %2344 = vmatpush1.msra.mxu0 0.0
        %2345 = vmatprep.subr.mxu0 0.0
        %2346 = vmatpush1.msra.mxu0 0.0
        %2347 = vmatprep.subr.mxu0 0.0
        %2348 = vmatpush1.msra.mxu0 0.0
        %2349 = vmatprep.subr.mxu0 0.0
        %2350 = vmatpush1.msra.mxu0 0.0
        %2351 = vmatprep.subr.mxu0 0.0
        %2352 = vmatpush1.msra.mxu0 0.0
        %2353 = vmatprep.subr.mxu0 0.0
        %2354 = vmatpush1.msra.mxu0 0.0
        %2355 = vmatprep.subr.mxu0 0.0
        %2356 = vmatpush1.msra.mxu0 0.0
        %2357 = vmatprep.subr.mxu0 0.0
        %2358 = vmatpush1.msra.mxu0 0.0
        %2359 = vmatprep.subr.mxu0 0.0
        %2360 = vmatpush1.msra.mxu0 0.0
        %2361 = vmatprep.subr.mxu0 0.0
        %2362 = vmatpush1.msra.mxu0 0.0
        %2363 = vmatprep.subr.mxu0 0.0
        %2364 = vmatpush1.msra.mxu0 0.0
        %2365 = vmatprep.subr.mxu0 0.0
        %2366 = vmatpush1.msra.mxu0 0.0
        %2367 = vmatprep.subr.mxu0 0.0
        %2368 = vmatpush1.msra.mxu0 0.0
        %2369 = vmatprep.mubr.f32.mxu0 0.0
        %2370 = vmatmul.mubr.f32.gmra.mrb[0].mxu0 %v1531
        %v2371 = vpop.f32.mrb[0].mxu0
        %v2372 = vadd.f32 0.0, %v2371
        %v2373 = vpop.f32.mrb[0].mxu0
        %v2374 = vadd.f32 0.0, %v2373
        %2375 = vmatprep.mubr.f32.mxu0 0.0
        %2376 = vmatmul.mubr.f32.gmra.mrb[0].mxu0 %v1534
        %v2377 = vpop.f32.mrb[0].mxu0
        %v2378 = vadd.f32 0.0, %v2377
        %v2379 = vpop.f32.mrb[0].mxu0
        %v2380 = vadd.f32 0.0, %v2379
        %2381 = vdwg.mxu0
        %2382 = vmatprep.subr.mxu0 %v1409
        %2383 = vmatpush1.msra.mxu0 %v505
        %2384 = vmatprep.subr.mxu0 %v1410
        %2385 = vmatpush1.msra.mxu0 %v506
        %2386 = vmatprep.subr.mxu0 %v1439
        %2387 = vmatpush1.msra.mxu0 %v1438
        %2388 = vmatprep.subr.mxu0 %v1441
        %2389 = vmatpush1.msra.mxu0 %v1440
        %2390 = vmatprep.subr.mxu0 %v1476
        %2391 = vmatpush1.msra.mxu0 %v1475
        %2392 = vmatprep.subr.mxu0 %v1478
        %2393 = vmatpush1.msra.mxu0 %v1477
        %2394 = vmatprep.subr.mxu0 %v1513
        %2395 = vmatpush1.msra.mxu0 %v1512
        %2396 = vmatprep.subr.mxu0 %v1515
        %2397 = vmatpush1.msra.mxu0 %v1514
        %2398 = vmatprep.subr.mxu0 0.0
        %2399 = vmatpush1.msra.mxu0 0.0
        %2400 = vmatprep.subr.mxu0 0.0
        %2401 = vmatpush1.msra.mxu0 0.0
        %2402 = vmatprep.subr.mxu0 0.0
        %2403 = vmatpush1.msra.mxu0 0.0
        %2404 = vmatprep.subr.mxu0 0.0
        %2405 = vmatpush1.msra.mxu0 0.0
        %2406 = vmatprep.subr.mxu0 0.0
        %2407 = vmatpush1.msra.mxu0 0.0
        %2408 = vmatprep.subr.mxu0 0.0
        %2409 = vmatpush1.msra.mxu0 0.0
        %2410 = vmatprep.subr.mxu0 0.0
        %2411 = vmatpush1.msra.mxu0 0.0
        %2412 = vmatprep.subr.mxu0 0.0
        %2413 = vmatpush1.msra.mxu0 0.0
        %2414 = vmatprep.subr.mxu0 0.0
        %2415 = vmatpush1.msra.mxu0 0.0
        %2416 = vmatprep.subr.mxu0 0.0
        %2417 = vmatpush1.msra.mxu0 0.0
        %2418 = vmatprep.subr.mxu0 0.0
        %2419 = vmatpush1.msra.mxu0 0.0
        %2420 = vmatprep.subr.mxu0 0.0
        %2421 = vmatpush1.msra.mxu0 0.0
        %2422 = vmatprep.subr.mxu0 0.0
        %2423 = vmatpush1.msra.mxu0 0.0
        %2424 = vmatprep.subr.mxu0 0.0
        %2425 = vmatpush1.msra.mxu0 0.0
        %2426 = vmatprep.subr.mxu0 0.0
        %2427 = vmatpush1.msra.mxu0 0.0
        %2428 = vmatprep.subr.mxu0 0.0
        %2429 = vmatpush1.msra.mxu0 0.0
        %2430 = vmatprep.subr.mxu0 0.0
        %2431 = vmatpush1.msra.mxu0 0.0
        %2432 = vmatprep.subr.mxu0 0.0
        %2433 = vmatpush1.msra.mxu0 0.0
        %2434 = vmatprep.subr.mxu0 0.0
        %2435 = vmatpush1.msra.mxu0 0.0
        %2436 = vmatprep.subr.mxu0 0.0
        %2437 = vmatpush1.msra.mxu0 0.0
        %2438 = vmatprep.subr.mxu0 0.0
        %2439 = vmatpush1.msra.mxu0 0.0
        %2440 = vmatprep.subr.mxu0 0.0
        %2441 = vmatpush1.msra.mxu0 0.0
        %2442 = vmatprep.subr.mxu0 0.0
        %2443 = vmatpush1.msra.mxu0 0.0
        %2444 = vmatprep.subr.mxu0 0.0
        %2445 = vmatpush1.msra.mxu0 0.0
        %2446 = vmatprep.mubr.f32.mxu0 0.0
        %2447 = vmatmul.mubr.f32.gmra.mrb[0].mxu0 %v1531
        %v2448 = vpop.f32.mrb[0].mxu0
        %v2449 = vadd.f32 0.0, %v2448
        %v2450 = vpop.f32.mrb[0].mxu0
        %v2451 = vadd.f32 0.0, %v2450
        %2452 = vmatprep.mubr.f32.mxu0 0.0
        %2453 = vmatmul.mubr.f32.gmra.mrb[0].mxu0 %v1534
        %v2454 = vpop.f32.mrb[0].mxu0
        %v2455 = vadd.f32 0.0, %v2454
        %v2456 = vpop.f32.mrb[0].mxu0
        %v2457 = vadd.f32 0.0, %v2456
        %2458 = vdwg.mxu0
        %2459 = vmatprep.subr.mxu0 %v1410
        %2460 = vmatpush1.msra.mxu0 %v506
        %2461 = vmatprep.subr.mxu0 %v1411
        %2462 = vmatpush1.msra.mxu0 %v507
        %2463 = vmatprep.subr.mxu0 %v1441
        %2464 = vmatpush1.msra.mxu0 %v1440
        %2465 = vmatprep.subr.mxu0 %v1443
        %2466 = vmatpush1.msra.mxu0 %v1442
        %2467 = vmatprep.subr.mxu0 %v1478
        %2468 = vmatpush1.msra.mxu0 %v1477
        %2469 = vmatprep.subr.mxu0 %v1480
        %2470 = vmatpush1.msra.mxu0 %v1479
        %2471 = vmatprep.subr.mxu0 %v1515
        %2472 = vmatpush1.msra.mxu0 %v1514
        %2473 = vmatprep.subr.mxu0 %v1517
        %2474 = vmatpush1.msra.mxu0 %v1516
        %2475 = vmatprep.subr.mxu0 0.0
        %2476 = vmatpush1.msra.mxu0 0.0
        %2477 = vmatprep.subr.mxu0 0.0
        %2478 = vmatpush1.msra.mxu0 0.0
        %2479 = vmatprep.subr.mxu0 0.0
        %2480 = vmatpush1.msra.mxu0 0.0
        %2481 = vmatprep.subr.mxu0 0.0
        %2482 = vmatpush1.msra.mxu0 0.0
        %2483 = vmatprep.subr.mxu0 0.0
        %2484 = vmatpush1.msra.mxu0 0.0
        %2485 = vmatprep.subr.mxu0 0.0
        %2486 = vmatpush1.msra.mxu0 0.0
        %2487 = vmatprep.subr.mxu0 0.0
        %2488 = vmatpush1.msra.mxu0 0.0
        %2489 = vmatprep.subr.mxu0 0.0
        %2490 = vmatpush1.msra.mxu0 0.0
        %2491 = vmatprep.subr.mxu0 0.0
        %2492 = vmatpush1.msra.mxu0 0.0
        %2493 = vmatprep.subr.mxu0 0.0
        %2494 = vmatpush1.msra.mxu0 0.0
        %2495 = vmatprep.subr.mxu0 0.0
        %2496 = vmatpush1.msra.mxu0 0.0
        %2497 = vmatprep.subr.mxu0 0.0
        %2498 = vmatpush1.msra.mxu0 0.0
        %2499 = vmatprep.subr.mxu0 0.0
        %2500 = vmatpush1.msra.mxu0 0.0
        %2501 = vmatprep.subr.mxu0 0.0
        %2502 = vmatpush1.msra.mxu0 0.0
        %2503 = vmatprep.subr.mxu0 0.0
        %2504 = vmatpush1.msra.mxu0 0.0
        %2505 = vmatprep.subr.mxu0 0.0
        %2506 = vmatpush1.msra.mxu0 0.0
        %2507 = vmatprep.subr.mxu0 0.0
        %2508 = vmatpush1.msra.mxu0 0.0
        %2509 = vmatprep.subr.mxu0 0.0
        %2510 = vmatpush1.msra.mxu0 0.0
        %2511 = vmatprep.subr.mxu0 0.0
        %2512 = vmatpush1.msra.mxu0 0.0
        %2513 = vmatprep.subr.mxu0 0.0
        %2514 = vmatpush1.msra.mxu0 0.0
        %2515 = vmatprep.subr.mxu0 0.0
        %2516 = vmatpush1.msra.mxu0 0.0
        %2517 = vmatprep.subr.mxu0 0.0
        %2518 = vmatpush1.msra.mxu0 0.0
        %2519 = vmatprep.subr.mxu0 0.0
        %2520 = vmatpush1.msra.mxu0 0.0
        %2521 = vmatprep.subr.mxu0 0.0
        %2522 = vmatpush1.msra.mxu0 0.0
        %2523 = vmatprep.mubr.f32.mxu0 0.0
        %2524 = vmatmul.mubr.f32.gmra.mrb[0].mxu0 %v1531
        %v2525 = vpop.f32.mrb[0].mxu0
        %v2526 = vadd.f32 0.0, %v2525
        %v2527 = vpop.f32.mrb[0].mxu0
        %v2528 = vadd.f32 0.0, %v2527
        %2529 = vmatprep.mubr.f32.mxu0 0.0
        %2530 = vmatmul.mubr.f32.gmra.mrb[0].mxu0 %v1534
        %v2531 = vpop.f32.mrb[0].mxu0
        %v2532 = vadd.f32 0.0, %v2531
        %v2533 = vpop.f32.mrb[0].mxu0
        %v2534 = vadd.f32 0.0, %v2533
        %2535 = vdwg.mxu0
        %2536 = vmatprep.subr.mxu0 %v1411
        %2537 = vmatpush1.msra.mxu0 %v507
        %2538 = vmatprep.subr.mxu0 %v1412
        %2539 = vmatpush1.msra.mxu0 %v508
        %2540 = vmatprep.subr.mxu0 %v1443
        %2541 = vmatpush1.msra.mxu0 %v1442
        %2542 = vmatprep.subr.mxu0 %v1445
        %2543 = vmatpush1.msra.mxu0 %v1444
        %2544 = vmatprep.subr.mxu0 %v1480
        %2545 = vmatpush1.msra.mxu0 %v1479
        %2546 = vmatprep.subr.mxu0 %v1482
        %2547 = vmatpush1.msra.mxu0 %v1481
        %2548 = vmatprep.subr.mxu0 %v1517
        %2549 = vmatpush1.msra.mxu0 %v1516
        %2550 = vmatprep.subr.mxu0 %v1519
        %2551 = vmatpush1.msra.mxu0 %v1518
        %2552 = vmatprep.subr.mxu0 0.0
        %2553 = vmatpush1.msra.mxu0 0.0
        %2554 = vmatprep.subr.mxu0 0.0
        %2555 = vmatpush1.msra.mxu0 0.0
        %2556 = vmatprep.subr.mxu0 0.0
        %2557 = vmatpush1.msra.mxu0 0.0
        %2558 = vmatprep.subr.mxu0 0.0
        %2559 = vmatpush1.msra.mxu0 0.0
        %2560 = vmatprep.subr.mxu0 0.0
        %2561 = vmatpush1.msra.mxu0 0.0
        %2562 = vmatprep.subr.mxu0 0.0
        %2563 = vmatpush1.msra.mxu0 0.0
        %2564 = vmatprep.subr.mxu0 0.0
        %2565 = vmatpush1.msra.mxu0 0.0
        %2566 = vmatprep.subr.mxu0 0.0
        %2567 = vmatpush1.msra.mxu0 0.0
        %2568 = vmatprep.subr.mxu0 0.0
        %2569 = vmatpush1.msra.mxu0 0.0
        %2570 = vmatprep.subr.mxu0 0.0
        %2571 = vmatpush1.msra.mxu0 0.0
        %2572 = vmatprep.subr.mxu0 0.0
        %2573 = vmatpush1.msra.mxu0 0.0
        %2574 = vmatprep.subr.mxu0 0.0
        %2575 = vmatpush1.msra.mxu0 0.0
        %2576 = vmatprep.subr.mxu0 0.0
        %2577 = vmatpush1.msra.mxu0 0.0
        %2578 = vmatprep.subr.mxu0 0.0
        %2579 = vmatpush1.msra.mxu0 0.0
        %2580 = vmatprep.subr.mxu0 0.0
        %2581 = vmatpush1.msra.mxu0 0.0
        %2582 = vmatprep.subr.mxu0 0.0
        %2583 = vmatpush1.msra.mxu0 0.0
        %2584 = vmatprep.subr.mxu0 0.0
        %2585 = vmatpush1.msra.mxu0 0.0
        %2586 = vmatprep.subr.mxu0 0.0
        %2587 = vmatpush1.msra.mxu0 0.0
        %2588 = vmatprep.subr.mxu0 0.0
        %2589 = vmatpush1.msra.mxu0 0.0
        %2590 = vmatprep.subr.mxu0 0.0
        %2591 = vmatpush1.msra.mxu0 0.0
        %2592 = vmatprep.subr.mxu0 0.0
        %2593 = vmatpush1.msra.mxu0 0.0
        %2594 = vmatprep.subr.mxu0 0.0
        %2595 = vmatpush1.msra.mxu0 0.0
        %2596 = vmatprep.subr.mxu0 0.0
        %2597 = vmatpush1.msra.mxu0 0.0
        %2598 = vmatprep.subr.mxu0 0.0
        %2599 = vmatpush1.msra.mxu0 0.0
        %2600 = vmatprep.mubr.f32.mxu0 0.0
        %2601 = vmatmul.mubr.f32.gmra.mrb[0].mxu0 %v1531
        %v2602 = vpop.f32.mrb[0].mxu0
        %v2603 = vadd.f32 0.0, %v2602
        %v2604 = vpop.f32.mrb[0].mxu0
        %v2605 = vadd.f32 0.0, %v2604
        %2606 = vmatprep.mubr.f32.mxu0 0.0
        %2607 = vmatmul.mubr.f32.gmra.mrb[0].mxu0 %v1534
        %v2608 = vpop.f32.mrb[0].mxu0
        %v2609 = vadd.f32 0.0, %v2608
        %v2610 = vpop.f32.mrb[0].mxu0
        %v2611 = vadd.f32 0.0, %v2610
        %2612 = vdwg.mxu0
        %2613 = vmatprep.subr.mxu0 %v1412
        %2614 = vmatpush1.msra.mxu0 %v508
        %2615 = vmatprep.subr.mxu0 %v1413
        %2616 = vmatpush1.msra.mxu0 %v509
        %2617 = vmatprep.subr.mxu0 %v1445
        %2618 = vmatpush1.msra.mxu0 %v1444
        %2619 = vmatprep.subr.mxu0 %v1447
        %2620 = vmatpush1.msra.mxu0 %v1446
        %2621 = vmatprep.subr.mxu0 %v1482
        %2622 = vmatpush1.msra.mxu0 %v1481
        %2623 = vmatprep.subr.mxu0 %v1484
        %2624 = vmatpush1.msra.mxu0 %v1483
        %2625 = vmatprep.subr.mxu0 %v1519
        %2626 = vmatpush1.msra.mxu0 %v1518
        %2627 = vmatprep.subr.mxu0 %v1521
        %2628 = vmatpush1.msra.mxu0 %v1520
        %2629 = vmatprep.subr.mxu0 0.0
        %2630 = vmatpush1.msra.mxu0 0.0
        %2631 = vmatprep.subr.mxu0 0.0
        %2632 = vmatpush1.msra.mxu0 0.0
        %2633 = vmatprep.subr.mxu0 0.0
        %2634 = vmatpush1.msra.mxu0 0.0
        %2635 = vmatprep.subr.mxu0 0.0
        %2636 = vmatpush1.msra.mxu0 0.0
        %2637 = vmatprep.subr.mxu0 0.0
        %2638 = vmatpush1.msra.mxu0 0.0
        %2639 = vmatprep.subr.mxu0 0.0
        %2640 = vmatpush1.msra.mxu0 0.0
        %2641 = vmatprep.subr.mxu0 0.0
        %2642 = vmatpush1.msra.mxu0 0.0
        %2643 = vmatprep.subr.mxu0 0.0
        %2644 = vmatpush1.msra.mxu0 0.0
        %2645 = vmatprep.subr.mxu0 0.0
        %2646 = vmatpush1.msra.mxu0 0.0
        %2647 = vmatprep.subr.mxu0 0.0
        %2648 = vmatpush1.msra.mxu0 0.0
        %2649 = vmatprep.subr.mxu0 0.0
        %2650 = vmatpush1.msra.mxu0 0.0
        %2651 = vmatprep.subr.mxu0 0.0
        %2652 = vmatpush1.msra.mxu0 0.0
        %2653 = vmatprep.subr.mxu0 0.0
        %2654 = vmatpush1.msra.mxu0 0.0
        %2655 = vmatprep.subr.mxu0 0.0
        %2656 = vmatpush1.msra.mxu0 0.0
        %2657 = vmatprep.subr.mxu0 0.0
        %2658 = vmatpush1.msra.mxu0 0.0
        %2659 = vmatprep.subr.mxu0 0.0
        %2660 = vmatpush1.msra.mxu0 0.0
        %2661 = vmatprep.subr.mxu0 0.0
        %2662 = vmatpush1.msra.mxu0 0.0
        %2663 = vmatprep.subr.mxu0 0.0
        %2664 = vmatpush1.msra.mxu0 0.0
        %2665 = vmatprep.subr.mxu0 0.0
        %2666 = vmatpush1.msra.mxu0 0.0
        %2667 = vmatprep.subr.mxu0 0.0
        %2668 = vmatpush1.msra.mxu0 0.0
        %2669 = vmatprep.subr.mxu0 0.0
        %2670 = vmatpush1.msra.mxu0 0.0
        %2671 = vmatprep.subr.mxu0 0.0
        %2672 = vmatpush1.msra.mxu0 0.0
        %2673 = vmatprep.subr.mxu0 0.0
        %2674 = vmatpush1.msra.mxu0 0.0
        %2675 = vmatprep.subr.mxu0 0.0
        %2676 = vmatpush1.msra.mxu0 0.0
        %2677 = vmatprep.mubr.f32.mxu0 0.0
        %2678 = vmatmul.mubr.f32.gmra.mrb[0].mxu0 %v1531
        %v2679 = vpop.f32.mrb[0].mxu0
        %v2680 = vadd.f32 0.0, %v2679
        %v2681 = vpop.f32.mrb[0].mxu0
        %v2682 = vadd.f32 0.0, %v2681
        %2683 = vmatprep.mubr.f32.mxu0 0.0
        %2684 = vmatmul.mubr.f32.gmra.mrb[0].mxu0 %v1534
        %v2685 = vpop.f32.mrb[0].mxu0
        %v2686 = vadd.f32 0.0, %v2685
        %v2687 = vpop.f32.mrb[0].mxu0
        %v2688 = vadd.f32 0.0, %v2687
        %2689 = vdwg.mxu0
        %2690 = vmatprep.subr.mxu0 %v1413
        %2691 = vmatpush1.msra.mxu0 %v509
        %2692 = vmatprep.subr.mxu0 %v1414
        %2693 = vmatpush1.msra.mxu0 %v510
        %2694 = vmatprep.subr.mxu0 %v1447
        %2695 = vmatpush1.msra.mxu0 %v1446
        %2696 = vmatprep.subr.mxu0 %v1449
        %2697 = vmatpush1.msra.mxu0 %v1448
        %2698 = vmatprep.subr.mxu0 %v1484
        %2699 = vmatpush1.msra.mxu0 %v1483
        %2700 = vmatprep.subr.mxu0 %v1486
        %2701 = vmatpush1.msra.mxu0 %v1485
        %2702 = vmatprep.subr.mxu0 %v1521
        %2703 = vmatpush1.msra.mxu0 %v1520
        %2704 = vmatprep.subr.mxu0 %v1523
        %2705 = vmatpush1.msra.mxu0 %v1522
        %2706 = vmatprep.subr.mxu0 0.0
        %2707 = vmatpush1.msra.mxu0 0.0
        %2708 = vmatprep.subr.mxu0 0.0
        %2709 = vmatpush1.msra.mxu0 0.0
        %2710 = vmatprep.subr.mxu0 0.0
        %2711 = vmatpush1.msra.mxu0 0.0
        %2712 = vmatprep.subr.mxu0 0.0
        %2713 = vmatpush1.msra.mxu0 0.0
        %2714 = vmatprep.subr.mxu0 0.0
        %2715 = vmatpush1.msra.mxu0 0.0
        %2716 = vmatprep.subr.mxu0 0.0
        %2717 = vmatpush1.msra.mxu0 0.0
        %2718 = vmatprep.subr.mxu0 0.0
        %2719 = vmatpush1.msra.mxu0 0.0
        %2720 = vmatprep.subr.mxu0 0.0
        %2721 = vmatpush1.msra.mxu0 0.0
        %2722 = vmatprep.subr.mxu0 0.0
        %2723 = vmatpush1.msra.mxu0 0.0
        %2724 = vmatprep.subr.mxu0 0.0
        %2725 = vmatpush1.msra.mxu0 0.0
        %2726 = vmatprep.subr.mxu0 0.0
        %2727 = vmatpush1.msra.mxu0 0.0
        %2728 = vmatprep.subr.mxu0 0.0
        %2729 = vmatpush1.msra.mxu0 0.0
        %2730 = vmatprep.subr.mxu0 0.0
        %2731 = vmatpush1.msra.mxu0 0.0
        %2732 = vmatprep.subr.mxu0 0.0
        %2733 = vmatpush1.msra.mxu0 0.0
        %2734 = vmatprep.subr.mxu0 0.0
        %2735 = vmatpush1.msra.mxu0 0.0
        %2736 = vmatprep.subr.mxu0 0.0
        %2737 = vmatpush1.msra.mxu0 0.0
        %2738 = vmatprep.subr.mxu0 0.0
        %2739 = vmatpush1.msra.mxu0 0.0
        %2740 = vmatprep.subr.mxu0 0.0
        %2741 = vmatpush1.msra.mxu0 0.0
        %2742 = vmatprep.subr.mxu0 0.0
        %2743 = vmatpush1.msra.mxu0 0.0
        %2744 = vmatprep.subr.mxu0 0.0
        %2745 = vmatpush1.msra.mxu0 0.0
        %2746 = vmatprep.subr.mxu0 0.0
        %2747 = vmatpush1.msra.mxu0 0.0
        %2748 = vmatprep.subr.mxu0 0.0
        %2749 = vmatpush1.msra.mxu0 0.0
        %2750 = vmatprep.subr.mxu0 0.0
        %2751 = vmatpush1.msra.mxu0 0.0
        %2752 = vmatprep.subr.mxu0 0.0
        %2753 = vmatpush1.msra.mxu0 0.0
        %2754 = vmatprep.mubr.f32.mxu0 0.0
        %2755 = vmatmul.mubr.f32.gmra.mrb[0].mxu0 %v1531
        %v2756 = vpop.f32.mrb[0].mxu0
        %v2757 = vadd.f32 0.0, %v2756
        %v2758 = vpop.f32.mrb[0].mxu0
        %v2759 = vadd.f32 0.0, %v2758
        %2760 = vmatprep.mubr.f32.mxu0 0.0
        %2761 = vmatmul.mubr.f32.gmra.mrb[0].mxu0 %v1534
        %v2762 = vpop.f32.mrb[0].mxu0
        %v2763 = vadd.f32 0.0, %v2762
        %v2764 = vpop.f32.mrb[0].mxu0
        %v2765 = vadd.f32 0.0, %v2764
        %2766 = vdwg.mxu0
        %2767 = vmatprep.subr.mxu0 %v1414
        %2768 = vmatpush1.msra.mxu0 %v510
        %2769 = vmatprep.subr.mxu0 %v1415
        %2770 = vmatpush1.msra.mxu0 %v511
        %2771 = vmatprep.subr.mxu0 %v1449
        %2772 = vmatpush1.msra.mxu0 %v1448
        %2773 = vmatprep.subr.mxu0 %v1451
        %2774 = vmatpush1.msra.mxu0 %v1450
        %2775 = vmatprep.subr.mxu0 %v1486
        %2776 = vmatpush1.msra.mxu0 %v1485
        %2777 = vmatprep.subr.mxu0 %v1488
        %2778 = vmatpush1.msra.mxu0 %v1487
        %2779 = vmatprep.subr.mxu0 %v1523
        %2780 = vmatpush1.msra.mxu0 %v1522
        %2781 = vmatprep.subr.mxu0 %v1525
        %2782 = vmatpush1.msra.mxu0 %v1524
        %2783 = vmatprep.subr.mxu0 0.0
        %2784 = vmatpush1.msra.mxu0 0.0
        %2785 = vmatprep.subr.mxu0 0.0
        %2786 = vmatpush1.msra.mxu0 0.0
        %2787 = vmatprep.subr.mxu0 0.0
        %2788 = vmatpush1.msra.mxu0 0.0
        %2789 = vmatprep.subr.mxu0 0.0
        %2790 = vmatpush1.msra.mxu0 0.0
        %2791 = vmatprep.subr.mxu0 0.0
        %2792 = vmatpush1.msra.mxu0 0.0
        %2793 = vmatprep.subr.mxu0 0.0
        %2794 = vmatpush1.msra.mxu0 0.0
        %2795 = vmatprep.subr.mxu0 0.0
        %2796 = vmatpush1.msra.mxu0 0.0
        %2797 = vmatprep.subr.mxu0 0.0
        %2798 = vmatpush1.msra.mxu0 0.0
        %2799 = vmatprep.subr.mxu0 0.0
        %2800 = vmatpush1.msra.mxu0 0.0
        %2801 = vmatprep.subr.mxu0 0.0
        %2802 = vmatpush1.msra.mxu0 0.0
        %2803 = vmatprep.subr.mxu0 0.0
        %2804 = vmatpush1.msra.mxu0 0.0
        %2805 = vmatprep.subr.mxu0 0.0
        %2806 = vmatpush1.msra.mxu0 0.0
        %2807 = vmatprep.subr.mxu0 0.0
        %2808 = vmatpush1.msra.mxu0 0.0
        %2809 = vmatprep.subr.mxu0 0.0
        %2810 = vmatpush1.msra.mxu0 0.0
        %2811 = vmatprep.subr.mxu0 0.0
        %2812 = vmatpush1.msra.mxu0 0.0
        %2813 = vmatprep.subr.mxu0 0.0
        %2814 = vmatpush1.msra.mxu0 0.0
        %2815 = vmatprep.subr.mxu0 0.0
        %2816 = vmatpush1.msra.mxu0 0.0
        %2817 = vmatprep.subr.mxu0 0.0
        %2818 = vmatpush1.msra.mxu0 0.0
        %2819 = vmatprep.subr.mxu0 0.0
        %2820 = vmatpush1.msra.mxu0 0.0
        %2821 = vmatprep.subr.mxu0 0.0
        %2822 = vmatpush1.msra.mxu0 0.0
        %2823 = vmatprep.subr.mxu0 0.0
        %2824 = vmatpush1.msra.mxu0 0.0
        %2825 = vmatprep.subr.mxu0 0.0
        %2826 = vmatpush1.msra.mxu0 0.0
        %2827 = vmatprep.subr.mxu0 0.0
        %2828 = vmatpush1.msra.mxu0 0.0
        %2829 = vmatprep.subr.mxu0 0.0
        %2830 = vmatpush1.msra.mxu0 0.0
        %2831 = vmatprep.mubr.f32.mxu0 0.0
        %2832 = vmatmul.mubr.f32.gmra.mrb[0].mxu0 %v1531
        %v2833 = vpop.f32.mrb[0].mxu0
        %v2834 = vadd.f32 0.0, %v2833
        %v2835 = vpop.f32.mrb[0].mxu0
        %v2836 = vadd.f32 0.0, %v2835
        %2837 = vmatprep.mubr.f32.mxu0 0.0
        %2838 = vmatmul.mubr.f32.gmra.mrb[0].mxu0 %v1534
        %v2839 = vpop.f32.mrb[0].mxu0
        %v2840 = vadd.f32 0.0, %v2839
        %v2841 = vpop.f32.mrb[0].mxu0
        %v2842 = vadd.f32 0.0, %v2841
        %2843 = vdwg.mxu0
        %2844 = vmatprep.subr.mxu0 0.0
        %2845 = vmatpush1.msra.mxu0 %v511
        %2846 = vmatprep.subr.mxu0 0.0
        %2847 = vmatpush1.msra.mxu0 %v512
        %2848 = vmatprep.subr.mxu0 0.0
        %2849 = vmatpush1.msra.mxu0 %v1450
        %2850 = vmatprep.subr.mxu0 0.0
        %2851 = vmatpush1.msra.mxu0 %v1452
        %2852 = vmatprep.subr.mxu0 0.0
        %2853 = vmatpush1.msra.mxu0 %v1487
        %2854 = vmatprep.subr.mxu0 0.0
        %2855 = vmatpush1.msra.mxu0 %v1489
        %2856 = vmatprep.subr.mxu0 0.0
        %2857 = vmatpush1.msra.mxu0 %v1524
        %2858 = vmatprep.subr.mxu0 0.0
        %2859 = vmatpush1.msra.mxu0 %v1526
        %2860 = vmatprep.subr.mxu0 0.0
        %2861 = vmatpush1.msra.mxu0 0.0
        %2862 = vmatprep.subr.mxu0 0.0
        %2863 = vmatpush1.msra.mxu0 0.0
        %2864 = vmatprep.subr.mxu0 0.0
        %2865 = vmatpush1.msra.mxu0 0.0
        %2866 = vmatprep.subr.mxu0 0.0
        %2867 = vmatpush1.msra.mxu0 0.0
        %2868 = vmatprep.subr.mxu0 0.0
        %2869 = vmatpush1.msra.mxu0 0.0
        %2870 = vmatprep.subr.mxu0 0.0
        %2871 = vmatpush1.msra.mxu0 0.0
        %2872 = vmatprep.subr.mxu0 0.0
        %2873 = vmatpush1.msra.mxu0 0.0
        %2874 = vmatprep.subr.mxu0 0.0
        %2875 = vmatpush1.msra.mxu0 0.0
        %2876 = vmatprep.subr.mxu0 0.0
        %2877 = vmatpush1.msra.mxu0 0.0
        %2878 = vmatprep.subr.mxu0 0.0
        %2879 = vmatpush1.msra.mxu0 0.0
        %2880 = vmatprep.subr.mxu0 0.0
        %2881 = vmatpush1.msra.mxu0 0.0
        %2882 = vmatprep.subr.mxu0 0.0
        %2883 = vmatpush1.msra.mxu0 0.0
        %2884 = vmatprep.subr.mxu0 0.0
        %2885 = vmatpush1.msra.mxu0 0.0
        %2886 = vmatprep.subr.mxu0 0.0
        %2887 = vmatpush1.msra.mxu0 0.0
        %2888 = vmatprep.subr.mxu0 0.0
        %2889 = vmatpush1.msra.mxu0 0.0
        %2890 = vmatprep.subr.mxu0 0.0
        %2891 = vmatpush1.msra.mxu0 0.0
        %2892 = vmatprep.subr.mxu0 0.0
        %2893 = vmatpush1.msra.mxu0 0.0
        %2894 = vmatprep.subr.mxu0 0.0
        %2895 = vmatpush1.msra.mxu0 0.0
        %2896 = vmatprep.subr.mxu0 0.0
        %2897 = vmatpush1.msra.mxu0 0.0
        %2898 = vmatprep.subr.mxu0 0.0
        %2899 = vmatpush1.msra.mxu0 0.0
        %2900 = vmatprep.subr.mxu0 0.0
        %2901 = vmatpush1.msra.mxu0 0.0
        %2902 = vmatprep.subr.mxu0 0.0
        %2903 = vmatpush1.msra.mxu0 0.0
        %2904 = vmatprep.subr.mxu0 0.0
        %2905 = vmatpush1.msra.mxu0 0.0
        %2906 = vmatprep.subr.mxu0 0.0
        %2907 = vmatpush1.msra.mxu0 0.0
        %2908 = vmatprep.mubr.f32.mxu0 0.0
        %2909 = vmatmul.mubr.f32.gmra.mrb[0].mxu0 %v1531
        %v2910 = vpop.f32.mrb[0].mxu0
        %v2911 = vadd.f32 0.0, %v2910
        %v2912 = vpop.f32.mrb[0].mxu0
        %2913 = vmatprep.mubr.f32.mxu0 0.0
        %2914 = vmatmul.mubr.f32.gmra.mrb[0].mxu0 %v1534
        %v2915 = vpop.f32.mrb[0].mxu0
        %v2916 = vpop.f32.mrb[0].mxu0
        %2917 = vdwg.mxu0
        %v2918 = vld [vmem:[%s5] sm:$0xff]
        %2920 = vset.pattern.permute.xlu0 0
        %2921 = vperm.xlu0 %2920, %v2918
        %v2922 = vpop.permute.xlu0 %2921
        %v2924 = vadd.f32 %v1603, %v2922
        %v2925 = vadd.f32 %v1605, %v2922
        %v2926 = vadd.f32 %v1679, %v2922
        %v2927 = vadd.f32 %v1681, %v2922
        %v2928 = vadd.f32 %v1756, %v2922
        %v2929 = vadd.f32 %v1758, %v2922
        %v2930 = vadd.f32 %v1833, %v2922
        %v2931 = vadd.f32 %v1835, %v2922
        %v2932 = vadd.f32 %v1910, %v2922
        %v2933 = vadd.f32 %v1912, %v2922
        %v2934 = vadd.f32 %v1987, %v2922
        %v2935 = vadd.f32 %v1989, %v2922
        %v2936 = vadd.f32 %v2064, %v2922
        %v2937 = vadd.f32 %v2066, %v2922
        %v2938 = vadd.f32 %v2141, %v2922
        %v2939 = vadd.f32 %v2143, %v2922
        %v2940 = vadd.f32 %v2218, %v2922
        %v2941 = vadd.f32 %v2220, %v2922
        %v2942 = vadd.f32 %v2295, %v2922
        %v2943 = vadd.f32 %v2297, %v2922
        %v2944 = vadd.f32 %v2372, %v2922
        %v2945 = vadd.f32 %v2374, %v2922
        %v2946 = vadd.f32 %v2449, %v2922
        %v2947 = vadd.f32 %v2451, %v2922
        %v2948 = vadd.f32 %v2526, %v2922
        %v2949 = vadd.f32 %v2528, %v2922
        %v2950 = vadd.f32 %v2603, %v2922
        %v2951 = vadd.f32 %v2605, %v2922
        %v2952 = vadd.f32 %v2680, %v2922
        %v2953 = vadd.f32 %v2682, %v2922
        %v2954 = vadd.f32 %v2757, %v2922
        %v2955 = vadd.f32 %v2759, %v2922
        %v2956 = vadd.f32 %v2834, %v2922
        %v2957 = vadd.f32 %v2836, %v2922
        %v2958 = vadd.f32 %v2911, %v2922
        %v2959 = vmax.f32 %v2924, 0.0
        %v2960 = vmax.f32 %v2925, 0.0
        %v2961 = vmax.f32 %v2926, 0.0
        %v2962 = vmax.f32 %v2927, 0.0
        %v2963 = vmax.f32 %v2928, 0.0
        %v2964 = vmax.f32 %v2929, 0.0
        %v2965 = vmax.f32 %v2930, 0.0
        %v2966 = vmax.f32 %v2931, 0.0
        %v2967 = vmax.f32 %v2932, 0.0
        %v2968 = vmax.f32 %v2933, 0.0
        %v2969 = vmax.f32 %v2934, 0.0
        %v2970 = vmax.f32 %v2935, 0.0
        %v2971 = vmax.f32 %v2936, 0.0
        %v2972 = vmax.f32 %v2937, 0.0
        %v2973 = vmax.f32 %v2938, 0.0
        %v2974 = vmax.f32 %v2939, 0.0
        %v2975 = vmax.f32 %v2940, 0.0
        %v2976 = vmax.f32 %v2941, 0.0
        %v2977 = vmax.f32 %v2942, 0.0
        %v2978 = vmax.f32 %v2943, 0.0
        %v2979 = vmax.f32 %v2944, 0.0
        %v2980 = vmax.f32 %v2945, 0.0
        %v2981 = vmax.f32 %v2946, 0.0
        %v2982 = vmax.f32 %v2947, 0.0
        %v2983 = vmax.f32 %v2948, 0.0
        %v2984 = vmax.f32 %v2949, 0.0
        %v2985 = vmax.f32 %v2950, 0.0
        %v2986 = vmax.f32 %v2951, 0.0
        %v2987 = vmax.f32 %v2952, 0.0
        %v2988 = vmax.f32 %v2953, 0.0
        %v2989 = vmax.f32 %v2954, 0.0
        %v2990 = vmax.f32 %v2955, 0.0
        %v2991 = vmax.f32 %v2956, 0.0
        %v2992 = vmax.f32 %v2957, 0.0
        %v2993 = vmax.f32 %v2958, 0.0
        %v2994 = vld [vmem:[%s293] sm:$0xff]
        %2996 = vset.pattern.permute.xlu0 0
        %2997 = vperm.xlu0 %2996, %v2994
        %v2998 = vpop.permute.xlu0 %2997
        %v3000 = vadd.f32 %v2959, %v2998
        %v3001 = vadd.f32 %v2960, %v2998
        %v3002 = vadd.f32 %v2961, %v2998
        %v3003 = vadd.f32 %v2962, %v2998
        %v3004 = vadd.f32 %v2963, %v2998
        %v3005 = vadd.f32 %v2964, %v2998
        %v3006 = vadd.f32 %v2965, %v2998
        %v3007 = vadd.f32 %v2966, %v2998
        %v3008 = vadd.f32 %v2967, %v2998
        %v3009 = vadd.f32 %v2968, %v2998
        %v3010 = vadd.f32 %v2969, %v2998
        %v3011 = vadd.f32 %v2970, %v2998
        %v3012 = vadd.f32 %v2971, %v2998
        %v3013 = vadd.f32 %v2972, %v2998
        %v3014 = vadd.f32 %v2973, %v2998
        %v3015 = vadd.f32 %v2974, %v2998
        %v3016 = vadd.f32 %v2975, %v2998
        %v3017 = vadd.f32 %v2976, %v2998
        %v3018 = vadd.f32 %v2977, %v2998
        %v3019 = vadd.f32 %v2978, %v2998
        %v3020 = vadd.f32 %v2979, %v2998
        %v3021 = vadd.f32 %v2980, %v2998
        %v3022 = vadd.f32 %v2981, %v2998
        %v3023 = vadd.f32 %v2982, %v2998
        %v3024 = vadd.f32 %v2983, %v2998
        %v3025 = vadd.f32 %v2984, %v2998
        %v3026 = vadd.f32 %v2985, %v2998
        %v3027 = vadd.f32 %v2986, %v2998
        %v3028 = vadd.f32 %v2987, %v2998
        %v3029 = vadd.f32 %v2988, %v2998
        %v3030 = vadd.f32 %v2989, %v2998
        %v3031 = vadd.f32 %v2990, %v2998
        %v3032 = vadd.f32 %v2991, %v2998
        %v3033 = vadd.f32 %v2992, %v2998
        %v3034 = vadd.f32 %v2993, %v2998
        %v3035 = vld [vmem:[%s6] sm:$0xff]
        %v3036 = vld [vmem:[%s6 + $0x8] sm:$0xff]
        %v3037 = vld [vmem:[%s6 + $0x10] sm:$0xff]
        %v3038 = vld [vmem:[%s6 + $0x18] sm:$0xff]
        %v3039 = vld [vmem:[%s6 + $0x20] sm:$0x7]
        %v3045 = vlaneseq
        %v3046 = vshrl.u32 %v3045, 7
        %v3047 = vsub.s32 0, %v3046
        %v3048 = vrot.slane %v3035, %v3047
        %v3049 = vlaneseq
        %v3050 = vshrl.u32 %v3049, 7
        %v3051 = vsub.s32 1, %v3050
        %v3052 = vrot.slane %v3035, %v3051
        %v3053 = vlaneseq
        %v3054 = vshrl.u32 %v3053, 7
        %v3055 = vsub.s32 2, %v3054
        %v3056 = vrot.slane %v3035, %v3055
        %v3057 = vlaneseq
        %v3058 = vshrl.u32 %v3057, 7
        %v3059 = vsub.s32 3, %v3058
        %v3060 = vrot.slane %v3035, %v3059
        %v3061 = vlaneseq
        %v3062 = vshrl.u32 %v3061, 7
        %v3063 = vsub.s32 4, %v3062
        %v3064 = vrot.slane %v3035, %v3063
        %v3065 = vlaneseq
        %v3066 = vshrl.u32 %v3065, 7
        %v3067 = vsub.s32 5, %v3066
        %v3068 = vrot.slane %v3035, %v3067
        %v3069 = vlaneseq
        %v3070 = vshrl.u32 %v3069, 7
        %v3071 = vsub.s32 6, %v3070
        %v3072 = vrot.slane %v3035, %v3071
        %v3073 = vlaneseq
        %v3074 = vshrl.u32 %v3073, 7
        %v3075 = vsub.s32 7, %v3074
        %v3076 = vrot.slane %v3035, %v3075
        %v3077 = vlaneseq
        %v3078 = vshrl.u32 %v3077, 7
        %v3079 = vsub.s32 0, %v3078
        %v3080 = vrot.slane %v3036, %v3079
        %v3081 = vlaneseq
        %v3082 = vshrl.u32 %v3081, 7
        %v3083 = vsub.s32 1, %v3082
        %v3084 = vrot.slane %v3036, %v3083
        %v3085 = vlaneseq
        %v3086 = vshrl.u32 %v3085, 7
        %v3087 = vsub.s32 2, %v3086
        %v3088 = vrot.slane %v3036, %v3087
        %v3089 = vlaneseq
        %v3090 = vshrl.u32 %v3089, 7
        %v3091 = vsub.s32 3, %v3090
        %v3092 = vrot.slane %v3036, %v3091
        %v3093 = vlaneseq
        %v3094 = vshrl.u32 %v3093, 7
        %v3095 = vsub.s32 4, %v3094
        %v3096 = vrot.slane %v3036, %v3095
        %v3097 = vlaneseq
        %v3098 = vshrl.u32 %v3097, 7
        %v3099 = vsub.s32 5, %v3098
        %v3100 = vrot.slane %v3036, %v3099
        %v3101 = vlaneseq
        %v3102 = vshrl.u32 %v3101, 7
        %v3103 = vsub.s32 6, %v3102
        %v3104 = vrot.slane %v3036, %v3103
        %v3105 = vlaneseq
        %v3106 = vshrl.u32 %v3105, 7
        %v3107 = vsub.s32 7, %v3106
        %v3108 = vrot.slane %v3036, %v3107
        %v3109 = vlaneseq
        %v3110 = vshrl.u32 %v3109, 7
        %v3111 = vsub.s32 0, %v3110
        %v3112 = vrot.slane %v3037, %v3111
        %v3113 = vlaneseq
        %v3114 = vshrl.u32 %v3113, 7
        %v3115 = vsub.s32 1, %v3114
        %v3116 = vrot.slane %v3037, %v3115
        %v3117 = vlaneseq
        %v3118 = vshrl.u32 %v3117, 7
        %v3119 = vsub.s32 2, %v3118
        %v3120 = vrot.slane %v3037, %v3119
        %v3121 = vlaneseq
        %v3122 = vshrl.u32 %v3121, 7
        %v3123 = vsub.s32 3, %v3122
        %v3124 = vrot.slane %v3037, %v3123
        %v3125 = vlaneseq
        %v3126 = vshrl.u32 %v3125, 7
        %v3127 = vsub.s32 4, %v3126
        %v3128 = vrot.slane %v3037, %v3127
        %v3129 = vlaneseq
        %v3130 = vshrl.u32 %v3129, 7
        %v3131 = vsub.s32 5, %v3130
        %v3132 = vrot.slane %v3037, %v3131
        %v3133 = vlaneseq
        %v3134 = vshrl.u32 %v3133, 7
        %v3135 = vsub.s32 6, %v3134
        %v3136 = vrot.slane %v3037, %v3135
        %v3137 = vlaneseq
        %v3138 = vshrl.u32 %v3137, 7
        %v3139 = vsub.s32 7, %v3138
        %v3140 = vrot.slane %v3037, %v3139
        %v3141 = vlaneseq
        %v3142 = vshrl.u32 %v3141, 7
        %v3143 = vsub.s32 0, %v3142
        %v3144 = vrot.slane %v3038, %v3143
        %v3145 = vlaneseq
        %v3146 = vshrl.u32 %v3145, 7
        %v3147 = vsub.s32 1, %v3146
        %v3148 = vrot.slane %v3038, %v3147
        %v3149 = vlaneseq
        %v3150 = vshrl.u32 %v3149, 7
        %v3151 = vsub.s32 2, %v3150
        %v3152 = vrot.slane %v3038, %v3151
        %v3153 = vlaneseq
        %v3154 = vshrl.u32 %v3153, 7
        %v3155 = vsub.s32 3, %v3154
        %v3156 = vrot.slane %v3038, %v3155
        %v3157 = vlaneseq
        %v3158 = vshrl.u32 %v3157, 7
        %v3159 = vsub.s32 4, %v3158
        %v3160 = vrot.slane %v3038, %v3159
        %v3161 = vlaneseq
        %v3162 = vshrl.u32 %v3161, 7
        %v3163 = vsub.s32 5, %v3162
        %v3164 = vrot.slane %v3038, %v3163
        %v3165 = vlaneseq
        %v3166 = vshrl.u32 %v3165, 7
        %v3167 = vsub.s32 6, %v3166
        %v3168 = vrot.slane %v3038, %v3167
        %v3169 = vlaneseq
        %v3170 = vshrl.u32 %v3169, 7
        %v3171 = vsub.s32 7, %v3170
        %v3172 = vrot.slane %v3038, %v3171
        %v3173 = vlaneseq
        %v3174 = vshrl.u32 %v3173, 7
        %v3175 = vsub.s32 0, %v3174
        %v3176 = vrot.slane %v3039, %v3175
        %v3177 = vlaneseq
        %v3178 = vshrl.u32 %v3177, 7
        %v3179 = vsub.s32 1, %v3178
        %v3180 = vrot.slane %v3039, %v3179
        %v3181 = vlaneseq
        %v3182 = vshrl.u32 %v3181, 7
        %v3183 = vsub.s32 2, %v3182
        %v3184 = vrot.slane %v3039, %v3183
        %v3220 = vmul.f32 %v3000, %v3048
        %v3221 = vmul.f32 %v3001, %v3052
        %v3222 = vmul.f32 %v3002, %v3056
        %v3223 = vmul.f32 %v3003, %v3060
        %v3224 = vmul.f32 %v3004, %v3064
        %v3225 = vmul.f32 %v3005, %v3068
        %v3226 = vmul.f32 %v3006, %v3072
        %v3227 = vmul.f32 %v3007, %v3076
        %v3228 = vmul.f32 %v3008, %v3080
        %v3229 = vmul.f32 %v3009, %v3084
        %v3230 = vmul.f32 %v3010, %v3088
        %v3231 = vmul.f32 %v3011, %v3092
        %v3232 = vmul.f32 %v3012, %v3096
        %v3233 = vmul.f32 %v3013, %v3100
        %v3234 = vmul.f32 %v3014, %v3104
        %v3235 = vmul.f32 %v3015, %v3108
        %v3236 = vmul.f32 %v3016, %v3112
        %v3237 = vmul.f32 %v3017, %v3116
        %v3238 = vmul.f32 %v3018, %v3120
        %v3239 = vmul.f32 %v3019, %v3124
        %v3240 = vmul.f32 %v3020, %v3128
        %v3241 = vmul.f32 %v3021, %v3132
        %v3242 = vmul.f32 %v3022, %v3136
        %v3243 = vmul.f32 %v3023, %v3140
        %v3244 = vmul.f32 %v3024, %v3144
        %v3245 = vmul.f32 %v3025, %v3148
        %v3246 = vmul.f32 %v3026, %v3152
        %v3247 = vmul.f32 %v3027, %v3156
        %v3248 = vmul.f32 %v3028, %v3160
        %v3249 = vmul.f32 %v3029, %v3164
        %v3250 = vmul.f32 %v3030, %v3168
        %v3251 = vmul.f32 %v3031, %v3172
        %v3252 = vmul.f32 %v3032, %v3176
        %v3253 = vmul.f32 %v3033, %v3180
        %v3254 = vmul.f32 %v3034, %v3184
        %3288 = vrot.lane.b32.xlu0 %v3220, 127
        %v3289 = vpop.permute.xlu0 %3288
        %3290 = vrot.lane.b32.xlu0 %v3221, 127
        %v3291 = vpop.permute.xlu0 %3290
        %3292 = vrot.lane.b32.xlu0 %v3222, 127
        %v3293 = vpop.permute.xlu0 %3292
        %3294 = vrot.lane.b32.xlu0 %v3223, 127
        %v3295 = vpop.permute.xlu0 %3294
        %3296 = vrot.lane.b32.xlu0 %v3224, 127
        %v3297 = vpop.permute.xlu0 %3296
        %3298 = vrot.lane.b32.xlu0 %v3225, 127
        %v3299 = vpop.permute.xlu0 %3298
        %3300 = vrot.lane.b32.xlu0 %v3226, 127
        %v3301 = vpop.permute.xlu0 %3300
        %3302 = vrot.lane.b32.xlu0 %v3227, 127
        %v3303 = vpop.permute.xlu0 %3302
        %3304 = vrot.lane.b32.xlu0 %v3228, 127
        %v3305 = vpop.permute.xlu0 %3304
        %3306 = vrot.lane.b32.xlu0 %v3229, 127
        %v3307 = vpop.permute.xlu0 %3306
        %3308 = vrot.lane.b32.xlu0 %v3230, 127
        %v3309 = vpop.permute.xlu0 %3308
        %3310 = vrot.lane.b32.xlu0 %v3231, 127
        %v3311 = vpop.permute.xlu0 %3310
        %3312 = vrot.lane.b32.xlu0 %v3232, 127
        %v3313 = vpop.permute.xlu0 %3312
        %3314 = vrot.lane.b32.xlu0 %v3233, 127
        %v3315 = vpop.permute.xlu0 %3314
        %3316 = vrot.lane.b32.xlu0 %v3234, 127
        %v3317 = vpop.permute.xlu0 %3316
        %3318 = vrot.lane.b32.xlu0 %v3235, 127
        %v3319 = vpop.permute.xlu0 %3318
        %3320 = vrot.lane.b32.xlu0 %v3236, 127
        %v3321 = vpop.permute.xlu0 %3320
        %3322 = vrot.lane.b32.xlu0 %v3237, 127
        %v3323 = vpop.permute.xlu0 %3322
        %3324 = vrot.lane.b32.xlu0 %v3238, 127
        %v3325 = vpop.permute.xlu0 %3324
        %3326 = vrot.lane.b32.xlu0 %v3239, 127
        %v3327 = vpop.permute.xlu0 %3326
        %3328 = vrot.lane.b32.xlu0 %v3240, 127
        %v3329 = vpop.permute.xlu0 %3328
        %3330 = vrot.lane.b32.xlu0 %v3241, 127
        %v3331 = vpop.permute.xlu0 %3330
        %3332 = vrot.lane.b32.xlu0 %v3242, 127
        %v3333 = vpop.permute.xlu0 %3332
        %3334 = vrot.lane.b32.xlu0 %v3243, 127
        %v3335 = vpop.permute.xlu0 %3334
        %3336 = vrot.lane.b32.xlu0 %v3244, 127
        %v3337 = vpop.permute.xlu0 %3336
        %3338 = vrot.lane.b32.xlu0 %v3245, 127
        %v3339 = vpop.permute.xlu0 %3338
        %3340 = vrot.lane.b32.xlu0 %v3246, 127
        %v3341 = vpop.permute.xlu0 %3340
        %3342 = vrot.lane.b32.xlu0 %v3247, 127
        %v3343 = vpop.permute.xlu0 %3342
        %3344 = vrot.lane.b32.xlu0 %v3248, 127
        %v3345 = vpop.permute.xlu0 %3344
        %3346 = vrot.lane.b32.xlu0 %v3249, 127
        %v3347 = vpop.permute.xlu0 %3346
        %3348 = vrot.lane.b32.xlu0 %v3250, 127
        %v3349 = vpop.permute.xlu0 %3348
        %3350 = vrot.lane.b32.xlu0 %v3251, 127
        %v3351 = vpop.permute.xlu0 %3350
        %3352 = vrot.lane.b32.xlu0 %v3252, 127
        %v3353 = vpop.permute.xlu0 %3352
        %v3354 = vsel %vm677, %v3289, %v3291
        %v3355 = vsel %vm677, %v3291, %v3293
        %v3356 = vsel %vm677, %v3293, %v3295
        %v3357 = vsel %vm677, %v3295, %v3297
        %v3358 = vsel %vm677, %v3297, %v3299
        %v3359 = vsel %vm677, %v3299, %v3301
        %v3360 = vsel %vm677, %v3301, %v3303
        %v3361 = vsel %vm677, %v3303, %v3305
        %v3362 = vsel %vm677, %v3305, %v3307
        %v3363 = vsel %vm677, %v3307, %v3309
        %v3364 = vsel %vm677, %v3309, %v3311
        %v3365 = vsel %vm677, %v3311, %v3313
        %v3366 = vsel %vm677, %v3313, %v3315
        %v3367 = vsel %vm677, %v3315, %v3317
        %v3368 = vsel %vm677, %v3317, %v3319
        %v3369 = vsel %vm677, %v3319, %v3321
        %v3370 = vsel %vm677, %v3321, %v3323
        %v3371 = vsel %vm677, %v3323, %v3325
        %v3372 = vsel %vm677, %v3325, %v3327
        %v3373 = vsel %vm677, %v3327, %v3329
        %v3374 = vsel %vm677, %v3329, %v3331
        %v3375 = vsel %vm677, %v3331, %v3333
        %v3376 = vsel %vm677, %v3333, %v3335
        %v3377 = vsel %vm677, %v3335, %v3337
        %v3378 = vsel %vm677, %v3337, %v3339
        %v3379 = vsel %vm677, %v3339, %v3341
        %v3380 = vsel %vm677, %v3341, %v3343
        %v3381 = vsel %vm677, %v3343, %v3345
        %v3382 = vsel %vm677, %v3345, %v3347
        %v3383 = vsel %vm677, %v3347, %v3349
        %v3384 = vsel %vm677, %v3349, %v3351
        %v3385 = vsel %vm677, %v3351, %v3353
        %3419 = vrot.lane.b32.xlu0 %v3253, 127
        %v3420 = vpop.permute.xlu0 %3419
        %v3421 = vsel %vm677, %v3353, %v3420
        %3424 = vrot.lane.b32.xlu0 %v3254, 127
        %v3425 = vpop.permute.xlu0 %3424
        %v3426 = vsel %vm677, %v3420, %v3425
        %3428 = vrot.lane.b32.xlu0 %v3220, 126
        %v3429 = vpop.permute.xlu0 %3428
        %3430 = vrot.lane.b32.xlu0 %v3221, 126
        %v3431 = vpop.permute.xlu0 %3430
        %3432 = vrot.lane.b32.xlu0 %v3222, 126
        %v3433 = vpop.permute.xlu0 %3432
        %3434 = vrot.lane.b32.xlu0 %v3223, 126
        %v3435 = vpop.permute.xlu0 %3434
        %3436 = vrot.lane.b32.xlu0 %v3224, 126
        %v3437 = vpop.permute.xlu0 %3436
        %3438 = vrot.lane.b32.xlu0 %v3225, 126
        %v3439 = vpop.permute.xlu0 %3438
        %3440 = vrot.lane.b32.xlu0 %v3226, 126
        %v3441 = vpop.permute.xlu0 %3440
        %3442 = vrot.lane.b32.xlu0 %v3227, 126
        %v3443 = vpop.permute.xlu0 %3442
        %3444 = vrot.lane.b32.xlu0 %v3228, 126
        %v3445 = vpop.permute.xlu0 %3444
        %3446 = vrot.lane.b32.xlu0 %v3229, 126
        %v3447 = vpop.permute.xlu0 %3446
        %3448 = vrot.lane.b32.xlu0 %v3230, 126
        %v3449 = vpop.permute.xlu0 %3448
        %3450 = vrot.lane.b32.xlu0 %v3231, 126
        %v3451 = vpop.permute.xlu0 %3450
        %3452 = vrot.lane.b32.xlu0 %v3232, 126
        %v3453 = vpop.permute.xlu0 %3452
        %3454 = vrot.lane.b32.xlu0 %v3233, 126
        %v3455 = vpop.permute.xlu0 %3454
        %3456 = vrot.lane.b32.xlu0 %v3234, 126
        %v3457 = vpop.permute.xlu0 %3456
        %3458 = vrot.lane.b32.xlu0 %v3235, 126
        %v3459 = vpop.permute.xlu0 %3458
        %3460 = vrot.lane.b32.xlu0 %v3236, 126
        %v3461 = vpop.permute.xlu0 %3460
        %3462 = vrot.lane.b32.xlu0 %v3237, 126
        %v3463 = vpop.permute.xlu0 %3462
        %3464 = vrot.lane.b32.xlu0 %v3238, 126
        %v3465 = vpop.permute.xlu0 %3464
        %3466 = vrot.lane.b32.xlu0 %v3239, 126
        %v3467 = vpop.permute.xlu0 %3466
        %3468 = vrot.lane.b32.xlu0 %v3240, 126
        %v3469 = vpop.permute.xlu0 %3468
        %3470 = vrot.lane.b32.xlu0 %v3241, 126
        %v3471 = vpop.permute.xlu0 %3470
        %3472 = vrot.lane.b32.xlu0 %v3242, 126
        %v3473 = vpop.permute.xlu0 %3472
        %3474 = vrot.lane.b32.xlu0 %v3243, 126
        %v3475 = vpop.permute.xlu0 %3474
        %3476 = vrot.lane.b32.xlu0 %v3244, 126
        %v3477 = vpop.permute.xlu0 %3476
        %3478 = vrot.lane.b32.xlu0 %v3245, 126
        %v3479 = vpop.permute.xlu0 %3478
        %3480 = vrot.lane.b32.xlu0 %v3246, 126
        %v3481 = vpop.permute.xlu0 %3480
        %3482 = vrot.lane.b32.xlu0 %v3247, 126
        %v3483 = vpop.permute.xlu0 %3482
        %3484 = vrot.lane.b32.xlu0 %v3248, 126
        %v3485 = vpop.permute.xlu0 %3484
        %3486 = vrot.lane.b32.xlu0 %v3249, 126
        %v3487 = vpop.permute.xlu0 %3486
        %3488 = vrot.lane.b32.xlu0 %v3250, 126
        %v3489 = vpop.permute.xlu0 %3488
        %3490 = vrot.lane.b32.xlu0 %v3251, 126
        %v3491 = vpop.permute.xlu0 %3490
        %3492 = vrot.lane.b32.xlu0 %v3252, 126
        %v3493 = vpop.permute.xlu0 %3492
        %v3494 = vsel %vm943, %v3429, %v3431
        %v3495 = vsel %vm943, %v3431, %v3433
        %v3496 = vsel %vm943, %v3433, %v3435
        %v3497 = vsel %vm943, %v3435, %v3437
        %v3498 = vsel %vm943, %v3437, %v3439
        %v3499 = vsel %vm943, %v3439, %v3441
        %v3500 = vsel %vm943, %v3441, %v3443
        %v3501 = vsel %vm943, %v3443, %v3445
        %v3502 = vsel %vm943, %v3445, %v3447
        %v3503 = vsel %vm943, %v3447, %v3449
        %v3504 = vsel %vm943, %v3449, %v3451
        %v3505 = vsel %vm943, %v3451, %v3453
        %v3506 = vsel %vm943, %v3453, %v3455
        %v3507 = vsel %vm943, %v3455, %v3457
        %v3508 = vsel %vm943, %v3457, %v3459
        %v3509 = vsel %vm943, %v3459, %v3461
        %v3510 = vsel %vm943, %v3461, %v3463
        %v3511 = vsel %vm943, %v3463, %v3465
        %v3512 = vsel %vm943, %v3465, %v3467
        %v3513 = vsel %vm943, %v3467, %v3469
        %v3514 = vsel %vm943, %v3469, %v3471
        %v3515 = vsel %vm943, %v3471, %v3473
        %v3516 = vsel %vm943, %v3473, %v3475
        %v3517 = vsel %vm943, %v3475, %v3477
        %v3518 = vsel %vm943, %v3477, %v3479
        %v3519 = vsel %vm943, %v3479, %v3481
        %v3520 = vsel %vm943, %v3481, %v3483
        %v3521 = vsel %vm943, %v3483, %v3485
        %v3522 = vsel %vm943, %v3485, %v3487
        %v3523 = vsel %vm943, %v3487, %v3489
        %v3524 = vsel %vm943, %v3489, %v3491
        %v3525 = vsel %vm943, %v3491, %v3493
        %3558 = vrot.lane.b32.xlu0 %v3253, 126
        %v3559 = vpop.permute.xlu0 %3558
        %v3560 = vsel %vm943, %v3493, %v3559
        %3562 = vrot.lane.b32.xlu0 %v3254, 126
        %v3563 = vpop.permute.xlu0 %3562
        %v3564 = vsel %vm943, %v3559, %v3563
        %v3566 = vld [vmem:[%s4] sm:$0xff]
        %3600 = vrot.lane.b32.xlu0 %v1610, 127
        %v3601 = vpop.permute.xlu0 %3600
        %3602 = vrot.lane.b32.xlu0 %v1685, 127
        %v3603 = vpop.permute.xlu0 %3602
        %3604 = vrot.lane.b32.xlu0 %v1687, 127
        %v3605 = vpop.permute.xlu0 %3604
        %3606 = vrot.lane.b32.xlu0 %v1762, 127
        %v3607 = vpop.permute.xlu0 %3606
        %3608 = vrot.lane.b32.xlu0 %v1764, 127
        %v3609 = vpop.permute.xlu0 %3608
        %3610 = vrot.lane.b32.xlu0 %v1839, 127
        %v3611 = vpop.permute.xlu0 %3610
        %3612 = vrot.lane.b32.xlu0 %v1841, 127
        %v3613 = vpop.permute.xlu0 %3612
        %3614 = vrot.lane.b32.xlu0 %v1916, 127
        %v3615 = vpop.permute.xlu0 %3614
        %3616 = vrot.lane.b32.xlu0 %v1918, 127
        %v3617 = vpop.permute.xlu0 %3616
        %3618 = vrot.lane.b32.xlu0 %v1993, 127
        %v3619 = vpop.permute.xlu0 %3618
        %3620 = vrot.lane.b32.xlu0 %v1995, 127
        %v3621 = vpop.permute.xlu0 %3620
        %3622 = vrot.lane.b32.xlu0 %v2070, 127
        %v3623 = vpop.permute.xlu0 %3622
        %3624 = vrot.lane.b32.xlu0 %v2072, 127
        %v3625 = vpop.permute.xlu0 %3624
        %3626 = vrot.lane.b32.xlu0 %v2147, 127
        %v3627 = vpop.permute.xlu0 %3626
        %3628 = vrot.lane.b32.xlu0 %v2149, 127
        %v3629 = vpop.permute.xlu0 %3628
        %3630 = vrot.lane.b32.xlu0 %v2224, 127
        %v3631 = vpop.permute.xlu0 %3630
        %3632 = vrot.lane.b32.xlu0 %v2226, 127
        %v3633 = vpop.permute.xlu0 %3632
        %3634 = vrot.lane.b32.xlu0 %v2301, 127
        %v3635 = vpop.permute.xlu0 %3634
        %3636 = vrot.lane.b32.xlu0 %v2303, 127
        %v3637 = vpop.permute.xlu0 %3636
        %3638 = vrot.lane.b32.xlu0 %v2378, 127
        %v3639 = vpop.permute.xlu0 %3638
        %3640 = vrot.lane.b32.xlu0 %v2380, 127
        %v3641 = vpop.permute.xlu0 %3640
        %3642 = vrot.lane.b32.xlu0 %v2455, 127
        %v3643 = vpop.permute.xlu0 %3642
        %3644 = vrot.lane.b32.xlu0 %v2457, 127
        %v3645 = vpop.permute.xlu0 %3644
        %3646 = vrot.lane.b32.xlu0 %v2532, 127
        %v3647 = vpop.permute.xlu0 %3646
        %3648 = vrot.lane.b32.xlu0 %v2534, 127
        %v3649 = vpop.permute.xlu0 %3648
        %3650 = vrot.lane.b32.xlu0 %v2609, 127
        %v3651 = vpop.permute.xlu0 %3650
        %3652 = vrot.lane.b32.xlu0 %v2611, 127
        %v3653 = vpop.permute.xlu0 %3652
        %3654 = vrot.lane.b32.xlu0 %v2686, 127
        %v3655 = vpop.permute.xlu0 %3654
        %3656 = vrot.lane.b32.xlu0 %v2688, 127
        %v3657 = vpop.permute.xlu0 %3656
        %3658 = vrot.lane.b32.xlu0 %v2763, 127
        %v3659 = vpop.permute.xlu0 %3658
        %3660 = vrot.lane.b32.xlu0 %v2765, 127
        %v3661 = vpop.permute.xlu0 %3660
        %3662 = vrot.lane.b32.xlu0 %v2840, 127
        %v3663 = vpop.permute.xlu0 %3662
        %3664 = vrot.lane.b32.xlu0 %v2842, 127
        %v3665 = vpop.permute.xlu0 %3664
        %v3666 = vsel %vm677, %v3601, %v3603
        %v3667 = vsel %vm677, %v3603, %v3605
        %v3668 = vsel %vm677, %v3605, %v3607
        %v3669 = vsel %vm677, %v3607, %v3609
        %v3670 = vsel %vm677, %v3609, %v3611
        %v3671 = vsel %vm677, %v3611, %v3613
        %v3672 = vsel %vm677, %v3613, %v3615
        %v3673 = vsel %vm677, %v3615, %v3617
        %v3674 = vsel %vm677, %v3617, %v3619
        %v3675 = vsel %vm677, %v3619, %v3621
        %v3676 = vsel %vm677, %v3621, %v3623
        %v3677 = vsel %vm677, %v3623, %v3625
        %v3678 = vsel %vm677, %v3625, %v3627
        %v3679 = vsel %vm677, %v3627, %v3629
        %v3680 = vsel %vm677, %v3629, %v3631
        %v3681 = vsel %vm677, %v3631, %v3633
        %v3682 = vsel %vm677, %v3633, %v3635
        %v3683 = vsel %vm677, %v3635, %v3637
        %v3684 = vsel %vm677, %v3637, %v3639
        %v3685 = vsel %vm677, %v3639, %v3641
        %v3686 = vsel %vm677, %v3641, %v3643
        %v3687 = vsel %vm677, %v3643, %v3645
        %v3688 = vsel %vm677, %v3645, %v3647
        %v3689 = vsel %vm677, %v3647, %v3649
        %v3690 = vsel %vm677, %v3649, %v3651
        %v3691 = vsel %vm677, %v3651, %v3653
        %v3692 = vsel %vm677, %v3653, %v3655
        %v3693 = vsel %vm677, %v3655, %v3657
        %v3694 = vsel %vm677, %v3657, %v3659
        %v3695 = vsel %vm677, %v3659, %v3661
        %v3696 = vsel %vm677, %v3661, %v3663
        %v3697 = vsel %vm677, %v3663, %v3665
        %vm3730 = vcmask 588800
        %v3732 = vsel %vm3730, %v3566, 0
        %3734 = vmatprep.subr.mxu0 %v3221
        %3735 = vmatpush1.msra.mxu0 %v3220
        %3736 = vmatprep.subr.mxu0 %v3222
        %3737 = vmatpush1.msra.mxu0 %v3221
        %3738 = vmatprep.subr.mxu0 %v3223
        %3739 = vmatpush1.msra.mxu0 %v3222
        %3740 = vmatprep.subr.mxu0 %v3355
        %3741 = vmatpush1.msra.mxu0 %v3354
        %3742 = vmatprep.subr.mxu0 %v3356
        %3743 = vmatpush1.msra.mxu0 %v3355
        %3744 = vmatprep.subr.mxu0 %v3357
        %3745 = vmatpush1.msra.mxu0 %v3356
        %3746 = vmatprep.subr.mxu0 %v3495
        %3747 = vmatpush1.msra.mxu0 %v3494
        %3748 = vmatprep.subr.mxu0 %v3496
        %3749 = vmatpush1.msra.mxu0 %v3495
        %3750 = vmatprep.subr.mxu0 %v3497
        %3751 = vmatpush1.msra.mxu0 %v3496
        %3752 = vmatprep.subr.mxu0 0.0
        %3753 = vmatpush1.msra.mxu0 0.0
        %3754 = vmatprep.subr.mxu0 0.0
        %3755 = vmatpush1.msra.mxu0 0.0
        %3756 = vmatprep.subr.mxu0 0.0
        %3757 = vmatpush1.msra.mxu0 0.0
        %3758 = vmatprep.subr.mxu0 0.0
        %3759 = vmatpush1.msra.mxu0 0.0
        %3760 = vmatprep.subr.mxu0 0.0
        %3761 = vmatpush1.msra.mxu0 0.0
        %3762 = vmatprep.subr.mxu0 0.0
        %3763 = vmatpush1.msra.mxu0 0.0
        %3764 = vmatprep.subr.mxu0 0.0
        %3765 = vmatpush1.msra.mxu0 0.0
        %3766 = vmatprep.subr.mxu0 0.0
        %3767 = vmatpush1.msra.mxu0 0.0
        %3768 = vmatprep.subr.mxu0 0.0
        %3769 = vmatpush1.msra.mxu0 0.0
        %3770 = vmatprep.subr.mxu0 0.0
        %3771 = vmatpush1.msra.mxu0 0.0
        %3772 = vmatprep.subr.mxu0 0.0
        %3773 = vmatpush1.msra.mxu0 0.0
        %3774 = vmatprep.subr.mxu0 0.0
        %3775 = vmatpush1.msra.mxu0 0.0
        %3776 = vmatprep.subr.mxu0 0.0
        %3777 = vmatpush1.msra.mxu0 0.0
        %3778 = vmatprep.subr.mxu0 0.0
        %3779 = vmatpush1.msra.mxu0 0.0
        %3780 = vmatprep.subr.mxu0 0.0
        %3781 = vmatpush1.msra.mxu0 0.0
        %3782 = vmatprep.subr.mxu0 0.0
        %3783 = vmatpush1.msra.mxu0 0.0
        %3784 = vmatprep.subr.mxu0 0.0
        %3785 = vmatpush1.msra.mxu0 0.0
        %3786 = vmatprep.subr.mxu0 0.0
        %3787 = vmatpush1.msra.mxu0 0.0
        %3788 = vmatprep.subr.mxu0 0.0
        %3789 = vmatpush1.msra.mxu0 0.0
        %3790 = vmatprep.subr.mxu0 0.0
        %3791 = vmatpush1.msra.mxu0 0.0
        %3792 = vmatprep.subr.mxu0 0.0
        %3793 = vmatpush1.msra.mxu0 0.0
        %3794 = vmatprep.subr.mxu0 0.0
        %3795 = vmatpush1.msra.mxu0 0.0
        %3796 = vmatprep.subr.mxu0 0.0
        %3797 = vmatpush1.msra.mxu0 0.0
        %3798 = vmatprep.mubr.f32.mxu0 0.0
        %3799 = vmatmul.mubr.f32.gmra.mrb[0].mxu0 %v3732
        %v3800 = vpop.f32.mrb[0].mxu0
        %v3801 = vadd.f32 %v3666, %v3800
        %v3802 = vpop.f32.mrb[0].mxu0
        %v3803 = vadd.f32 %v3667, %v3802
        %3804 = vdwg.mxu0
        %3805 = vmatprep.subr.mxu0 %v3223
        %3806 = vmatpush1.msra.mxu0 %v3222
        %3807 = vmatprep.subr.mxu0 %v3224
        %3808 = vmatpush1.msra.mxu0 %v3223
        %3809 = vmatprep.subr.mxu0 %v3225
        %3810 = vmatpush1.msra.mxu0 %v3224
        %3811 = vmatprep.subr.mxu0 %v3357
        %3812 = vmatpush1.msra.mxu0 %v3356
        %3813 = vmatprep.subr.mxu0 %v3358
        %3814 = vmatpush1.msra.mxu0 %v3357
        %3815 = vmatprep.subr.mxu0 %v3359
        %3816 = vmatpush1.msra.mxu0 %v3358
        %3817 = vmatprep.subr.mxu0 %v3497
        %3818 = vmatpush1.msra.mxu0 %v3496
        %3819 = vmatprep.subr.mxu0 %v3498
        %3820 = vmatpush1.msra.mxu0 %v3497
        %3821 = vmatprep.subr.mxu0 %v3499
        %3822 = vmatpush1.msra.mxu0 %v3498
        %3823 = vmatprep.subr.mxu0 0.0
        %3824 = vmatpush1.msra.mxu0 0.0
        %3825 = vmatprep.subr.mxu0 0.0
        %3826 = vmatpush1.msra.mxu0 0.0
        %3827 = vmatprep.subr.mxu0 0.0
        %3828 = vmatpush1.msra.mxu0 0.0
        %3829 = vmatprep.subr.mxu0 0.0
        %3830 = vmatpush1.msra.mxu0 0.0
        %3831 = vmatprep.subr.mxu0 0.0
        %3832 = vmatpush1.msra.mxu0 0.0
        %3833 = vmatprep.subr.mxu0 0.0
        %3834 = vmatpush1.msra.mxu0 0.0
        %3835 = vmatprep.subr.mxu0 0.0
        %3836 = vmatpush1.msra.mxu0 0.0
        %3837 = vmatprep.subr.mxu0 0.0
        %3838 = vmatpush1.msra.mxu0 0.0
        %3839 = vmatprep.subr.mxu0 0.0
        %3840 = vmatpush1.msra.mxu0 0.0
        %3841 = vmatprep.subr.mxu0 0.0
        %3842 = vmatpush1.msra.mxu0 0.0
        %3843 = vmatprep.subr.mxu0 0.0
        %3844 = vmatpush1.msra.mxu0 0.0
        %3845 = vmatprep.subr.mxu0 0.0
        %3846 = vmatpush1.msra.mxu0 0.0
        %3847 = vmatprep.subr.mxu0 0.0
        %3848 = vmatpush1.msra.mxu0 0.0
        %3849 = vmatprep.subr.mxu0 0.0
        %3850 = vmatpush1.msra.mxu0 0.0
        %3851 = vmatprep.subr.mxu0 0.0
        %3852 = vmatpush1.msra.mxu0 0.0
        %3853 = vmatprep.subr.mxu0 0.0
        %3854 = vmatpush1.msra.mxu0 0.0
        %3855 = vmatprep.subr.mxu0 0.0
        %3856 = vmatpush1.msra.mxu0 0.0
        %3857 = vmatprep.subr.mxu0 0.0
        %3858 = vmatpush1.msra.mxu0 0.0
        %3859 = vmatprep.subr.mxu0 0.0
        %3860 = vmatpush1.msra.mxu0 0.0
        %3861 = vmatprep.subr.mxu0 0.0
        %3862 = vmatpush1.msra.mxu0 0.0
        %3863 = vmatprep.subr.mxu0 0.0
        %3864 = vmatpush1.msra.mxu0 0.0
        %3865 = vmatprep.subr.mxu0 0.0
        %3866 = vmatpush1.msra.mxu0 0.0
        %3867 = vmatprep.subr.mxu0 0.0
        %3868 = vmatpush1.msra.mxu0 0.0
        %3869 = vmatprep.mubr.f32.mxu0 0.0
        %3870 = vmatmul.mubr.f32.gmra.mrb[0].mxu0 %v3732
        %v3871 = vpop.f32.mrb[0].mxu0
        %v3872 = vadd.f32 %v3668, %v3871
        %v3873 = vpop.f32.mrb[0].mxu0
        %v3874 = vadd.f32 %v3669, %v3873
        %3875 = vdwg.mxu0
        %3876 = vmatprep.subr.mxu0 %v3225
        %3877 = vmatpush1.msra.mxu0 %v3224
        %3878 = vmatprep.subr.mxu0 %v3226
        %3879 = vmatpush1.msra.mxu0 %v3225
        %3880 = vmatprep.subr.mxu0 %v3227
        %3881 = vmatpush1.msra.mxu0 %v3226
        %3882 = vmatprep.subr.mxu0 %v3359
        %3883 = vmatpush1.msra.mxu0 %v3358
        %3884 = vmatprep.subr.mxu0 %v3360
        %3885 = vmatpush1.msra.mxu0 %v3359
        %3886 = vmatprep.subr.mxu0 %v3361
        %3887 = vmatpush1.msra.mxu0 %v3360
        %3888 = vmatprep.subr.mxu0 %v3499
        %3889 = vmatpush1.msra.mxu0 %v3498
        %3890 = vmatprep.subr.mxu0 %v3500
        %3891 = vmatpush1.msra.mxu0 %v3499
        %3892 = vmatprep.subr.mxu0 %v3501
        %3893 = vmatpush1.msra.mxu0 %v3500
        %3894 = vmatprep.subr.mxu0 0.0
        %3895 = vmatpush1.msra.mxu0 0.0
        %3896 = vmatprep.subr.mxu0 0.0
        %3897 = vmatpush1.msra.mxu0 0.0
        %3898 = vmatprep.subr.mxu0 0.0
        %3899 = vmatpush1.msra.mxu0 0.0
        %3900 = vmatprep.subr.mxu0 0.0
        %3901 = vmatpush1.msra.mxu0 0.0
        %3902 = vmatprep.subr.mxu0 0.0
        %3903 = vmatpush1.msra.mxu0 0.0
        %3904 = vmatprep.subr.mxu0 0.0
        %3905 = vmatpush1.msra.mxu0 0.0
        %3906 = vmatprep.subr.mxu0 0.0
        %3907 = vmatpush1.msra.mxu0 0.0
        %3908 = vmatprep.subr.mxu0 0.0
        %3909 = vmatpush1.msra.mxu0 0.0
        %3910 = vmatprep.subr.mxu0 0.0
        %3911 = vmatpush1.msra.mxu0 0.0
        %3912 = vmatprep.subr.mxu0 0.0
        %3913 = vmatpush1.msra.mxu0 0.0
        %3914 = vmatprep.subr.mxu0 0.0
        %3915 = vmatpush1.msra.mxu0 0.0
        %3916 = vmatprep.subr.mxu0 0.0
        %3917 = vmatpush1.msra.mxu0 0.0
        %3918 = vmatprep.subr.mxu0 0.0
        %3919 = vmatpush1.msra.mxu0 0.0
        %3920 = vmatprep.subr.mxu0 0.0
        %3921 = vmatpush1.msra.mxu0 0.0
        %3922 = vmatprep.subr.mxu0 0.0
        %3923 = vmatpush1.msra.mxu0 0.0
        %3924 = vmatprep.subr.mxu0 0.0
        %3925 = vmatpush1.msra.mxu0 0.0
        %3926 = vmatprep.subr.mxu0 0.0
        %3927 = vmatpush1.msra.mxu0 0.0
        %3928 = vmatprep.subr.mxu0 0.0
        %3929 = vmatpush1.msra.mxu0 0.0
        %3930 = vmatprep.subr.mxu0 0.0
        %3931 = vmatpush1.msra.mxu0 0.0
        %3932 = vmatprep.subr.mxu0 0.0
        %3933 = vmatpush1.msra.mxu0 0.0
        %3934 = vmatprep.subr.mxu0 0.0
        %3935 = vmatpush1.msra.mxu0 0.0
        %3936 = vmatprep.subr.mxu0 0.0
        %3937 = vmatpush1.msra.mxu0 0.0
        %3938 = vmatprep.subr.mxu0 0.0
        %3939 = vmatpush1.msra.mxu0 0.0
        %3940 = vmatprep.mubr.f32.mxu0 0.0
        %3941 = vmatmul.mubr.f32.gmra.mrb[0].mxu0 %v3732
        %v3942 = vpop.f32.mrb[0].mxu0
        %v3943 = vadd.f32 %v3670, %v3942
        %v3944 = vpop.f32.mrb[0].mxu0
        %v3945 = vadd.f32 %v3671, %v3944
        %3946 = vdwg.mxu0
        %3947 = vmatprep.subr.mxu0 %v3227
        %3948 = vmatpush1.msra.mxu0 %v3226
        %3949 = vmatprep.subr.mxu0 %v3228
        %3950 = vmatpush1.msra.mxu0 %v3227
        %3951 = vmatprep.subr.mxu0 %v3229
        %3952 = vmatpush1.msra.mxu0 %v3228
        %3953 = vmatprep.subr.mxu0 %v3361
        %3954 = vmatpush1.msra.mxu0 %v3360
        %3955 = vmatprep.subr.mxu0 %v3362
        %3956 = vmatpush1.msra.mxu0 %v3361
        %3957 = vmatprep.subr.mxu0 %v3363
        %3958 = vmatpush1.msra.mxu0 %v3362
        %3959 = vmatprep.subr.mxu0 %v3501
        %3960 = vmatpush1.msra.mxu0 %v3500
        %3961 = vmatprep.subr.mxu0 %v3502
        %3962 = vmatpush1.msra.mxu0 %v3501
        %3963 = vmatprep.subr.mxu0 %v3503
        %3964 = vmatpush1.msra.mxu0 %v3502
        %3965 = vmatprep.subr.mxu0 0.0
        %3966 = vmatpush1.msra.mxu0 0.0
        %3967 = vmatprep.subr.mxu0 0.0
        %3968 = vmatpush1.msra.mxu0 0.0
        %3969 = vmatprep.subr.mxu0 0.0
        %3970 = vmatpush1.msra.mxu0 0.0
        %3971 = vmatprep.subr.mxu0 0.0
        %3972 = vmatpush1.msra.mxu0 0.0
        %3973 = vmatprep.subr.mxu0 0.0
        %3974 = vmatpush1.msra.mxu0 0.0
        %3975 = vmatprep.subr.mxu0 0.0
        %3976 = vmatpush1.msra.mxu0 0.0
        %3977 = vmatprep.subr.mxu0 0.0
        %3978 = vmatpush1.msra.mxu0 0.0
        %3979 = vmatprep.subr.mxu0 0.0
        %3980 = vmatpush1.msra.mxu0 0.0
        %3981 = vmatprep.subr.mxu0 0.0
        %3982 = vmatpush1.msra.mxu0 0.0
        %3983 = vmatprep.subr.mxu0 0.0
        %3984 = vmatpush1.msra.mxu0 0.0
        %3985 = vmatprep.subr.mxu0 0.0
        %3986 = vmatpush1.msra.mxu0 0.0
        %3987 = vmatprep.subr.mxu0 0.0
        %3988 = vmatpush1.msra.mxu0 0.0
        %3989 = vmatprep.subr.mxu0 0.0
        %3990 = vmatpush1.msra.mxu0 0.0
        %3991 = vmatprep.subr.mxu0 0.0
        %3992 = vmatpush1.msra.mxu0 0.0
        %3993 = vmatprep.subr.mxu0 0.0
        %3994 = vmatpush1.msra.mxu0 0.0
        %3995 = vmatprep.subr.mxu0 0.0
        %3996 = vmatpush1.msra.mxu0 0.0
        %3997 = vmatprep.subr.mxu0 0.0
        %3998 = vmatpush1.msra.mxu0 0.0
        %3999 = vmatprep.subr.mxu0 0.0
        %4000 = vmatpush1.msra.mxu0 0.0
        %4001 = vmatprep.subr.mxu0 0.0
        %4002 = vmatpush1.msra.mxu0 0.0
        %4003 = vmatprep.subr.mxu0 0.0
        %4004 = vmatpush1.msra.mxu0 0.0
        %4005 = vmatprep.subr.mxu0 0.0
        %4006 = vmatpush1.msra.mxu0 0.0
        %4007 = vmatprep.subr.mxu0 0.0
        %4008 = vmatpush1.msra.mxu0 0.0
        %4009 = vmatprep.subr.mxu0 0.0
        %4010 = vmatpush1.msra.mxu0 0.0
        %4011 = vmatprep.mubr.f32.mxu0 0.0
        %4012 = vmatmul.mubr.f32.gmra.mrb[0].mxu0 %v3732
        %v4013 = vpop.f32.mrb[0].mxu0
        %v4014 = vadd.f32 %v3672, %v4013
        %v4015 = vpop.f32.mrb[0].mxu0
        %v4016 = vadd.f32 %v3673, %v4015
        %4017 = vdwg.mxu0
        %4018 = vmatprep.subr.mxu0 %v3229
        %4019 = vmatpush1.msra.mxu0 %v3228
        %4020 = vmatprep.subr.mxu0 %v3230
        %4021 = vmatpush1.msra.mxu0 %v3229
        %4022 = vmatprep.subr.mxu0 %v3231
        %4023 = vmatpush1.msra.mxu0 %v3230
        %4024 = vmatprep.subr.mxu0 %v3363
        %4025 = vmatpush1.msra.mxu0 %v3362
        %4026 = vmatprep.subr.mxu0 %v3364
        %4027 = vmatpush1.msra.mxu0 %v3363
        %4028 = vmatprep.subr.mxu0 %v3365
        %4029 = vmatpush1.msra.mxu0 %v3364
        %4030 = vmatprep.subr.mxu0 %v3503
        %4031 = vmatpush1.msra.mxu0 %v3502
        %4032 = vmatprep.subr.mxu0 %v3504
        %4033 = vmatpush1.msra.mxu0 %v3503
        %4034 = vmatprep.subr.mxu0 %v3505
        %4035 = vmatpush1.msra.mxu0 %v3504
        %4036 = vmatprep.subr.mxu0 0.0
        %4037 = vmatpush1.msra.mxu0 0.0
        %4038 = vmatprep.subr.mxu0 0.0
        %4039 = vmatpush1.msra.mxu0 0.0
        %4040 = vmatprep.subr.mxu0 0.0
        %4041 = vmatpush1.msra.mxu0 0.0
        %4042 = vmatprep.subr.mxu0 0.0
        %4043 = vmatpush1.msra.mxu0 0.0
        %4044 = vmatprep.subr.mxu0 0.0
        %4045 = vmatpush1.msra.mxu0 0.0
        %4046 = vmatprep.subr.mxu0 0.0
        %4047 = vmatpush1.msra.mxu0 0.0
        %4048 = vmatprep.subr.mxu0 0.0
        %4049 = vmatpush1.msra.mxu0 0.0
        %4050 = vmatprep.subr.mxu0 0.0
        %4051 = vmatpush1.msra.mxu0 0.0
        %4052 = vmatprep.subr.mxu0 0.0
        %4053 = vmatpush1.msra.mxu0 0.0
        %4054 = vmatprep.subr.mxu0 0.0
        %4055 = vmatpush1.msra.mxu0 0.0
        %4056 = vmatprep.subr.mxu0 0.0
        %4057 = vmatpush1.msra.mxu0 0.0
        %4058 = vmatprep.subr.mxu0 0.0
        %4059 = vmatpush1.msra.mxu0 0.0
        %4060 = vmatprep.subr.mxu0 0.0
        %4061 = vmatpush1.msra.mxu0 0.0
        %4062 = vmatprep.subr.mxu0 0.0
        %4063 = vmatpush1.msra.mxu0 0.0
        %4064 = vmatprep.subr.mxu0 0.0
        %4065 = vmatpush1.msra.mxu0 0.0
        %4066 = vmatprep.subr.mxu0 0.0
        %4067 = vmatpush1.msra.mxu0 0.0
        %4068 = vmatprep.subr.mxu0 0.0
        %4069 = vmatpush1.msra.mxu0 0.0
        %4070 = vmatprep.subr.mxu0 0.0
        %4071 = vmatpush1.msra.mxu0 0.0
        %4072 = vmatprep.subr.mxu0 0.0
        %4073 = vmatpush1.msra.mxu0 0.0
        %4074 = vmatprep.subr.mxu0 0.0
        %4075 = vmatpush1.msra.mxu0 0.0
        %4076 = vmatprep.subr.mxu0 0.0
        %4077 = vmatpush1.msra.mxu0 0.0
        %4078 = vmatprep.subr.mxu0 0.0
        %4079 = vmatpush1.msra.mxu0 0.0
        %4080 = vmatprep.subr.mxu0 0.0
        %4081 = vmatpush1.msra.mxu0 0.0
        %4082 = vmatprep.mubr.f32.mxu0 0.0
        %4083 = vmatmul.mubr.f32.gmra.mrb[0].mxu0 %v3732
        %v4084 = vpop.f32.mrb[0].mxu0
        %v4085 = vadd.f32 %v3674, %v4084
        %v4086 = vpop.f32.mrb[0].mxu0
        %v4087 = vadd.f32 %v3675, %v4086
        %4088 = vdwg.mxu0
        %4089 = vmatprep.subr.mxu0 %v3231
        %4090 = vmatpush1.msra.mxu0 %v3230
        %4091 = vmatprep.subr.mxu0 %v3232
        %4092 = vmatpush1.msra.mxu0 %v3231
        %4093 = vmatprep.subr.mxu0 %v3233
        %4094 = vmatpush1.msra.mxu0 %v3232
        %4095 = vmatprep.subr.mxu0 %v3365
        %4096 = vmatpush1.msra.mxu0 %v3364
        %4097 = vmatprep.subr.mxu0 %v3366
        %4098 = vmatpush1.msra.mxu0 %v3365
        %4099 = vmatprep.subr.mxu0 %v3367
        %4100 = vmatpush1.msra.mxu0 %v3366
        %4101 = vmatprep.subr.mxu0 %v3505
        %4102 = vmatpush1.msra.mxu0 %v3504
        %4103 = vmatprep.subr.mxu0 %v3506
        %4104 = vmatpush1.msra.mxu0 %v3505
        %4105 = vmatprep.subr.mxu0 %v3507
        %4106 = vmatpush1.msra.mxu0 %v3506
        %4107 = vmatprep.subr.mxu0 0.0
        %4108 = vmatpush1.msra.mxu0 0.0
        %4109 = vmatprep.subr.mxu0 0.0
        %4110 = vmatpush1.msra.mxu0 0.0
        %4111 = vmatprep.subr.mxu0 0.0
        %4112 = vmatpush1.msra.mxu0 0.0
        %4113 = vmatprep.subr.mxu0 0.0
        %4114 = vmatpush1.msra.mxu0 0.0
        %4115 = vmatprep.subr.mxu0 0.0
        %4116 = vmatpush1.msra.mxu0 0.0
        %4117 = vmatprep.subr.mxu0 0.0
        %4118 = vmatpush1.msra.mxu0 0.0
        %4119 = vmatprep.subr.mxu0 0.0
        %4120 = vmatpush1.msra.mxu0 0.0
        %4121 = vmatprep.subr.mxu0 0.0
        %4122 = vmatpush1.msra.mxu0 0.0
        %4123 = vmatprep.subr.mxu0 0.0
        %4124 = vmatpush1.msra.mxu0 0.0
        %4125 = vmatprep.subr.mxu0 0.0
        %4126 = vmatpush1.msra.mxu0 0.0
        %4127 = vmatprep.subr.mxu0 0.0
        %4128 = vmatpush1.msra.mxu0 0.0
        %4129 = vmatprep.subr.mxu0 0.0
        %4130 = vmatpush1.msra.mxu0 0.0
        %4131 = vmatprep.subr.mxu0 0.0
        %4132 = vmatpush1.msra.mxu0 0.0
        %4133 = vmatprep.subr.mxu0 0.0
        %4134 = vmatpush1.msra.mxu0 0.0
        %4135 = vmatprep.subr.mxu0 0.0
        %4136 = vmatpush1.msra.mxu0 0.0
        %4137 = vmatprep.subr.mxu0 0.0
        %4138 = vmatpush1.msra.mxu0 0.0
        %4139 = vmatprep.subr.mxu0 0.0
        %4140 = vmatpush1.msra.mxu0 0.0
        %4141 = vmatprep.subr.mxu0 0.0
        %4142 = vmatpush1.msra.mxu0 0.0
        %4143 = vmatprep.subr.mxu0 0.0
        %4144 = vmatpush1.msra.mxu0 0.0
        %4145 = vmatprep.subr.mxu0 0.0
        %4146 = vmatpush1.msra.mxu0 0.0
        %4147 = vmatprep.subr.mxu0 0.0
        %4148 = vmatpush1.msra.mxu0 0.0
        %4149 = vmatprep.subr.mxu0 0.0
        %4150 = vmatpush1.msra.mxu0 0.0
        %4151 = vmatprep.subr.mxu0 0.0
        %4152 = vmatpush1.msra.mxu0 0.0
        %4153 = vmatprep.mubr.f32.mxu0 0.0
        %4154 = vmatmul.mubr.f32.gmra.mrb[0].mxu0 %v3732
        %v4155 = vpop.f32.mrb[0].mxu0
        %v4156 = vadd.f32 %v3676, %v4155
        %v4157 = vpop.f32.mrb[0].mxu0
        %v4158 = vadd.f32 %v3677, %v4157
        %4159 = vdwg.mxu0
        %4160 = vmatprep.subr.mxu0 %v3233
        %4161 = vmatpush1.msra.mxu0 %v3232
        %4162 = vmatprep.subr.mxu0 %v3234
        %4163 = vmatpush1.msra.mxu0 %v3233
        %4164 = vmatprep.subr.mxu0 %v3235
        %4165 = vmatpush1.msra.mxu0 %v3234
        %4166 = vmatprep.subr.mxu0 %v3367
        %4167 = vmatpush1.msra.mxu0 %v3366
        %4168 = vmatprep.subr.mxu0 %v3368
        %4169 = vmatpush1.msra.mxu0 %v3367
        %4170 = vmatprep.subr.mxu0 %v3369
        %4171 = vmatpush1.msra.mxu0 %v3368
        %4172 = vmatprep.subr.mxu0 %v3507
        %4173 = vmatpush1.msra.mxu0 %v3506
        %4174 = vmatprep.subr.mxu0 %v3508
        %4175 = vmatpush1.msra.mxu0 %v3507
        %4176 = vmatprep.subr.mxu0 %v3509
        %4177 = vmatpush1.msra.mxu0 %v3508
        %4178 = vmatprep.subr.mxu0 0.0
        %4179 = vmatpush1.msra.mxu0 0.0
        %4180 = vmatprep.subr.mxu0 0.0
        %4181 = vmatpush1.msra.mxu0 0.0
        %4182 = vmatprep.subr.mxu0 0.0
        %4183 = vmatpush1.msra.mxu0 0.0
        %4184 = vmatprep.subr.mxu0 0.0
        %4185 = vmatpush1.msra.mxu0 0.0
        %4186 = vmatprep.subr.mxu0 0.0
        %4187 = vmatpush1.msra.mxu0 0.0
        %4188 = vmatprep.subr.mxu0 0.0
        %4189 = vmatpush1.msra.mxu0 0.0
        %4190 = vmatprep.subr.mxu0 0.0
        %4191 = vmatpush1.msra.mxu0 0.0
        %4192 = vmatprep.subr.mxu0 0.0
        %4193 = vmatpush1.msra.mxu0 0.0
        %4194 = vmatprep.subr.mxu0 0.0
        %4195 = vmatpush1.msra.mxu0 0.0
        %4196 = vmatprep.subr.mxu0 0.0
        %4197 = vmatpush1.msra.mxu0 0.0
        %4198 = vmatprep.subr.mxu0 0.0
        %4199 = vmatpush1.msra.mxu0 0.0
        %4200 = vmatprep.subr.mxu0 0.0
        %4201 = vmatpush1.msra.mxu0 0.0
        %4202 = vmatprep.subr.mxu0 0.0
        %4203 = vmatpush1.msra.mxu0 0.0
        %4204 = vmatprep.subr.mxu0 0.0
        %4205 = vmatpush1.msra.mxu0 0.0
        %4206 = vmatprep.subr.mxu0 0.0
        %4207 = vmatpush1.msra.mxu0 0.0
        %4208 = vmatprep.subr.mxu0 0.0
        %4209 = vmatpush1.msra.mxu0 0.0
        %4210 = vmatprep.subr.mxu0 0.0
        %4211 = vmatpush1.msra.mxu0 0.0
        %4212 = vmatprep.subr.mxu0 0.0
        %4213 = vmatpush1.msra.mxu0 0.0
        %4214 = vmatprep.subr.mxu0 0.0
        %4215 = vmatpush1.msra.mxu0 0.0
        %4216 = vmatprep.subr.mxu0 0.0
        %4217 = vmatpush1.msra.mxu0 0.0
        %4218 = vmatprep.subr.mxu0 0.0
        %4219 = vmatpush1.msra.mxu0 0.0
        %4220 = vmatprep.subr.mxu0 0.0
        %4221 = vmatpush1.msra.mxu0 0.0
        %4222 = vmatprep.subr.mxu0 0.0
        %4223 = vmatpush1.msra.mxu0 0.0
        %4224 = vmatprep.mubr.f32.mxu0 0.0
        %4225 = vmatmul.mubr.f32.gmra.mrb[0].mxu0 %v3732
        %v4226 = vpop.f32.mrb[0].mxu0
        %v4227 = vadd.f32 %v3678, %v4226
        %v4228 = vpop.f32.mrb[0].mxu0
        %v4229 = vadd.f32 %v3679, %v4228
        %4230 = vdwg.mxu0
        %4231 = vmatprep.subr.mxu0 %v3235
        %4232 = vmatpush1.msra.mxu0 %v3234
        %4233 = vmatprep.subr.mxu0 %v3236
        %4234 = vmatpush1.msra.mxu0 %v3235
        %4235 = vmatprep.subr.mxu0 %v3237
        %4236 = vmatpush1.msra.mxu0 %v3236
        %4237 = vmatprep.subr.mxu0 %v3369
        %4238 = vmatpush1.msra.mxu0 %v3368
        %4239 = vmatprep.subr.mxu0 %v3370
        %4240 = vmatpush1.msra.mxu0 %v3369
        %4241 = vmatprep.subr.mxu0 %v3371
        %4242 = vmatpush1.msra.mxu0 %v3370
        %4243 = vmatprep.subr.mxu0 %v3509
        %4244 = vmatpush1.msra.mxu0 %v3508
        %4245 = vmatprep.subr.mxu0 %v3510
        %4246 = vmatpush1.msra.mxu0 %v3509
        %4247 = vmatprep.subr.mxu0 %v3511
        %4248 = vmatpush1.msra.mxu0 %v3510
        %4249 = vmatprep.subr.mxu0 0.0
        %4250 = vmatpush1.msra.mxu0 0.0
        %4251 = vmatprep.subr.mxu0 0.0
        %4252 = vmatpush1.msra.mxu0 0.0
        %4253 = vmatprep.subr.mxu0 0.0
        %4254 = vmatpush1.msra.mxu0 0.0
        %4255 = vmatprep.subr.mxu0 0.0
        %4256 = vmatpush1.msra.mxu0 0.0
        %4257 = vmatprep.subr.mxu0 0.0
        %4258 = vmatpush1.msra.mxu0 0.0
        %4259 = vmatprep.subr.mxu0 0.0
        %4260 = vmatpush1.msra.mxu0 0.0
        %4261 = vmatprep.subr.mxu0 0.0
        %4262 = vmatpush1.msra.mxu0 0.0
        %4263 = vmatprep.subr.mxu0 0.0
        %4264 = vmatpush1.msra.mxu0 0.0
        %4265 = vmatprep.subr.mxu0 0.0
        %4266 = vmatpush1.msra.mxu0 0.0
        %4267 = vmatprep.subr.mxu0 0.0
        %4268 = vmatpush1.msra.mxu0 0.0
        %4269 = vmatprep.subr.mxu0 0.0
        %4270 = vmatpush1.msra.mxu0 0.0
        %4271 = vmatprep.subr.mxu0 0.0
        %4272 = vmatpush1.msra.mxu0 0.0
        %4273 = vmatprep.subr.mxu0 0.0
        %4274 = vmatpush1.msra.mxu0 0.0
        %4275 = vmatprep.subr.mxu0 0.0
        %4276 = vmatpush1.msra.mxu0 0.0
        %4277 = vmatprep.subr.mxu0 0.0
        %4278 = vmatpush1.msra.mxu0 0.0
        %4279 = vmatprep.subr.mxu0 0.0
        %4280 = vmatpush1.msra.mxu0 0.0
        %4281 = vmatprep.subr.mxu0 0.0
        %4282 = vmatpush1.msra.mxu0 0.0
        %4283 = vmatprep.subr.mxu0 0.0
        %4284 = vmatpush1.msra.mxu0 0.0
        %4285 = vmatprep.subr.mxu0 0.0
        %4286 = vmatpush1.msra.mxu0 0.0
        %4287 = vmatprep.subr.mxu0 0.0
        %4288 = vmatpush1.msra.mxu0 0.0
        %4289 = vmatprep.subr.mxu0 0.0
        %4290 = vmatpush1.msra.mxu0 0.0
        %4291 = vmatprep.subr.mxu0 0.0
        %4292 = vmatpush1.msra.mxu0 0.0
        %4293 = vmatprep.subr.mxu0 0.0
        %4294 = vmatpush1.msra.mxu0 0.0
        %4295 = vmatprep.mubr.f32.mxu0 0.0
        %4296 = vmatmul.mubr.f32.gmra.mrb[0].mxu0 %v3732
        %v4297 = vpop.f32.mrb[0].mxu0
        %v4298 = vadd.f32 %v3680, %v4297
        %v4299 = vpop.f32.mrb[0].mxu0
        %v4300 = vadd.f32 %v3681, %v4299
        %4301 = vdwg.mxu0
        %4302 = vmatprep.subr.mxu0 %v3237
        %4303 = vmatpush1.msra.mxu0 %v3236
        %4304 = vmatprep.subr.mxu0 %v3238
        %4305 = vmatpush1.msra.mxu0 %v3237
        %4306 = vmatprep.subr.mxu0 %v3239
        %4307 = vmatpush1.msra.mxu0 %v3238
        %4308 = vmatprep.subr.mxu0 %v3371
        %4309 = vmatpush1.msra.mxu0 %v3370
        %4310 = vmatprep.subr.mxu0 %v3372
        %4311 = vmatpush1.msra.mxu0 %v3371
        %4312 = vmatprep.subr.mxu0 %v3373
        %4313 = vmatpush1.msra.mxu0 %v3372
        %4314 = vmatprep.subr.mxu0 %v3511
        %4315 = vmatpush1.msra.mxu0 %v3510
        %4316 = vmatprep.subr.mxu0 %v3512
        %4317 = vmatpush1.msra.mxu0 %v3511
        %4318 = vmatprep.subr.mxu0 %v3513
        %4319 = vmatpush1.msra.mxu0 %v3512
        %4320 = vmatprep.subr.mxu0 0.0
        %4321 = vmatpush1.msra.mxu0 0.0
        %4322 = vmatprep.subr.mxu0 0.0
        %4323 = vmatpush1.msra.mxu0 0.0
        %4324 = vmatprep.subr.mxu0 0.0
        %4325 = vmatpush1.msra.mxu0 0.0
        %4326 = vmatprep.subr.mxu0 0.0
        %4327 = vmatpush1.msra.mxu0 0.0
        %4328 = vmatprep.subr.mxu0 0.0
        %4329 = vmatpush1.msra.mxu0 0.0
        %4330 = vmatprep.subr.mxu0 0.0
        %4331 = vmatpush1.msra.mxu0 0.0
        %4332 = vmatprep.subr.mxu0 0.0
        %4333 = vmatpush1.msra.mxu0 0.0
        %4334 = vmatprep.subr.mxu0 0.0
        %4335 = vmatpush1.msra.mxu0 0.0
        %4336 = vmatprep.subr.mxu0 0.0
        %4337 = vmatpush1.msra.mxu0 0.0
        %4338 = vmatprep.subr.mxu0 0.0
        %4339 = vmatpush1.msra.mxu0 0.0
        %4340 = vmatprep.subr.mxu0 0.0
        %4341 = vmatpush1.msra.mxu0 0.0
        %4342 = vmatprep.subr.mxu0 0.0
        %4343 = vmatpush1.msra.mxu0 0.0
        %4344 = vmatprep.subr.mxu0 0.0
        %4345 = vmatpush1.msra.mxu0 0.0
        %4346 = vmatprep.subr.mxu0 0.0
        %4347 = vmatpush1.msra.mxu0 0.0
        %4348 = vmatprep.subr.mxu0 0.0
        %4349 = vmatpush1.msra.mxu0 0.0
        %4350 = vmatprep.subr.mxu0 0.0
        %4351 = vmatpush1.msra.mxu0 0.0
        %4352 = vmatprep.subr.mxu0 0.0
        %4353 = vmatpush1.msra.mxu0 0.0
        %4354 = vmatprep.subr.mxu0 0.0
        %4355 = vmatpush1.msra.mxu0 0.0
        %4356 = vmatprep.subr.mxu0 0.0
        %4357 = vmatpush1.msra.mxu0 0.0
        %4358 = vmatprep.subr.mxu0 0.0
        %4359 = vmatpush1.msra.mxu0 0.0
        %4360 = vmatprep.subr.mxu0 0.0
        %4361 = vmatpush1.msra.mxu0 0.0
        %4362 = vmatprep.subr.mxu0 0.0
        %4363 = vmatpush1.msra.mxu0 0.0
        %4364 = vmatprep.subr.mxu0 0.0
        %4365 = vmatpush1.msra.mxu0 0.0
        %4366 = vmatprep.mubr.f32.mxu0 0.0
        %4367 = vmatmul.mubr.f32.gmra.mrb[0].mxu0 %v3732
        %v4368 = vpop.f32.mrb[0].mxu0
        %v4369 = vadd.f32 %v3682, %v4368
        %v4370 = vpop.f32.mrb[0].mxu0
        %v4371 = vadd.f32 %v3683, %v4370
        %4372 = vdwg.mxu0
        %4373 = vmatprep.subr.mxu0 %v3239
        %4374 = vmatpush1.msra.mxu0 %v3238
        %4375 = vmatprep.subr.mxu0 %v3240
        %4376 = vmatpush1.msra.mxu0 %v3239
        %4377 = vmatprep.subr.mxu0 %v3241
        %4378 = vmatpush1.msra.mxu0 %v3240
        %4379 = vmatprep.subr.mxu0 %v3373
        %4380 = vmatpush1.msra.mxu0 %v3372
        %4381 = vmatprep.subr.mxu0 %v3374
        %4382 = vmatpush1.msra.mxu0 %v3373
        %4383 = vmatprep.subr.mxu0 %v3375
        %4384 = vmatpush1.msra.mxu0 %v3374
        %4385 = vmatprep.subr.mxu0 %v3513
        %4386 = vmatpush1.msra.mxu0 %v3512
        %4387 = vmatprep.subr.mxu0 %v3514
        %4388 = vmatpush1.msra.mxu0 %v3513
        %4389 = vmatprep.subr.mxu0 %v3515
        %4390 = vmatpush1.msra.mxu0 %v3514
        %4391 = vmatprep.subr.mxu0 0.0
        %4392 = vmatpush1.msra.mxu0 0.0
        %4393 = vmatprep.subr.mxu0 0.0
        %4394 = vmatpush1.msra.mxu0 0.0
        %4395 = vmatprep.subr.mxu0 0.0
        %4396 = vmatpush1.msra.mxu0 0.0
        %4397 = vmatprep.subr.mxu0 0.0
        %4398 = vmatpush1.msra.mxu0 0.0
        %4399 = vmatprep.subr.mxu0 0.0
        %4400 = vmatpush1.msra.mxu0 0.0
        %4401 = vmatprep.subr.mxu0 0.0
        %4402 = vmatpush1.msra.mxu0 0.0
        %4403 = vmatprep.subr.mxu0 0.0
        %4404 = vmatpush1.msra.mxu0 0.0
        %4405 = vmatprep.subr.mxu0 0.0
        %4406 = vmatpush1.msra.mxu0 0.0
        %4407 = vmatprep.subr.mxu0 0.0
        %4408 = vmatpush1.msra.mxu0 0.0
        %4409 = vmatprep.subr.mxu0 0.0
        %4410 = vmatpush1.msra.mxu0 0.0
        %4411 = vmatprep.subr.mxu0 0.0
        %4412 = vmatpush1.msra.mxu0 0.0
        %4413 = vmatprep.subr.mxu0 0.0
        %4414 = vmatpush1.msra.mxu0 0.0
        %4415 = vmatprep.subr.mxu0 0.0
        %4416 = vmatpush1.msra.mxu0 0.0
        %4417 = vmatprep.subr.mxu0 0.0
        %4418 = vmatpush1.msra.mxu0 0.0
        %4419 = vmatprep.subr.mxu0 0.0
        %4420 = vmatpush1.msra.mxu0 0.0
        %4421 = vmatprep.subr.mxu0 0.0
        %4422 = vmatpush1.msra.mxu0 0.0
        %4423 = vmatprep.subr.mxu0 0.0
        %4424 = vmatpush1.msra.mxu0 0.0
        %4425 = vmatprep.subr.mxu0 0.0
        %4426 = vmatpush1.msra.mxu0 0.0
        %4427 = vmatprep.subr.mxu0 0.0
        %4428 = vmatpush1.msra.mxu0 0.0
        %4429 = vmatprep.subr.mxu0 0.0
        %4430 = vmatpush1.msra.mxu0 0.0
        %4431 = vmatprep.subr.mxu0 0.0
        %4432 = vmatpush1.msra.mxu0 0.0
        %4433 = vmatprep.subr.mxu0 0.0
        %4434 = vmatpush1.msra.mxu0 0.0
        %4435 = vmatprep.subr.mxu0 0.0
        %4436 = vmatpush1.msra.mxu0 0.0
        %4437 = vmatprep.mubr.f32.mxu0 0.0
        %4438 = vmatmul.mubr.f32.gmra.mrb[0].mxu0 %v3732
        %v4439 = vpop.f32.mrb[0].mxu0
        %v4440 = vadd.f32 %v3684, %v4439
        %v4441 = vpop.f32.mrb[0].mxu0
        %v4442 = vadd.f32 %v3685, %v4441
        %4443 = vdwg.mxu0
        %4444 = vmatprep.subr.mxu0 %v3241
        %4445 = vmatpush1.msra.mxu0 %v3240
        %4446 = vmatprep.subr.mxu0 %v3242
        %4447 = vmatpush1.msra.mxu0 %v3241
        %4448 = vmatprep.subr.mxu0 %v3243
        %4449 = vmatpush1.msra.mxu0 %v3242
        %4450 = vmatprep.subr.mxu0 %v3375
        %4451 = vmatpush1.msra.mxu0 %v3374
        %4452 = vmatprep.subr.mxu0 %v3376
        %4453 = vmatpush1.msra.mxu0 %v3375
        %4454 = vmatprep.subr.mxu0 %v3377
        %4455 = vmatpush1.msra.mxu0 %v3376
        %4456 = vmatprep.subr.mxu0 %v3515
        %4457 = vmatpush1.msra.mxu0 %v3514
        %4458 = vmatprep.subr.mxu0 %v3516
        %4459 = vmatpush1.msra.mxu0 %v3515
        %4460 = vmatprep.subr.mxu0 %v3517
        %4461 = vmatpush1.msra.mxu0 %v3516
        %4462 = vmatprep.subr.mxu0 0.0
        %4463 = vmatpush1.msra.mxu0 0.0
        %4464 = vmatprep.subr.mxu0 0.0
        %4465 = vmatpush1.msra.mxu0 0.0
        %4466 = vmatprep.subr.mxu0 0.0
        %4467 = vmatpush1.msra.mxu0 0.0
        %4468 = vmatprep.subr.mxu0 0.0
        %4469 = vmatpush1.msra.mxu0 0.0
        %4470 = vmatprep.subr.mxu0 0.0
        %4471 = vmatpush1.msra.mxu0 0.0
        %4472 = vmatprep.subr.mxu0 0.0
        %4473 = vmatpush1.msra.mxu0 0.0
        %4474 = vmatprep.subr.mxu0 0.0
        %4475 = vmatpush1.msra.mxu0 0.0
        %4476 = vmatprep.subr.mxu0 0.0
        %4477 = vmatpush1.msra.mxu0 0.0
        %4478 = vmatprep.subr.mxu0 0.0
        %4479 = vmatpush1.msra.mxu0 0.0
        %4480 = vmatprep.subr.mxu0 0.0
        %4481 = vmatpush1.msra.mxu0 0.0
        %4482 = vmatprep.subr.mxu0 0.0
        %4483 = vmatpush1.msra.mxu0 0.0
        %4484 = vmatprep.subr.mxu0 0.0
        %4485 = vmatpush1.msra.mxu0 0.0
        %4486 = vmatprep.subr.mxu0 0.0
        %4487 = vmatpush1.msra.mxu0 0.0
        %4488 = vmatprep.subr.mxu0 0.0
        %4489 = vmatpush1.msra.mxu0 0.0
        %4490 = vmatprep.subr.mxu0 0.0
        %4491 = vmatpush1.msra.mxu0 0.0
        %4492 = vmatprep.subr.mxu0 0.0
        %4493 = vmatpush1.msra.mxu0 0.0
        %4494 = vmatprep.subr.mxu0 0.0
        %4495 = vmatpush1.msra.mxu0 0.0
        %4496 = vmatprep.subr.mxu0 0.0
        %4497 = vmatpush1.msra.mxu0 0.0
        %4498 = vmatprep.subr.mxu0 0.0
        %4499 = vmatpush1.msra.mxu0 0.0
        %4500 = vmatprep.subr.mxu0 0.0
        %4501 = vmatpush1.msra.mxu0 0.0
        %4502 = vmatprep.subr.mxu0 0.0
        %4503 = vmatpush1.msra.mxu0 0.0
        %4504 = vmatprep.subr.mxu0 0.0
        %4505 = vmatpush1.msra.mxu0 0.0
        %4506 = vmatprep.subr.mxu0 0.0
        %4507 = vmatpush1.msra.mxu0 0.0
        %4508 = vmatprep.mubr.f32.mxu0 0.0
        %4509 = vmatmul.mubr.f32.gmra.mrb[0].mxu0 %v3732
        %v4510 = vpop.f32.mrb[0].mxu0
        %v4511 = vadd.f32 %v3686, %v4510
        %v4512 = vpop.f32.mrb[0].mxu0
        %v4513 = vadd.f32 %v3687, %v4512
        %4514 = vdwg.mxu0
        %4515 = vmatprep.subr.mxu0 %v3243
        %4516 = vmatpush1.msra.mxu0 %v3242
        %4517 = vmatprep.subr.mxu0 %v3244
        %4518 = vmatpush1.msra.mxu0 %v3243
        %4519 = vmatprep.subr.mxu0 %v3245
        %4520 = vmatpush1.msra.mxu0 %v3244
        %4521 = vmatprep.subr.mxu0 %v3377
        %4522 = vmatpush1.msra.mxu0 %v3376
        %4523 = vmatprep.subr.mxu0 %v3378
        %4524 = vmatpush1.msra.mxu0 %v3377
        %4525 = vmatprep.subr.mxu0 %v3379
        %4526 = vmatpush1.msra.mxu0 %v3378
        %4527 = vmatprep.subr.mxu0 %v3517
        %4528 = vmatpush1.msra.mxu0 %v3516
        %4529 = vmatprep.subr.mxu0 %v3518
        %4530 = vmatpush1.msra.mxu0 %v3517
        %4531 = vmatprep.subr.mxu0 %v3519
        %4532 = vmatpush1.msra.mxu0 %v3518
        %4533 = vmatprep.subr.mxu0 0.0
        %4534 = vmatpush1.msra.mxu0 0.0
        %4535 = vmatprep.subr.mxu0 0.0
        %4536 = vmatpush1.msra.mxu0 0.0
        %4537 = vmatprep.subr.mxu0 0.0
        %4538 = vmatpush1.msra.mxu0 0.0
        %4539 = vmatprep.subr.mxu0 0.0
        %4540 = vmatpush1.msra.mxu0 0.0
        %4541 = vmatprep.subr.mxu0 0.0
        %4542 = vmatpush1.msra.mxu0 0.0
        %4543 = vmatprep.subr.mxu0 0.0
        %4544 = vmatpush1.msra.mxu0 0.0
        %4545 = vmatprep.subr.mxu0 0.0
        %4546 = vmatpush1.msra.mxu0 0.0
        %4547 = vmatprep.subr.mxu0 0.0
        %4548 = vmatpush1.msra.mxu0 0.0
        %4549 = vmatprep.subr.mxu0 0.0
        %4550 = vmatpush1.msra.mxu0 0.0
        %4551 = vmatprep.subr.mxu0 0.0
        %4552 = vmatpush1.msra.mxu0 0.0
        %4553 = vmatprep.subr.mxu0 0.0
        %4554 = vmatpush1.msra.mxu0 0.0
        %4555 = vmatprep.subr.mxu0 0.0
        %4556 = vmatpush1.msra.mxu0 0.0
        %4557 = vmatprep.subr.mxu0 0.0
        %4558 = vmatpush1.msra.mxu0 0.0
        %4559 = vmatprep.subr.mxu0 0.0
        %4560 = vmatpush1.msra.mxu0 0.0
        %4561 = vmatprep.subr.mxu0 0.0
        %4562 = vmatpush1.msra.mxu0 0.0
        %4563 = vmatprep.subr.mxu0 0.0
        %4564 = vmatpush1.msra.mxu0 0.0
        %4565 = vmatprep.subr.mxu0 0.0
        %4566 = vmatpush1.msra.mxu0 0.0
        %4567 = vmatprep.subr.mxu0 0.0
        %4568 = vmatpush1.msra.mxu0 0.0
        %4569 = vmatprep.subr.mxu0 0.0
        %4570 = vmatpush1.msra.mxu0 0.0
        %4571 = vmatprep.subr.mxu0 0.0
        %4572 = vmatpush1.msra.mxu0 0.0
        %4573 = vmatprep.subr.mxu0 0.0
        %4574 = vmatpush1.msra.mxu0 0.0
        %4575 = vmatprep.subr.mxu0 0.0
        %4576 = vmatpush1.msra.mxu0 0.0
        %4577 = vmatprep.subr.mxu0 0.0
        %4578 = vmatpush1.msra.mxu0 0.0
        %4579 = vmatprep.mubr.f32.mxu0 0.0
        %4580 = vmatmul.mubr.f32.gmra.mrb[0].mxu0 %v3732
        %v4581 = vpop.f32.mrb[0].mxu0
        %v4582 = vadd.f32 %v3688, %v4581
        %v4583 = vpop.f32.mrb[0].mxu0
        %v4584 = vadd.f32 %v3689, %v4583
        %4585 = vdwg.mxu0
        %4586 = vmatprep.subr.mxu0 %v3245
        %4587 = vmatpush1.msra.mxu0 %v3244
        %4588 = vmatprep.subr.mxu0 %v3246
        %4589 = vmatpush1.msra.mxu0 %v3245
        %4590 = vmatprep.subr.mxu0 %v3247
        %4591 = vmatpush1.msra.mxu0 %v3246
        %4592 = vmatprep.subr.mxu0 %v3379
        %4593 = vmatpush1.msra.mxu0 %v3378
        %4594 = vmatprep.subr.mxu0 %v3380
        %4595 = vmatpush1.msra.mxu0 %v3379
        %4596 = vmatprep.subr.mxu0 %v3381
        %4597 = vmatpush1.msra.mxu0 %v3380
        %4598 = vmatprep.subr.mxu0 %v3519
        %4599 = vmatpush1.msra.mxu0 %v3518
        %4600 = vmatprep.subr.mxu0 %v3520
        %4601 = vmatpush1.msra.mxu0 %v3519
        %4602 = vmatprep.subr.mxu0 %v3521
        %4603 = vmatpush1.msra.mxu0 %v3520
        %4604 = vmatprep.subr.mxu0 0.0
        %4605 = vmatpush1.msra.mxu0 0.0
        %4606 = vmatprep.subr.mxu0 0.0
        %4607 = vmatpush1.msra.mxu0 0.0
        %4608 = vmatprep.subr.mxu0 0.0
        %4609 = vmatpush1.msra.mxu0 0.0
        %4610 = vmatprep.subr.mxu0 0.0
        %4611 = vmatpush1.msra.mxu0 0.0
        %4612 = vmatprep.subr.mxu0 0.0
        %4613 = vmatpush1.msra.mxu0 0.0
        %4614 = vmatprep.subr.mxu0 0.0
        %4615 = vmatpush1.msra.mxu0 0.0
        %4616 = vmatprep.subr.mxu0 0.0
        %4617 = vmatpush1.msra.mxu0 0.0
        %4618 = vmatprep.subr.mxu0 0.0
        %4619 = vmatpush1.msra.mxu0 0.0
        %4620 = vmatprep.subr.mxu0 0.0
        %4621 = vmatpush1.msra.mxu0 0.0
        %4622 = vmatprep.subr.mxu0 0.0
        %4623 = vmatpush1.msra.mxu0 0.0
        %4624 = vmatprep.subr.mxu0 0.0
        %4625 = vmatpush1.msra.mxu0 0.0
        %4626 = vmatprep.subr.mxu0 0.0
        %4627 = vmatpush1.msra.mxu0 0.0
        %4628 = vmatprep.subr.mxu0 0.0
        %4629 = vmatpush1.msra.mxu0 0.0
        %4630 = vmatprep.subr.mxu0 0.0
        %4631 = vmatpush1.msra.mxu0 0.0
        %4632 = vmatprep.subr.mxu0 0.0
        %4633 = vmatpush1.msra.mxu0 0.0
        %4634 = vmatprep.subr.mxu0 0.0
        %4635 = vmatpush1.msra.mxu0 0.0
        %4636 = vmatprep.subr.mxu0 0.0
        %4637 = vmatpush1.msra.mxu0 0.0
        %4638 = vmatprep.subr.mxu0 0.0
        %4639 = vmatpush1.msra.mxu0 0.0
        %4640 = vmatprep.subr.mxu0 0.0
        %4641 = vmatpush1.msra.mxu0 0.0
        %4642 = vmatprep.subr.mxu0 0.0
        %4643 = vmatpush1.msra.mxu0 0.0
        %4644 = vmatprep.subr.mxu0 0.0
        %4645 = vmatpush1.msra.mxu0 0.0
        %4646 = vmatprep.subr.mxu0 0.0
        %4647 = vmatpush1.msra.mxu0 0.0
        %4648 = vmatprep.subr.mxu0 0.0
        %4649 = vmatpush1.msra.mxu0 0.0
        %4650 = vmatprep.mubr.f32.mxu0 0.0
        %4651 = vmatmul.mubr.f32.gmra.mrb[0].mxu0 %v3732
        %v4652 = vpop.f32.mrb[0].mxu0
        %v4653 = vadd.f32 %v3690, %v4652
        %v4654 = vpop.f32.mrb[0].mxu0
        %v4655 = vadd.f32 %v3691, %v4654
        %4656 = vdwg.mxu0
        %4657 = vmatprep.subr.mxu0 %v3247
        %4658 = vmatpush1.msra.mxu0 %v3246
        %4659 = vmatprep.subr.mxu0 %v3248
        %4660 = vmatpush1.msra.mxu0 %v3247
        %4661 = vmatprep.subr.mxu0 %v3249
        %4662 = vmatpush1.msra.mxu0 %v3248
        %4663 = vmatprep.subr.mxu0 %v3381
        %4664 = vmatpush1.msra.mxu0 %v3380
        %4665 = vmatprep.subr.mxu0 %v3382
        %4666 = vmatpush1.msra.mxu0 %v3381
        %4667 = vmatprep.subr.mxu0 %v3383
        %4668 = vmatpush1.msra.mxu0 %v3382
        %4669 = vmatprep.subr.mxu0 %v3521
        %4670 = vmatpush1.msra.mxu0 %v3520
        %4671 = vmatprep.subr.mxu0 %v3522
        %4672 = vmatpush1.msra.mxu0 %v3521
        %4673 = vmatprep.subr.mxu0 %v3523
        %4674 = vmatpush1.msra.mxu0 %v3522
        %4675 = vmatprep.subr.mxu0 0.0
        %4676 = vmatpush1.msra.mxu0 0.0
        %4677 = vmatprep.subr.mxu0 0.0
        %4678 = vmatpush1.msra.mxu0 0.0
        %4679 = vmatprep.subr.mxu0 0.0
        %4680 = vmatpush1.msra.mxu0 0.0
        %4681 = vmatprep.subr.mxu0 0.0
        %4682 = vmatpush1.msra.mxu0 0.0
        %4683 = vmatprep.subr.mxu0 0.0
        %4684 = vmatpush1.msra.mxu0 0.0
        %4685 = vmatprep.subr.mxu0 0.0
        %4686 = vmatpush1.msra.mxu0 0.0
        %4687 = vmatprep.subr.mxu0 0.0
        %4688 = vmatpush1.msra.mxu0 0.0
        %4689 = vmatprep.subr.mxu0 0.0
        %4690 = vmatpush1.msra.mxu0 0.0
        %4691 = vmatprep.subr.mxu0 0.0
        %4692 = vmatpush1.msra.mxu0 0.0
        %4693 = vmatprep.subr.mxu0 0.0
        %4694 = vmatpush1.msra.mxu0 0.0
        %4695 = vmatprep.subr.mxu0 0.0
        %4696 = vmatpush1.msra.mxu0 0.0
        %4697 = vmatprep.subr.mxu0 0.0
        %4698 = vmatpush1.msra.mxu0 0.0
        %4699 = vmatprep.subr.mxu0 0.0
        %4700 = vmatpush1.msra.mxu0 0.0
        %4701 = vmatprep.subr.mxu0 0.0
        %4702 = vmatpush1.msra.mxu0 0.0
        %4703 = vmatprep.subr.mxu0 0.0
        %4704 = vmatpush1.msra.mxu0 0.0
        %4705 = vmatprep.subr.mxu0 0.0
        %4706 = vmatpush1.msra.mxu0 0.0
        %4707 = vmatprep.subr.mxu0 0.0
        %4708 = vmatpush1.msra.mxu0 0.0
        %4709 = vmatprep.subr.mxu0 0.0
        %4710 = vmatpush1.msra.mxu0 0.0
        %4711 = vmatprep.subr.mxu0 0.0
        %4712 = vmatpush1.msra.mxu0 0.0
        %4713 = vmatprep.subr.mxu0 0.0
        %4714 = vmatpush1.msra.mxu0 0.0
        %4715 = vmatprep.subr.mxu0 0.0
        %4716 = vmatpush1.msra.mxu0 0.0
        %4717 = vmatprep.subr.mxu0 0.0
        %4718 = vmatpush1.msra.mxu0 0.0
        %4719 = vmatprep.subr.mxu0 0.0
        %4720 = vmatpush1.msra.mxu0 0.0
        %4721 = vmatprep.mubr.f32.mxu0 0.0
        %4722 = vmatmul.mubr.f32.gmra.mrb[0].mxu0 %v3732
        %v4723 = vpop.f32.mrb[0].mxu0
        %v4724 = vadd.f32 %v3692, %v4723
        %v4725 = vpop.f32.mrb[0].mxu0
        %v4726 = vadd.f32 %v3693, %v4725
        %4727 = vdwg.mxu0
        %4728 = vmatprep.subr.mxu0 %v3249
        %4729 = vmatpush1.msra.mxu0 %v3248
        %4730 = vmatprep.subr.mxu0 %v3250
        %4731 = vmatpush1.msra.mxu0 %v3249
        %4732 = vmatprep.subr.mxu0 %v3251
        %4733 = vmatpush1.msra.mxu0 %v3250
        %4734 = vmatprep.subr.mxu0 %v3383
        %4735 = vmatpush1.msra.mxu0 %v3382
        %4736 = vmatprep.subr.mxu0 %v3384
        %4737 = vmatpush1.msra.mxu0 %v3383
        %4738 = vmatprep.subr.mxu0 %v3385
        %4739 = vmatpush1.msra.mxu0 %v3384
        %4740 = vmatprep.subr.mxu0 %v3523
        %4741 = vmatpush1.msra.mxu0 %v3522
        %4742 = vmatprep.subr.mxu0 %v3524
        %4743 = vmatpush1.msra.mxu0 %v3523
        %4744 = vmatprep.subr.mxu0 %v3525
        %4745 = vmatpush1.msra.mxu0 %v3524
        %4746 = vmatprep.subr.mxu0 0.0
        %4747 = vmatpush1.msra.mxu0 0.0
        %4748 = vmatprep.subr.mxu0 0.0
        %4749 = vmatpush1.msra.mxu0 0.0
        %4750 = vmatprep.subr.mxu0 0.0
        %4751 = vmatpush1.msra.mxu0 0.0
        %4752 = vmatprep.subr.mxu0 0.0
        %4753 = vmatpush1.msra.mxu0 0.0
        %4754 = vmatprep.subr.mxu0 0.0
        %4755 = vmatpush1.msra.mxu0 0.0
        %4756 = vmatprep.subr.mxu0 0.0
        %4757 = vmatpush1.msra.mxu0 0.0
        %4758 = vmatprep.subr.mxu0 0.0
        %4759 = vmatpush1.msra.mxu0 0.0
        %4760 = vmatprep.subr.mxu0 0.0
        %4761 = vmatpush1.msra.mxu0 0.0
        %4762 = vmatprep.subr.mxu0 0.0
        %4763 = vmatpush1.msra.mxu0 0.0
        %4764 = vmatprep.subr.mxu0 0.0
        %4765 = vmatpush1.msra.mxu0 0.0
        %4766 = vmatprep.subr.mxu0 0.0
        %4767 = vmatpush1.msra.mxu0 0.0
        %4768 = vmatprep.subr.mxu0 0.0
        %4769 = vmatpush1.msra.mxu0 0.0
        %4770 = vmatprep.subr.mxu0 0.0
        %4771 = vmatpush1.msra.mxu0 0.0
        %4772 = vmatprep.subr.mxu0 0.0
        %4773 = vmatpush1.msra.mxu0 0.0
        %4774 = vmatprep.subr.mxu0 0.0
        %4775 = vmatpush1.msra.mxu0 0.0
        %4776 = vmatprep.subr.mxu0 0.0
        %4777 = vmatpush1.msra.mxu0 0.0
        %4778 = vmatprep.subr.mxu0 0.0
        %4779 = vmatpush1.msra.mxu0 0.0
        %4780 = vmatprep.subr.mxu0 0.0
        %4781 = vmatpush1.msra.mxu0 0.0
        %4782 = vmatprep.subr.mxu0 0.0
        %4783 = vmatpush1.msra.mxu0 0.0
        %4784 = vmatprep.subr.mxu0 0.0
        %4785 = vmatpush1.msra.mxu0 0.0
        %4786 = vmatprep.subr.mxu0 0.0
        %4787 = vmatpush1.msra.mxu0 0.0
        %4788 = vmatprep.subr.mxu0 0.0
        %4789 = vmatpush1.msra.mxu0 0.0
        %4790 = vmatprep.subr.mxu0 0.0
        %4791 = vmatpush1.msra.mxu0 0.0
        %4792 = vmatprep.mubr.f32.mxu0 0.0
        %4793 = vmatmul.mubr.f32.gmra.mrb[0].mxu0 %v3732
        %v4794 = vpop.f32.mrb[0].mxu0
        %v4795 = vadd.f32 %v3694, %v4794
        %v4796 = vpop.f32.mrb[0].mxu0
        %v4797 = vadd.f32 %v3695, %v4796
        %4798 = vdwg.mxu0
        %4799 = vmatprep.subr.mxu0 %v3251
        %4800 = vmatpush1.msra.mxu0 %v3250
        %4801 = vmatprep.subr.mxu0 %v3252
        %4802 = vmatpush1.msra.mxu0 %v3251
        %4803 = vmatprep.subr.mxu0 %v3253
        %4804 = vmatpush1.msra.mxu0 %v3252
        %4805 = vmatprep.subr.mxu0 %v3385
        %4806 = vmatpush1.msra.mxu0 %v3384
        %4807 = vmatprep.subr.mxu0 %v3421
        %4808 = vmatpush1.msra.mxu0 %v3385
        %4809 = vmatprep.subr.mxu0 %v3426
        %4810 = vmatpush1.msra.mxu0 %v3421
        %4811 = vmatprep.subr.mxu0 %v3525
        %4812 = vmatpush1.msra.mxu0 %v3524
        %4813 = vmatprep.subr.mxu0 %v3560
        %4814 = vmatpush1.msra.mxu0 %v3525
        %4815 = vmatprep.subr.mxu0 %v3564
        %4816 = vmatpush1.msra.mxu0 %v3560
        %4817 = vmatprep.subr.mxu0 0.0
        %4818 = vmatpush1.msra.mxu0 0.0
        %4819 = vmatprep.subr.mxu0 0.0
        %4820 = vmatpush1.msra.mxu0 0.0
        %4821 = vmatprep.subr.mxu0 0.0
        %4822 = vmatpush1.msra.mxu0 0.0
        %4823 = vmatprep.subr.mxu0 0.0
        %4824 = vmatpush1.msra.mxu0 0.0
        %4825 = vmatprep.subr.mxu0 0.0
        %4826 = vmatpush1.msra.mxu0 0.0
        %4827 = vmatprep.subr.mxu0 0.0
        %4828 = vmatpush1.msra.mxu0 0.0
        %4829 = vmatprep.subr.mxu0 0.0
        %4830 = vmatpush1.msra.mxu0 0.0
        %4831 = vmatprep.subr.mxu0 0.0
        %4832 = vmatpush1.msra.mxu0 0.0
        %4833 = vmatprep.subr.mxu0 0.0
        %4834 = vmatpush1.msra.mxu0 0.0
        %4835 = vmatprep.subr.mxu0 0.0
        %4836 = vmatpush1.msra.mxu0 0.0
        %4837 = vmatprep.subr.mxu0 0.0
        %4838 = vmatpush1.msra.mxu0 0.0
        %4839 = vmatprep.subr.mxu0 0.0
        %4840 = vmatpush1.msra.mxu0 0.0
        %4841 = vmatprep.subr.mxu0 0.0
        %4842 = vmatpush1.msra.mxu0 0.0
        %4843 = vmatprep.subr.mxu0 0.0
        %4844 = vmatpush1.msra.mxu0 0.0
        %4845 = vmatprep.subr.mxu0 0.0
        %4846 = vmatpush1.msra.mxu0 0.0
        %4847 = vmatprep.subr.mxu0 0.0
        %4848 = vmatpush1.msra.mxu0 0.0
        %4849 = vmatprep.subr.mxu0 0.0
        %4850 = vmatpush1.msra.mxu0 0.0
        %4851 = vmatprep.subr.mxu0 0.0
        %4852 = vmatpush1.msra.mxu0 0.0
        %4853 = vmatprep.subr.mxu0 0.0
        %4854 = vmatpush1.msra.mxu0 0.0
        %4855 = vmatprep.subr.mxu0 0.0
        %4856 = vmatpush1.msra.mxu0 0.0
        %4857 = vmatprep.subr.mxu0 0.0
        %4858 = vmatpush1.msra.mxu0 0.0
        %4859 = vmatprep.subr.mxu0 0.0
        %4860 = vmatpush1.msra.mxu0 0.0
        %4861 = vmatprep.subr.mxu0 0.0
        %4862 = vmatpush1.msra.mxu0 0.0
        %4863 = vmatprep.mubr.f32.mxu0 0.0
        %4864 = vmatmul.mubr.f32.gmra.mrb[0].mxu0 %v3732
        %v4865 = vpop.f32.mrb[0].mxu0
        %v4866 = vadd.f32 %v3696, %v4865
        %v4867 = vpop.f32.mrb[0].mxu0
        %v4868 = vadd.f32 %v3697, %v4867
        %4869 = vdwg.mxu0
        %4870 = vset.pattern.permute.xlu0 1
        %4871 = vperm.xlu0 %4870, %v2918
        %v4872 = vpop.permute.xlu0 %4871
        %v4874 = vadd.f32 %v3801, %v4872
        %v4875 = vadd.f32 %v3803, %v4872
        %v4876 = vadd.f32 %v3872, %v4872
        %v4877 = vadd.f32 %v3874, %v4872
        %v4878 = vadd.f32 %v3943, %v4872
        %v4879 = vadd.f32 %v3945, %v4872
        %v4880 = vadd.f32 %v4014, %v4872
        %v4881 = vadd.f32 %v4016, %v4872
        %v4882 = vadd.f32 %v4085, %v4872
        %v4883 = vadd.f32 %v4087, %v4872
        %v4884 = vadd.f32 %v4156, %v4872
        %v4885 = vadd.f32 %v4158, %v4872
        %v4886 = vadd.f32 %v4227, %v4872
        %v4887 = vadd.f32 %v4229, %v4872
        %v4888 = vadd.f32 %v4298, %v4872
        %v4889 = vadd.f32 %v4300, %v4872
        %v4890 = vadd.f32 %v4369, %v4872
        %v4891 = vadd.f32 %v4371, %v4872
        %v4892 = vadd.f32 %v4440, %v4872
        %v4893 = vadd.f32 %v4442, %v4872
        %v4894 = vadd.f32 %v4511, %v4872
        %v4895 = vadd.f32 %v4513, %v4872
        %v4896 = vadd.f32 %v4582, %v4872
        %v4897 = vadd.f32 %v4584, %v4872
        %v4898 = vadd.f32 %v4653, %v4872
        %v4899 = vadd.f32 %v4655, %v4872
        %v4900 = vadd.f32 %v4724, %v4872
        %v4901 = vadd.f32 %v4726, %v4872
        %v4902 = vadd.f32 %v4795, %v4872
        %v4903 = vadd.f32 %v4797, %v4872
        %v4904 = vadd.f32 %v4866, %v4872
        %v4905 = vadd.f32 %v4868, %v4872
        %v4906 = vmax.f32 %v4874, 0.0
        %v4907 = vmax.f32 %v4875, 0.0
        %v4908 = vmax.f32 %v4876, 0.0
        %v4909 = vmax.f32 %v4877, 0.0
        %v4910 = vmax.f32 %v4878, 0.0
        %v4911 = vmax.f32 %v4879, 0.0
        %v4912 = vmax.f32 %v4880, 0.0
        %v4913 = vmax.f32 %v4881, 0.0
        %v4914 = vmax.f32 %v4882, 0.0
        %v4915 = vmax.f32 %v4883, 0.0
        %v4916 = vmax.f32 %v4884, 0.0
        %v4917 = vmax.f32 %v4885, 0.0
        %v4918 = vmax.f32 %v4886, 0.0
        %v4919 = vmax.f32 %v4887, 0.0
        %v4920 = vmax.f32 %v4888, 0.0
        %v4921 = vmax.f32 %v4889, 0.0
        %v4922 = vmax.f32 %v4890, 0.0
        %v4923 = vmax.f32 %v4891, 0.0
        %v4924 = vmax.f32 %v4892, 0.0
        %v4925 = vmax.f32 %v4893, 0.0
        %v4926 = vmax.f32 %v4894, 0.0
        %v4927 = vmax.f32 %v4895, 0.0
        %v4928 = vmax.f32 %v4896, 0.0
        %v4929 = vmax.f32 %v4897, 0.0
        %v4930 = vmax.f32 %v4898, 0.0
        %v4931 = vmax.f32 %v4899, 0.0
        %v4932 = vmax.f32 %v4900, 0.0
        %v4933 = vmax.f32 %v4901, 0.0
        %v4934 = vmax.f32 %v4902, 0.0
        %v4935 = vmax.f32 %v4903, 0.0
        %v4936 = vmax.f32 %v4904, 0.0
        %v4937 = vmax.f32 %v4905, 0.0
        %4938 = vst [vmem:[%s284] sm:$0xff] %v4906
        %4939 = vst [vmem:[%s284 + $0x8] sm:$0xff] %v4907
        %4940 = vst [vmem:[%s284 + $0x10] sm:$0xff] %v4908
        %4941 = vst [vmem:[%s284 + $0x18] sm:$0xff] %v4909
        %4942 = vst [vmem:[%s284 + $0x20] sm:$0xff] %v4910
        %4943 = vst [vmem:[%s284 + $0x28] sm:$0xff] %v4911
        %4944 = vst [vmem:[%s284 + $0x30] sm:$0xff] %v4912
        %4945 = vst [vmem:[%s284 + $0x38] sm:$0xff] %v4913
        %4946 = vst [vmem:[%s284 + $0x40] sm:$0xff] %v4914
        %4947 = vst [vmem:[%s284 + $0x48] sm:$0xff] %v4915
        %4948 = vst [vmem:[%s284 + $0x50] sm:$0xff] %v4916
        %4949 = vst [vmem:[%s284 + $0x58] sm:$0xff] %v4917
        %4950 = vst [vmem:[%s284 + $0x60] sm:$0xff] %v4918
        %4951 = vst [vmem:[%s284 + $0x68] sm:$0xff] %v4919
        %4952 = vst [vmem:[%s284 + $0x70] sm:$0xff] %v4920
        %4953 = vst [vmem:[%s284 + $0x78] sm:$0xff] %v4921
        %4954 = vst [vmem:[%s284 + $0x80] sm:$0xff] %v4922
        %4955 = vst [vmem:[%s284 + $0x88] sm:$0xff] %v4923
        %4956 = vst [vmem:[%s284 + $0x90] sm:$0xff] %v4924
        %4957 = vst [vmem:[%s284 + $0x98] sm:$0xff] %v4925
        %4958 = vst [vmem:[%s284 + $0xa0] sm:$0xff] %v4926
        %4959 = vst [vmem:[%s284 + $0xa8] sm:$0xff] %v4927
        %4960 = vst [vmem:[%s284 + $0xb0] sm:$0xff] %v4928
        %4961 = vst [vmem:[%s284 + $0xb8] sm:$0xff] %v4929
        %4962 = vst [vmem:[%s284 + $0xc0] sm:$0xff] %v4930
        %4963 = vst [vmem:[%s284 + $0xc8] sm:$0xff] %v4931
        %4964 = vst [vmem:[%s284 + $0xd0] sm:$0xff] %v4932
        %4965 = vst [vmem:[%s284 + $0xd8] sm:$0xff] %v4933
        %4966 = vst [vmem:[%s284 + $0xe0] sm:$0xff] %v4934
        %4967 = vst [vmem:[%s284 + $0xe8] sm:$0xff] %v4935
        %4968 = vst [vmem:[%s284 + $0xf0] sm:$0xff] %v4936
        %4969 = vst [vmem:[%s284 + $0xf8] sm:$0xff] %v4937
        %s4970 = sand.u32 %s186, 1
        %s4971 = scalar_lea.sflag [#allocation4], %s4970
        %s4972 = sand.u32 %s186, 1
        %s4973 = smul.addr %s4972, 256
        %s4974 = scalar_lea.vmem [#allocation3], %s4973
        // Predicated region
        $region49: #{tpu_custom_call.1} parent=47 // pred_check
          %p4975 = pneg %p196
        $region50: #{tpu_custom_call.1} parent=47 // pred_check_branch
          %4977 = sbr.rel (%p4975) target = $region52
        $region51: #{tpu_custom_call.1} parent=47 // pred_region
          %s4979 = ssub.s32 4096, 4096
          %4980 = vsyncadd %s4971, %s4979
          %s4981 = smul.addr %s21, 32
          %s4982 = smul.addr %s4981, 128
          %s4983 = scalar_lea.hbm %s7, %s4982
          %s4985 = sshll.u32 %s4974, 4
          %s4986 = int_to_ptr.vmem [resolvable:$true] %s4985
          %4988 = dma.vmem_to_hbm [thread:$0]  %s4986, 4096, %s4983, %s4971
        $region52: #{tpu_custom_call.1} parent=47 // pred_fallthru
          _
      $region48: #{tpu_custom_call.1} parent=5 // pred_fallthru
        _
      %p4989 = scmp.le.s32.totalorder 2, %s16
      // Predicated region
      $region53: #{tpu_custom_call.1} parent=5 // pred_check
        %p4990 = pneg %p4989
      $region54: #{tpu_custom_call.1} parent=5 // pred_check_branch
        %4992 = sbr.rel (%p4990) target = $region56
      $region55: #{tpu_custom_call.1} parent=5 // pred_region
        %s4993 = ssub.s32 %s16, 2
        // Predicated region
        $region57: #{tpu_custom_call.1} parent=55 // pred_check
          %p4994 = pneg %p202
        $region58: #{tpu_custom_call.1} parent=55 // pred_check_branch
          %4996 = sbr.rel (%p4994) target = $region60
        $region59: #{tpu_custom_call.1} parent=55 // pred_region
          %s4997 = sand.u32 %s187, 1
          %s4998 = scalar_lea.sflag [#allocation4], %s4997
          %s4999 = sand.u32 %s187, 1
          %s5000 = smul.addr %s4999, 256
          %s5001 = scalar_lea.vmem [#allocation3], %s5000
          %5002 = dma.done %s4998, 4096
        $region60: #{tpu_custom_call.1} parent=55 // pred_fallthru
          _
      $region56: #{tpu_custom_call.1} parent=5 // pred_fallthru
        _
    $region6: #{tpu_custom_call.1} parent=1 // loop_footer
      %s20 = sadd.s32 1, %s16
    $region7: #{tpu_custom_call.1} parent=1 // loop_footer_branch
      %15 = sbr.rel target = $region3
    $region8: #{tpu_custom_call.1} parent=1 // loop_exit
      _
    %5003 = vsyncpa [#allocation4], 1
    %s5004 = scalar_lea.sflag [#allocation4], 1
    %5005 = vsyncpa %s5004, 1

</llo_original>
